<compile_context>
chip_gen: v5e
topology: v5e:2x2
jax: 0.10.0
libtpu: 0.0.40
codegen_flags: <defaults>
</compile_context>

<pallas_src>
import functools
import math

import jax
import jax.numpy as jnp
from jax import lax
from jax.experimental import pallas as pl
from jax.experimental.pallas import tpu as pltpu

POLARITY_COLUMN = 3
TIMESTAMP_COLUMN = 0


def _st_kernel(q_ref, keys_ref, kxy_ref, tri_ref,
               w1_ref, b1_ref, w2p_ref, b2p_ref,
               wpc_ref, bpc_ref, wnc_ref, bnc_ref,
               gamma_ref, beta_ref, out_ref, *, radius2, K, ln_eps):
    q = q_ref[0]                 # (tn, 4)  query tile, columns [t, x, y, p]
    keys = keys_ref[0]           # (4, N)   all key points, lane-dense rows
    onesxy = kxy_ref[0]          # (N, 3)   columns [1, x, y] (MXU gather RHS)

    tn = q.shape[0]
    t_col = q[:, TIMESTAMP_COLUMN:TIMESTAMP_COLUMN + 1]   # (tn, 1)
    qxy = q[:, 1:3]                                       # (tn, 2)
    x_col = q[:, 1:2]
    y_col = q[:, 2:3]
    p_col = q[:, POLARITY_COLUMN:POLARITY_COLUMN + 1]
    x_row = keys[1:2, :]                                  # (1, N)
    y_row = keys[2:3, :]

    # ---- ball query (timestamp zeroed in reference => purely spatial distance) ----
    ddx = x_col - x_row
    ddy = y_col - y_row
    dist2 = ddx * ddx + ddy * ddy                         # (tn, N)
    mask = dist2 < radius2                                # bool, strict test

    # inclusive in-radius rank along keys via MXU "cumsum": rank = mask @ triu(1).
    # 0/1 operands in bf16 + f32 accumulation -> rank is an exact integer.
    mask_bf = mask.astype(jnp.float32).astype(jnp.bfloat16)
    rank = jnp.dot(mask_bf, tri_ref[...], preferred_element_type=jnp.float32)
    rm = jnp.where(mask, rank, 0.0)                       # (tn, N); k-th nbr <=> rm == k+1

    # ---- spatial embedding, first linear: gather-free, per-slot MXU selection ----
    w1 = w1_ref[...]                                      # (2K, H), rows [dx0,dy0,dx1,dy1,...]
    H = w1.shape[1]
    h = jnp.zeros((tn, H), jnp.float32)
    for k in range(K):
        sel = (rm == float(k + 1)).astype(jnp.float32)    # (tn, N) one-hot per row (or all-zero)
        acc = jnp.dot(sel, onesxy,
                      preferred_element_type=jnp.float32)  # (tn, 3) = [has_k, gx_k, gy_k]
        dxy = acc[:, 0:1] * qxy - acc[:, 1:3]             # (tn, 2) = [dx_k, dy_k]; 0 when missing
        h = h + jnp.dot(dxy, w1[2 * k:2 * k + 2, :],
                        preferred_element_type=jnp.float32)
    g = jnp.maximum(h + b1_ref[...], 0.0)                 # MLP hidden ReLU

    # ---- spatial second linear fused with the projection (W2 @ Wproj_sp) ----
    f = jnp.dot(g, w2p_ref[...], preferred_element_type=jnp.float32) + b2p_ref[...]

    # ---- temporal embedding, pre-folded through the projection in the wrapper ----
    f = f + p_col * (t_col * wpc_ref[...] + bpc_ref[...]) \
          + (1.0 - p_col) * (t_col * wnc_ref[...] + bnc_ref[...])

    # ---- LayerNorm ----
    mu = jnp.mean(f, axis=-1, keepdims=True)
    var = jnp.mean((f - mu) * (f - mu), axis=-1, keepdims=True)
    out_ref[0] = (f - mu) * lax.rsqrt(var + ln_eps) * gamma_ref[...] + beta_ref[...]


def spatiotemporal_embedding(xytp, params, *, height, K=9, row_tile=256):
    B, N, _ = xytp.shape
    radius2 = (5.0 / height) ** 2
    hp = jax.lax.Precision.HIGHEST   # wrapper-side weight folding stays exact

    W1, b1 = params["W1"], params["b1"]          # (2K, 2S), (2S,)
    W2, b2 = params["W2"], params["b2"]          # (2S, S), (S,)
    Wp, bp = params["Wp"], params["bp"]          # (1, T), (T,)
    Wn, bn = params["Wn"], params["bn"]
    Wproj = params["Wproj"]                      # (S + T, C), no bias
    gamma, beta = params["gamma"], params["beta"]

    S = W2.shape[1]
    C = Wproj.shape[1]
    Wproj_sp, Wproj_te = Wproj[:S], Wproj[S:]

    # Fold the second spatial linear and the whole temporal branch through the projection.
    W2p = jnp.dot(W2, Wproj_sp, precision=hp)              # (2S, C)
    b2p = jnp.dot(b2, Wproj_sp, precision=hp)[None, :]     # (1, C)
    wpc = jnp.dot(Wp, Wproj_te, precision=hp)              # (1, C)
    bpc = jnp.dot(bp, Wproj_te, precision=hp)[None, :]
    wnc = jnp.dot(Wn, Wproj_te, precision=hp)
    bnc = jnp.dot(bn, Wproj_te, precision=hp)[None, :]

    xytp_t = jnp.transpose(xytp, (0, 2, 1))                # (B, 4, N) lane-dense key rows
    keysxy1 = jnp.concatenate(                              # (B, N, 3) = [1, x, y]
        [jnp.ones((B, N, 1), xytp.dtype), xytp[..., 1:3]], axis=-1)
    # Batch-invariant inclusive upper-triangular ones (hoisted out of the grid), bf16.
    tri = jnp.triu(jnp.ones((N, N), jnp.float32)).astype(jnp.bfloat16)

    tn = min(row_tile, N)
    assert N % tn == 0, "row tile must divide N"
    nt = N // tn

    weights = [W1, b1[None, :], W2p, b2p, wpc, bpc, wnc, bnc,
               gamma[None, :], beta[None, :]]

    in_specs = [
        pl.BlockSpec((1, tn, 4), lambda b, i: (b, i, 0)),   # query tile
        pl.BlockSpec((1, 4, N), lambda b, i: (b, 0, 0)),    # all keys (rows)
        pl.BlockSpec((1, N, 3), lambda b, i: (b, 0, 0)),    # all keys [1|x|y] (cols)
        pl.BlockSpec((N, N), lambda b, i: (0, 0)),          # triangular ones
    ] + [pl.BlockSpec(w.shape, lambda b, i: (0, 0)) for w in weights]

    kernel = functools.partial(_st_kernel, radius2=radius2, K=K, ln_eps=1e-5)

    return pl.pallas_call(
        kernel,
        out_shape=jax.ShapeDtypeStruct((B, N, C), jnp.float32),
        grid_spec=pltpu.PrefetchScalarGridSpec(
            num_scalar_prefetch=0,
            grid=(B, nt),
            in_specs=in_specs,
            out_specs=pl.BlockSpec((1, tn, C), lambda b, i: (b, i, 0)),
        ),
        compiler_params=pltpu.CompilerParams(
            dimension_semantics=("parallel", "parallel")),
    )(xytp, xytp_t, keysxy1, tri, *weights)


def reference(xytp, params, *, height, K=9):
    """Pure-JAX reference mirroring the PyTorch forward (explicit gather)."""
    B, N, _ = xytp.shape
    xy = xytp[..., 1:3]
    d = xy[:, :, None, :] - xy[:, None, :, :]
    dist2 = jnp.sum(d * d, axis=-1)
    mask = dist2 < (5.0 / height) ** 2
    rank = jnp.cumsum(mask.astype(jnp.int32), axis=-1)
    kk = jnp.arange(1, K + 1)
    sel = mask[:, :, None, :] & (rank[:, :, None, :] == kk[None, None, :, None])
    has = jnp.any(sel, axis=-1)
    idx = jnp.where(has, jnp.argmax(sel, axis=-1), jnp.arange(N)[None, :, None])
    gathered = jax.vmap(lambda xyb, ib: xyb[ib])(xy, idx)   # knn_gather
    delta = xy[:, :, None, :] - gathered
    emb = delta.reshape(B, N, K * 2)
    h = jax.nn.relu(emb @ params["W1"] + params["b1"])
    fsp = h @ params["W2"] + params["b2"]
    t = xytp[..., TIMESTAMP_COLUMN:TIMESTAMP_COLUMN + 1]
    p = xytp[..., POLARITY_COLUMN:POLARITY_COLUMN + 1]
    fte = (t @ params["Wp"] + params["bp"]) * p + (t @ params["Wn"] + params["bn"]) * (1 - p)
    f = jnp.concatenate([fsp, fte], axis=-1) @ params["Wproj"]
    mu = f.mean(-1, keepdims=True)
    var = ((f - mu) ** 2).mean(-1, keepdims=True)
    return (f - mu) / jnp.sqrt(var + 1e-5) * params["gamma"] + params["beta"]


if __name__ == "__main__":
    B, N = 2, 128
    height, width = 16, 16
    S, T, C, K = 16, 16, 32, 9   # spatial_embedding_size, temporal_embedding_size, out_channel

    key = jax.random.PRNGKey(0)
    k_in, k_p, *wkeys = jax.random.split(key, 12)

    # events: [t, x, y, p] with x, y, t in [0, 1), polarity in {0, 1}
    txy = jax.random.uniform(k_in, (B, N, 3), jnp.float32)
    pol = jax.random.bernoulli(k_p, 0.5, (B, N, 1)).astype(jnp.float32)
    xytp = jnp.concatenate([txy, pol], axis=-1)

    def lin(k, fan_in, shape):
        bound = 1.0 / math.sqrt(fan_in)
        return jax.random.uniform(k, shape, jnp.float32, -bound, bound)

    params = {
        "W1": lin(wkeys[0], 2 * K, (2 * K, 2 * S)),
        "b1": lin(wkeys[1], 2 * K, (2 * S,)),
        "W2": lin(wkeys[2], 2 * S, (2 * S, S)),
        "b2": lin(wkeys[3], 2 * S, (S,)),
        "Wp": lin(wkeys[4], 1, (1, T)),
        "bp": lin(wkeys[5], 1, (T,)),
        "Wn": lin(wkeys[6], 1, (1, T)),
        "bn": lin(wkeys[7], 1, (T,)),
        "Wproj": lin(wkeys[8], S + T, (S + T, C)),
        "gamma": jnp.ones((C,), jnp.float32),
        "beta": jnp.zeros((C,), jnp.float32),
    }

    out = spatiotemporal_embedding(xytp, params, height=height, K=K)
    out = jax.block_until_ready(out)

    ref = reference(xytp, params, height=height, K=K)
    assert out.shape == (B, N, C), out.shape
    err = float(jnp.max(jnp.abs(out - ref)))
    assert jnp.allclose(out, ref, rtol=1e-4, atol=2e-3), f"max abs err {err}"
    print("KERNEL_OK")
</pallas_src>

<mosaic_0001>
module attributes {stable_mosaic.version = 11 : i64} {
  func.func @_st_kernel(%arg0: i32, %arg1: i32, %arg2: memref<1x128x4xf32, #tpu.memory_space<vmem>>, %arg3: memref<1x4x128xf32, #tpu.memory_space<vmem>>, %arg4: memref<1x128x3xf32, #tpu.memory_space<vmem>>, %arg5: memref<128x128xbf16, #tpu.memory_space<vmem>>, %arg6: memref<18x32xf32, #tpu.memory_space<vmem>>, %arg7: memref<1x32xf32, #tpu.memory_space<vmem>>, %arg8: memref<32x32xf32, #tpu.memory_space<vmem>>, %arg9: memref<1x32xf32, #tpu.memory_space<vmem>>, %arg10: memref<1x32xf32, #tpu.memory_space<vmem>>, %arg11: memref<1x32xf32, #tpu.memory_space<vmem>>, %arg12: memref<1x32xf32, #tpu.memory_space<vmem>>, %arg13: memref<1x32xf32, #tpu.memory_space<vmem>>, %arg14: memref<1x32xf32, #tpu.memory_space<vmem>>, %arg15: memref<1x32xf32, #tpu.memory_space<vmem>>, %arg16: memref<1x128x32xf32, #tpu.memory_space<vmem>>) attributes {dimension_semantics = [#tpu.dimension_semantics<parallel>, #tpu.dimension_semantics<parallel>], iteration_bounds = array<i64: 2, 1>, scalar_prefetch = 0 : i64, scratch_operands = 0 : i64, tpu.core_type = #tpu.core_type<tc>, window_params = [{transform_indices = @transform_0, window_bounds = array<i64: 1, 128, 4>}, {transform_indices = @transform_1, window_bounds = array<i64: 1, 4, 128>}, {transform_indices = @transform_2, window_bounds = array<i64: 1, 128, 3>}, {pipeline_mode = #tpu.pipeline_mode<synchronous>, transform_indices = @transform_3, window_bounds = array<i64: 128, 128>}, {pipeline_mode = #tpu.pipeline_mode<synchronous>, transform_indices = @transform_4, window_bounds = array<i64: 18, 32>}, {pipeline_mode = #tpu.pipeline_mode<synchronous>, transform_indices = @transform_5, window_bounds = array<i64: 1, 32>}, {pipeline_mode = #tpu.pipeline_mode<synchronous>, transform_indices = @transform_6, window_bounds = array<i64: 32, 32>}, {pipeline_mode = #tpu.pipeline_mode<synchronous>, transform_indices = @transform_7, window_bounds = array<i64: 1, 32>}, {pipeline_mode = #tpu.pipeline_mode<synchronous>, transform_indices = @transform_8, window_bounds = array<i64: 1, 32>}, {pipeline_mode = #tpu.pipeline_mode<synchronous>, transform_indices = @transform_9, window_bounds = array<i64: 1, 32>}, {pipeline_mode = #tpu.pipeline_mode<synchronous>, transform_indices = @transform_10, window_bounds = array<i64: 1, 32>}, {pipeline_mode = #tpu.pipeline_mode<synchronous>, transform_indices = @transform_11, window_bounds = array<i64: 1, 32>}, {pipeline_mode = #tpu.pipeline_mode<synchronous>, transform_indices = @transform_12, window_bounds = array<i64: 1, 32>}, {pipeline_mode = #tpu.pipeline_mode<synchronous>, transform_indices = @transform_13, window_bounds = array<i64: 1, 32>}, {transform_indices = @transform_14, window_bounds = array<i64: 1, 128, 32>}]} {
    %c0 = arith.constant 0 : index
    %c0_0 = arith.constant 0 : index
    %c0_1 = arith.constant 0 : index
    %0 = vector.load %arg2[%c0, %c0_0, %c0_1] : memref<1x128x4xf32, #tpu.memory_space<vmem>>, vector<1x128x4xf32>
    %1 = vector.shape_cast %0 : vector<1x128x4xf32> to vector<128x4xf32>
    %c0_2 = arith.constant 0 : index
    %c0_3 = arith.constant 0 : index
    %c0_4 = arith.constant 0 : index
    %2 = vector.load %arg3[%c0_2, %c0_3, %c0_4] : memref<1x4x128xf32, #tpu.memory_space<vmem>>, vector<1x4x128xf32>
    %3 = vector.shape_cast %2 : vector<1x4x128xf32> to vector<4x128xf32>
    %c0_5 = arith.constant 0 : index
    %c0_6 = arith.constant 0 : index
    %c0_7 = arith.constant 0 : index
    %4 = vector.load %arg4[%c0_5, %c0_6, %c0_7] : memref<1x128x3xf32, #tpu.memory_space<vmem>>, vector<1x128x3xf32>
    %5 = vector.shape_cast %4 : vector<1x128x3xf32> to vector<128x3xf32>
    %6 = vector.extract_strided_slice %1 {offsets = [0, 0], sizes = [128, 1], strides = [1, 1]} : vector<128x4xf32> to vector<128x1xf32>
    %7 = vector.extract_strided_slice %1 {offsets = [0, 1], sizes = [128, 2], strides = [1, 1]} : vector<128x4xf32> to vector<128x2xf32>
    %8 = vector.extract_strided_slice %1 {offsets = [0, 1], sizes = [128, 1], strides = [1, 1]} : vector<128x4xf32> to vector<128x1xf32>
    %9 = vector.extract_strided_slice %1 {offsets = [0, 2], sizes = [128, 1], strides = [1, 1]} : vector<128x4xf32> to vector<128x1xf32>
    %10 = vector.extract_strided_slice %1 {offsets = [0, 3], sizes = [128, 1], strides = [1, 1]} : vector<128x4xf32> to vector<128x1xf32>
    %11 = vector.extract_strided_slice %3 {offsets = [1, 0], sizes = [1, 128], strides = [1, 1]} : vector<4x128xf32> to vector<1x128xf32>
    %12 = vector.extract_strided_slice %3 {offsets = [2, 0], sizes = [1, 128], strides = [1, 1]} : vector<4x128xf32> to vector<1x128xf32>
    %13 = vector.broadcast %8 : vector<128x1xf32> to vector<128x128xf32>
    %14 = vector.broadcast %11 : vector<1x128xf32> to vector<128x128xf32>
    %15 = arith.subf %13, %14 : vector<128x128xf32>
    %16 = vector.broadcast %9 : vector<128x1xf32> to vector<128x128xf32>
    %17 = vector.broadcast %12 : vector<1x128xf32> to vector<128x128xf32>
    %18 = arith.subf %16, %17 : vector<128x128xf32>
    %19 = arith.mulf %15, %15 : vector<128x128xf32>
    %20 = arith.mulf %18, %18 : vector<128x128xf32>
    %21 = arith.addf %19, %20 : vector<128x128xf32>
    %cst = arith.constant 0.09765625 : f32
    %22 = vector.broadcast %cst : f32 to vector<128x128xf32>
    %23 = arith.cmpf olt, %21, %22 : vector<128x128xf32>
    %24 = arith.extui %23 : vector<128x128xi1> to vector<128x128xi32>
    %25 = arith.sitofp %24 : vector<128x128xi32> to vector<128x128xf32>
    %26 = arith.truncf %25 : vector<128x128xf32> to vector<128x128xbf16>
    %c0_8 = arith.constant 0 : index
    %c0_9 = arith.constant 0 : index
    %27 = vector.load %arg5[%c0_8, %c0_9] : memref<128x128xbf16, #tpu.memory_space<vmem>>, vector<128x128xbf16>
    %cst_10 = arith.constant dense<0.000000e+00> : vector<128x128xf32>
    %28 = tpu.matmul %26, %27, %cst_10 {dimension_numbers = #tpu.dot_dimension_numbers<[1], [0], [0], [1], [0, 0, 1, 1], [], []>} : vector<128x128xbf16>, vector<128x128xbf16>, vector<128x128xf32> -> vector<128x128xf32>
    %cst_11 = arith.constant 0.000000e+00 : f32
    %29 = vector.broadcast %cst_11 : f32 to vector<128x128xf32>
    %30 = arith.select %23, %28, %29 : vector<128x128xi1>, vector<128x128xf32>
    %c0_12 = arith.constant 0 : index
    %c0_13 = arith.constant 0 : index
    %31 = vector.load %arg6[%c0_12, %c0_13] : memref<18x32xf32, #tpu.memory_space<vmem>>, vector<18x32xf32>
    %cst_14 = arith.constant 0.000000e+00 : f32
    %32 = vector.broadcast %cst_14 : f32 to vector<128x32xf32>
    %cst_15 = arith.constant 1.000000e+00 : f32
    %33 = vector.broadcast %cst_15 : f32 to vector<128x128xf32>
    %34 = arith.cmpf oeq, %30, %33 : vector<128x128xf32>
    %35 = arith.extui %34 : vector<128x128xi1> to vector<128x128xi32>
    %36 = arith.sitofp %35 : vector<128x128xi32> to vector<128x128xf32>
    %cst_16 = arith.constant dense<0.000000e+00> : vector<128x3xf32>
    %37 = tpu.matmul %36, %5, %cst_16 {dimension_numbers = #tpu.dot_dimension_numbers<[1], [0], [0], [1], [0, 0, 1, 1], [], []>} : vector<128x128xf32>, vector<128x3xf32>, vector<128x3xf32> -> vector<128x3xf32>
    %38 = vector.extract_strided_slice %37 {offsets = [0, 0], sizes = [128, 1], strides = [1, 1]} : vector<128x3xf32> to vector<128x1xf32>
    %39 = vector.broadcast %38 : vector<128x1xf32> to vector<128x2xf32>
    %40 = arith.mulf %39, %7 : vector<128x2xf32>
    %41 = vector.extract_strided_slice %37 {offsets = [0, 1], sizes = [128, 2], strides = [1, 1]} : vector<128x3xf32> to vector<128x2xf32>
    %42 = arith.subf %40, %41 : vector<128x2xf32>
    %43 = vector.extract_strided_slice %31 {offsets = [0, 0], sizes = [2, 32], strides = [1, 1]} : vector<18x32xf32> to vector<2x32xf32>
    %cst_17 = arith.constant dense<0.000000e+00> : vector<128x32xf32>
    %44 = tpu.matmul %42, %43, %cst_17 {dimension_numbers = #tpu.dot_dimension_numbers<[1], [0], [0], [1], [0, 0, 1, 1], [], []>} : vector<128x2xf32>, vector<2x32xf32>, vector<128x32xf32> -> vector<128x32xf32>
    %45 = arith.addf %32, %44 : vector<128x32xf32>
    %cst_18 = arith.constant 2.000000e+00 : f32
    %46 = vector.broadcast %cst_18 : f32 to vector<128x128xf32>
    %47 = arith.cmpf oeq, %30, %46 : vector<128x128xf32>
    %48 = arith.extui %47 : vector<128x128xi1> to vector<128x128xi32>
    %49 = arith.sitofp %48 : vector<128x128xi32> to vector<128x128xf32>
    %cst_19 = arith.constant dense<0.000000e+00> : vector<128x3xf32>
    %50 = tpu.matmul %49, %5, %cst_19 {dimension_numbers = #tpu.dot_dimension_numbers<[1], [0], [0], [1], [0, 0, 1, 1], [], []>} : vector<128x128xf32>, vector<128x3xf32>, vector<128x3xf32> -> vector<128x3xf32>
    %51 = vector.extract_strided_slice %50 {offsets = [0, 0], sizes = [128, 1], strides = [1, 1]} : vector<128x3xf32> to vector<128x1xf32>
    %52 = vector.broadcast %51 : vector<128x1xf32> to vector<128x2xf32>
    %53 = arith.mulf %52, %7 : vector<128x2xf32>
    %54 = vector.extract_strided_slice %50 {offsets = [0, 1], sizes = [128, 2], strides = [1, 1]} : vector<128x3xf32> to vector<128x2xf32>
    %55 = arith.subf %53, %54 : vector<128x2xf32>
    %56 = vector.extract_strided_slice %31 {offsets = [2, 0], sizes = [2, 32], strides = [1, 1]} : vector<18x32xf32> to vector<2x32xf32>
    %cst_20 = arith.constant dense<0.000000e+00> : vector<128x32xf32>
    %57 = tpu.matmul %55, %56, %cst_20 {dimension_numbers = #tpu.dot_dimension_numbers<[1], [0], [0], [1], [0, 0, 1, 1], [], []>} : vector<128x2xf32>, vector<2x32xf32>, vector<128x32xf32> -> vector<128x32xf32>
    %58 = arith.addf %45, %57 : vector<128x32xf32>
    %cst_21 = arith.constant 3.000000e+00 : f32
    %59 = vector.broadcast %cst_21 : f32 to vector<128x128xf32>
    %60 = arith.cmpf oeq, %30, %59 : vector<128x128xf32>
    %61 = arith.extui %60 : vector<128x128xi1> to vector<128x128xi32>
    %62 = arith.sitofp %61 : vector<128x128xi32> to vector<128x128xf32>
    %cst_22 = arith.constant dense<0.000000e+00> : vector<128x3xf32>
    %63 = tpu.matmul %62, %5, %cst_22 {dimension_numbers = #tpu.dot_dimension_numbers<[1], [0], [0], [1], [0, 0, 1, 1], [], []>} : vector<128x128xf32>, vector<128x3xf32>, vector<128x3xf32> -> vector<128x3xf32>
    %64 = vector.extract_strided_slice %63 {offsets = [0, 0], sizes = [128, 1], strides = [1, 1]} : vector<128x3xf32> to vector<128x1xf32>
    %65 = vector.broadcast %64 : vector<128x1xf32> to vector<128x2xf32>
    %66 = arith.mulf %65, %7 : vector<128x2xf32>
    %67 = vector.extract_strided_slice %63 {offsets = [0, 1], sizes = [128, 2], strides = [1, 1]} : vector<128x3xf32> to vector<128x2xf32>
    %68 = arith.subf %66, %67 : vector<128x2xf32>
    %69 = vector.extract_strided_slice %31 {offsets = [4, 0], sizes = [2, 32], strides = [1, 1]} : vector<18x32xf32> to vector<2x32xf32>
    %cst_23 = arith.constant dense<0.000000e+00> : vector<128x32xf32>
    %70 = tpu.matmul %68, %69, %cst_23 {dimension_numbers = #tpu.dot_dimension_numbers<[1], [0], [0], [1], [0, 0, 1, 1], [], []>} : vector<128x2xf32>, vector<2x32xf32>, vector<128x32xf32> -> vector<128x32xf32>
    %71 = arith.addf %58, %70 : vector<128x32xf32>
    %cst_24 = arith.constant 4.000000e+00 : f32
    %72 = vector.broadcast %cst_24 : f32 to vector<128x128xf32>
    %73 = arith.cmpf oeq, %30, %72 : vector<128x128xf32>
    %74 = arith.extui %73 : vector<128x128xi1> to vector<128x128xi32>
    %75 = arith.sitofp %74 : vector<128x128xi32> to vector<128x128xf32>
    %cst_25 = arith.constant dense<0.000000e+00> : vector<128x3xf32>
    %76 = tpu.matmul %75, %5, %cst_25 {dimension_numbers = #tpu.dot_dimension_numbers<[1], [0], [0], [1], [0, 0, 1, 1], [], []>} : vector<128x128xf32>, vector<128x3xf32>, vector<128x3xf32> -> vector<128x3xf32>
    %77 = vector.extract_strided_slice %76 {offsets = [0, 0], sizes = [128, 1], strides = [1, 1]} : vector<128x3xf32> to vector<128x1xf32>
    %78 = vector.broadcast %77 : vector<128x1xf32> to vector<128x2xf32>
    %79 = arith.mulf %78, %7 : vector<128x2xf32>
    %80 = vector.extract_strided_slice %76 {offsets = [0, 1], sizes = [128, 2], strides = [1, 1]} : vector<128x3xf32> to vector<128x2xf32>
    %81 = arith.subf %79, %80 : vector<128x2xf32>
    %82 = vector.extract_strided_slice %31 {offsets = [6, 0], sizes = [2, 32], strides = [1, 1]} : vector<18x32xf32> to vector<2x32xf32>
    %cst_26 = arith.constant dense<0.000000e+00> : vector<128x32xf32>
    %83 = tpu.matmul %81, %82, %cst_26 {dimension_numbers = #tpu.dot_dimension_numbers<[1], [0], [0], [1], [0, 0, 1, 1], [], []>} : vector<128x2xf32>, vector<2x32xf32>, vector<128x32xf32> -> vector<128x32xf32>
    %84 = arith.addf %71, %83 : vector<128x32xf32>
    %cst_27 = arith.constant 5.000000e+00 : f32
    %85 = vector.broadcast %cst_27 : f32 to vector<128x128xf32>
    %86 = arith.cmpf oeq, %30, %85 : vector<128x128xf32>
    %87 = arith.extui %86 : vector<128x128xi1> to vector<128x128xi32>
    %88 = arith.sitofp %87 : vector<128x128xi32> to vector<128x128xf32>
    %cst_28 = arith.constant dense<0.000000e+00> : vector<128x3xf32>
    %89 = tpu.matmul %88, %5, %cst_28 {dimension_numbers = #tpu.dot_dimension_numbers<[1], [0], [0], [1], [0, 0, 1, 1], [], []>} : vector<128x128xf32>, vector<128x3xf32>, vector<128x3xf32> -> vector<128x3xf32>
    %90 = vector.extract_strided_slice %89 {offsets = [0, 0], sizes = [128, 1], strides = [1, 1]} : vector<128x3xf32> to vector<128x1xf32>
    %91 = vector.broadcast %90 : vector<128x1xf32> to vector<128x2xf32>
    %92 = arith.mulf %91, %7 : vector<128x2xf32>
    %93 = vector.extract_strided_slice %89 {offsets = [0, 1], sizes = [128, 2], strides = [1, 1]} : vector<128x3xf32> to vector<128x2xf32>
    %94 = arith.subf %92, %93 : vector<128x2xf32>
    %95 = vector.extract_strided_slice %31 {offsets = [8, 0], sizes = [2, 32], strides = [1, 1]} : vector<18x32xf32> to vector<2x32xf32>
    %cst_29 = arith.constant dense<0.000000e+00> : vector<128x32xf32>
    %96 = tpu.matmul %94, %95, %cst_29 {dimension_numbers = #tpu.dot_dimension_numbers<[1], [0], [0], [1], [0, 0, 1, 1], [], []>} : vector<128x2xf32>, vector<2x32xf32>, vector<128x32xf32> -> vector<128x32xf32>
    %97 = arith.addf %84, %96 : vector<128x32xf32>
    %cst_30 = arith.constant 6.000000e+00 : f32
    %98 = vector.broadcast %cst_30 : f32 to vector<128x128xf32>
    %99 = arith.cmpf oeq, %30, %98 : vector<128x128xf32>
    %100 = arith.extui %99 : vector<128x128xi1> to vector<128x128xi32>
    %101 = arith.sitofp %100 : vector<128x128xi32> to vector<128x128xf32>
    %cst_31 = arith.constant dense<0.000000e+00> : vector<128x3xf32>
    %102 = tpu.matmul %101, %5, %cst_31 {dimension_numbers = #tpu.dot_dimension_numbers<[1], [0], [0], [1], [0, 0, 1, 1], [], []>} : vector<128x128xf32>, vector<128x3xf32>, vector<128x3xf32> -> vector<128x3xf32>
    %103 = vector.extract_strided_slice %102 {offsets = [0, 0], sizes = [128, 1], strides = [1, 1]} : vector<128x3xf32> to vector<128x1xf32>
    %104 = vector.broadcast %103 : vector<128x1xf32> to vector<128x2xf32>
    %105 = arith.mulf %104, %7 : vector<128x2xf32>
    %106 = vector.extract_strided_slice %102 {offsets = [0, 1], sizes = [128, 2], strides = [1, 1]} : vector<128x3xf32> to vector<128x2xf32>
    %107 = arith.subf %105, %106 : vector<128x2xf32>
    %108 = vector.extract_strided_slice %31 {offsets = [10, 0], sizes = [2, 32], strides = [1, 1]} : vector<18x32xf32> to vector<2x32xf32>
    %cst_32 = arith.constant dense<0.000000e+00> : vector<128x32xf32>
    %109 = tpu.matmul %107, %108, %cst_32 {dimension_numbers = #tpu.dot_dimension_numbers<[1], [0], [0], [1], [0, 0, 1, 1], [], []>} : vector<128x2xf32>, vector<2x32xf32>, vector<128x32xf32> -> vector<128x32xf32>
    %110 = arith.addf %97, %109 : vector<128x32xf32>
    %cst_33 = arith.constant 7.000000e+00 : f32
    %111 = vector.broadcast %cst_33 : f32 to vector<128x128xf32>
    %112 = arith.cmpf oeq, %30, %111 : vector<128x128xf32>
    %113 = arith.extui %112 : vector<128x128xi1> to vector<128x128xi32>
    %114 = arith.sitofp %113 : vector<128x128xi32> to vector<128x128xf32>
    %cst_34 = arith.constant dense<0.000000e+00> : vector<128x3xf32>
    %115 = tpu.matmul %114, %5, %cst_34 {dimension_numbers = #tpu.dot_dimension_numbers<[1], [0], [0], [1], [0, 0, 1, 1], [], []>} : vector<128x128xf32>, vector<128x3xf32>, vector<128x3xf32> -> vector<128x3xf32>
    %116 = vector.extract_strided_slice %115 {offsets = [0, 0], sizes = [128, 1], strides = [1, 1]} : vector<128x3xf32> to vector<128x1xf32>
    %117 = vector.broadcast %116 : vector<128x1xf32> to vector<128x2xf32>
    %118 = arith.mulf %117, %7 : vector<128x2xf32>
    %119 = vector.extract_strided_slice %115 {offsets = [0, 1], sizes = [128, 2], strides = [1, 1]} : vector<128x3xf32> to vector<128x2xf32>
    %120 = arith.subf %118, %119 : vector<128x2xf32>
    %121 = vector.extract_strided_slice %31 {offsets = [12, 0], sizes = [2, 32], strides = [1, 1]} : vector<18x32xf32> to vector<2x32xf32>
    %cst_35 = arith.constant dense<0.000000e+00> : vector<128x32xf32>
    %122 = tpu.matmul %120, %121, %cst_35 {dimension_numbers = #tpu.dot_dimension_numbers<[1], [0], [0], [1], [0, 0, 1, 1], [], []>} : vector<128x2xf32>, vector<2x32xf32>, vector<128x32xf32> -> vector<128x32xf32>
    %123 = arith.addf %110, %122 : vector<128x32xf32>
    %cst_36 = arith.constant 8.000000e+00 : f32
    %124 = vector.broadcast %cst_36 : f32 to vector<128x128xf32>
    %125 = arith.cmpf oeq, %30, %124 : vector<128x128xf32>
    %126 = arith.extui %125 : vector<128x128xi1> to vector<128x128xi32>
    %127 = arith.sitofp %126 : vector<128x128xi32> to vector<128x128xf32>
    %cst_37 = arith.constant dense<0.000000e+00> : vector<128x3xf32>
    %128 = tpu.matmul %127, %5, %cst_37 {dimension_numbers = #tpu.dot_dimension_numbers<[1], [0], [0], [1], [0, 0, 1, 1], [], []>} : vector<128x128xf32>, vector<128x3xf32>, vector<128x3xf32> -> vector<128x3xf32>
    %129 = vector.extract_strided_slice %128 {offsets = [0, 0], sizes = [128, 1], strides = [1, 1]} : vector<128x3xf32> to vector<128x1xf32>
    %130 = vector.broadcast %129 : vector<128x1xf32> to vector<128x2xf32>
    %131 = arith.mulf %130, %7 : vector<128x2xf32>
    %132 = vector.extract_strided_slice %128 {offsets = [0, 1], sizes = [128, 2], strides = [1, 1]} : vector<128x3xf32> to vector<128x2xf32>
    %133 = arith.subf %131, %132 : vector<128x2xf32>
    %134 = vector.extract_strided_slice %31 {offsets = [14, 0], sizes = [2, 32], strides = [1, 1]} : vector<18x32xf32> to vector<2x32xf32>
    %cst_38 = arith.constant dense<0.000000e+00> : vector<128x32xf32>
    %135 = tpu.matmul %133, %134, %cst_38 {dimension_numbers = #tpu.dot_dimension_numbers<[1], [0], [0], [1], [0, 0, 1, 1], [], []>} : vector<128x2xf32>, vector<2x32xf32>, vector<128x32xf32> -> vector<128x32xf32>
    %136 = arith.addf %123, %135 : vector<128x32xf32>
    %cst_39 = arith.constant 9.000000e+00 : f32
    %137 = vector.broadcast %cst_39 : f32 to vector<128x128xf32>
    %138 = arith.cmpf oeq, %30, %137 : vector<128x128xf32>
    %139 = arith.extui %138 : vector<128x128xi1> to vector<128x128xi32>
    %140 = arith.sitofp %139 : vector<128x128xi32> to vector<128x128xf32>
    %cst_40 = arith.constant dense<0.000000e+00> : vector<128x3xf32>
    %141 = tpu.matmul %140, %5, %cst_40 {dimension_numbers = #tpu.dot_dimension_numbers<[1], [0], [0], [1], [0, 0, 1, 1], [], []>} : vector<128x128xf32>, vector<128x3xf32>, vector<128x3xf32> -> vector<128x3xf32>
    %142 = vector.extract_strided_slice %141 {offsets = [0, 0], sizes = [128, 1], strides = [1, 1]} : vector<128x3xf32> to vector<128x1xf32>
    %143 = vector.broadcast %142 : vector<128x1xf32> to vector<128x2xf32>
    %144 = arith.mulf %143, %7 : vector<128x2xf32>
    %145 = vector.extract_strided_slice %141 {offsets = [0, 1], sizes = [128, 2], strides = [1, 1]} : vector<128x3xf32> to vector<128x2xf32>
    %146 = arith.subf %144, %145 : vector<128x2xf32>
    %147 = vector.extract_strided_slice %31 {offsets = [16, 0], sizes = [2, 32], strides = [1, 1]} : vector<18x32xf32> to vector<2x32xf32>
    %cst_41 = arith.constant dense<0.000000e+00> : vector<128x32xf32>
    %148 = tpu.matmul %146, %147, %cst_41 {dimension_numbers = #tpu.dot_dimension_numbers<[1], [0], [0], [1], [0, 0, 1, 1], [], []>} : vector<128x2xf32>, vector<2x32xf32>, vector<128x32xf32> -> vector<128x32xf32>
    %149 = arith.addf %136, %148 : vector<128x32xf32>
    %c0_42 = arith.constant 0 : index
    %c0_43 = arith.constant 0 : index
    %150 = vector.load %arg7[%c0_42, %c0_43] : memref<1x32xf32, #tpu.memory_space<vmem>>, vector<1x32xf32>
    %151 = vector.broadcast %150 : vector<1x32xf32> to vector<128x32xf32>
    %152 = arith.addf %149, %151 : vector<128x32xf32>
    %cst_44 = arith.constant 0.000000e+00 : f32
    %153 = vector.broadcast %cst_44 : f32 to vector<128x32xf32>
    %154 = arith.maximumf %152, %153 : vector<128x32xf32>
    %c0_45 = arith.constant 0 : index
    %c0_46 = arith.constant 0 : index
    %155 = vector.load %arg8[%c0_45, %c0_46] : memref<32x32xf32, #tpu.memory_space<vmem>>, vector<32x32xf32>
    %cst_47 = arith.constant dense<0.000000e+00> : vector<128x32xf32>
    %156 = tpu.matmul %154, %155, %cst_47 {dimension_numbers = #tpu.dot_dimension_numbers<[1], [0], [0], [1], [0, 0, 1, 1], [], []>} : vector<128x32xf32>, vector<32x32xf32>, vector<128x32xf32> -> vector<128x32xf32>
    %c0_48 = arith.constant 0 : index
    %c0_49 = arith.constant 0 : index
    %157 = vector.load %arg9[%c0_48, %c0_49] : memref<1x32xf32, #tpu.memory_space<vmem>>, vector<1x32xf32>
    %158 = vector.broadcast %157 : vector<1x32xf32> to vector<128x32xf32>
    %159 = arith.addf %156, %158 : vector<128x32xf32>
    %c0_50 = arith.constant 0 : index
    %c0_51 = arith.constant 0 : index
    %160 = vector.load %arg10[%c0_50, %c0_51] : memref<1x32xf32, #tpu.memory_space<vmem>>, vector<1x32xf32>
    %161 = vector.broadcast %6 : vector<128x1xf32> to vector<128x32xf32>
    %162 = vector.broadcast %160 : vector<1x32xf32> to vector<128x32xf32>
    %163 = arith.mulf %161, %162 : vector<128x32xf32>
    %c0_52 = arith.constant 0 : index
    %c0_53 = arith.constant 0 : index
    %164 = vector.load %arg11[%c0_52, %c0_53] : memref<1x32xf32, #tpu.memory_space<vmem>>, vector<1x32xf32>
    %165 = vector.broadcast %164 : vector<1x32xf32> to vector<128x32xf32>
    %166 = arith.addf %163, %165 : vector<128x32xf32>
    %167 = vector.broadcast %10 : vector<128x1xf32> to vector<128x32xf32>
    %168 = arith.mulf %167, %166 : vector<128x32xf32>
    %169 = arith.addf %159, %168 : vector<128x32xf32>
    %cst_54 = arith.constant 1.000000e+00 : f32
    %170 = vector.broadcast %cst_54 : f32 to vector<128x1xf32>
    %171 = arith.subf %170, %10 : vector<128x1xf32>
    %c0_55 = arith.constant 0 : index
    %c0_56 = arith.constant 0 : index
    %172 = vector.load %arg12[%c0_55, %c0_56] : memref<1x32xf32, #tpu.memory_space<vmem>>, vector<1x32xf32>
    %173 = vector.broadcast %6 : vector<128x1xf32> to vector<128x32xf32>
    %174 = vector.broadcast %172 : vector<1x32xf32> to vector<128x32xf32>
    %175 = arith.mulf %173, %174 : vector<128x32xf32>
    %c0_57 = arith.constant 0 : index
    %c0_58 = arith.constant 0 : index
    %176 = vector.load %arg13[%c0_57, %c0_58] : memref<1x32xf32, #tpu.memory_space<vmem>>, vector<1x32xf32>
    %177 = vector.broadcast %176 : vector<1x32xf32> to vector<128x32xf32>
    %178 = arith.addf %175, %177 : vector<128x32xf32>
    %179 = vector.broadcast %171 : vector<128x1xf32> to vector<128x32xf32>
    %180 = arith.mulf %179, %178 : vector<128x32xf32>
    %181 = arith.addf %169, %180 : vector<128x32xf32>
    %cst_59 = arith.constant dense<0.000000e+00> : vector<128xf32>
    %182 = vector.multi_reduction <add>, %181, %cst_59 [1] : vector<128x32xf32> to vector<128xf32>
    %183 = vector.shape_cast %182 : vector<128xf32> to vector<128x1xf32>
    %cst_60 = arith.constant 3.200000e+01 : f32
    %184 = vector.broadcast %cst_60 : f32 to vector<128x1xf32>
    %185 = arith.divf %183, %184 : vector<128x1xf32>
    %186 = vector.broadcast %185 : vector<128x1xf32> to vector<128x32xf32>
    %187 = arith.subf %181, %186 : vector<128x32xf32>
    %188 = vector.broadcast %185 : vector<128x1xf32> to vector<128x32xf32>
    %189 = arith.subf %181, %188 : vector<128x32xf32>
    %190 = arith.mulf %187, %189 : vector<128x32xf32>
    %cst_61 = arith.constant dense<0.000000e+00> : vector<128xf32>
    %191 = vector.multi_reduction <add>, %190, %cst_61 [1] : vector<128x32xf32> to vector<128xf32>
    %192 = vector.shape_cast %191 : vector<128xf32> to vector<128x1xf32>
    %cst_62 = arith.constant 3.200000e+01 : f32
    %193 = vector.broadcast %cst_62 : f32 to vector<128x1xf32>
    %194 = arith.divf %192, %193 : vector<128x1xf32>
    %195 = vector.broadcast %185 : vector<128x1xf32> to vector<128x32xf32>
    %196 = arith.subf %181, %195 : vector<128x32xf32>
    %cst_63 = arith.constant 9.99999974E-6 : f32
    %197 = vector.broadcast %cst_63 : f32 to vector<128x1xf32>
    %198 = arith.addf %194, %197 : vector<128x1xf32>
    %199 = math.rsqrt %198 : vector<128x1xf32>
    %200 = vector.broadcast %199 : vector<128x1xf32> to vector<128x32xf32>
    %201 = arith.mulf %196, %200 : vector<128x32xf32>
    %c0_64 = arith.constant 0 : index
    %c0_65 = arith.constant 0 : index
    %202 = vector.load %arg14[%c0_64, %c0_65] : memref<1x32xf32, #tpu.memory_space<vmem>>, vector<1x32xf32>
    %203 = vector.broadcast %202 : vector<1x32xf32> to vector<128x32xf32>
    %204 = arith.mulf %201, %203 : vector<128x32xf32>
    %c0_66 = arith.constant 0 : index
    %c0_67 = arith.constant 0 : index
    %205 = vector.load %arg15[%c0_66, %c0_67] : memref<1x32xf32, #tpu.memory_space<vmem>>, vector<1x32xf32>
    %206 = vector.broadcast %205 : vector<1x32xf32> to vector<128x32xf32>
    %207 = arith.addf %204, %206 : vector<128x32xf32>
    %c0_68 = arith.constant 0 : index
    %c0_69 = arith.constant 0 : index
    %c0_70 = arith.constant 0 : index
    %208 = vector.load %arg16[%c0_68, %c0_69, %c0_70] : memref<1x128x32xf32, #tpu.memory_space<vmem>>, vector<1x128x32xf32>
    %209 = vector.shape_cast %208 : vector<1x128x32xf32> to vector<128x32xf32>
    %210 = vector.shape_cast %207 : vector<128x32xf32> to vector<1x128x32xf32>
    tpu.vector_store %arg16[%c0_68, %c0_69, %c0_70], %210 {strides = array<i32>} : memref<1x128x32xf32, #tpu.memory_space<vmem>>, vector<1x128x32xf32>,
    return
  }
  func.func @transform_0(%arg0: i32, %arg1: i32) -> (i32, i32, i32) {
    %c0_i32 = arith.constant 0 : i32
    %c0_i32_0 = arith.constant 0 : i32
    return %arg0, %arg1, %c0_i32 : i32, i32, i32
  }
  func.func @transform_1(%arg0: i32, %arg1: i32) -> (i32, i32, i32) {
    %c0_i32 = arith.constant 0 : i32
    %c0_i32_0 = arith.constant 0 : i32
    %c0_i32_1 = arith.constant 0 : i32
    return %arg0, %c0_i32, %c0_i32_0 : i32, i32, i32
  }
  func.func @transform_2(%arg0: i32, %arg1: i32) -> (i32, i32, i32) {
    %c0_i32 = arith.constant 0 : i32
    %c0_i32_0 = arith.constant 0 : i32
    %c0_i32_1 = arith.constant 0 : i32
    return %arg0, %c0_i32, %c0_i32_0 : i32, i32, i32
  }
  func.func @transform_3(%arg0: i32, %arg1: i32) -> (i32, i32) {
    %c0_i32 = arith.constant 0 : i32
    %c0_i32_0 = arith.constant 0 : i32
    %c0_i32_1 = arith.constant 0 : i32
    return %c0_i32, %c0_i32_0 : i32, i32
  }
  func.func @transform_4(%arg0: i32, %arg1: i32) -> (i32, i32) {
    %c0_i32 = arith.constant 0 : i32
    %c0_i32_0 = arith.constant 0 : i32
    %c0_i32_1 = arith.constant 0 : i32
    return %c0_i32, %c0_i32_0 : i32, i32
  }
  func.func @transform_5(%arg0: i32, %arg1: i32) -> (i32, i32) {
    %c0_i32 = arith.constant 0 : i32
    %c0_i32_0 = arith.constant 0 : i32
    %c0_i32_1 = arith.constant 0 : i32
    return %c0_i32, %c0_i32_0 : i32, i32
  }
  func.func @transform_6(%arg0: i32, %arg1: i32) -> (i32, i32) {
    %c0_i32 = arith.constant 0 : i32
    %c0_i32_0 = arith.constant 0 : i32
    %c0_i32_1 = arith.constant 0 : i32
    return %c0_i32, %c0_i32_0 : i32, i32
  }
  func.func @transform_7(%arg0: i32, %arg1: i32) -> (i32, i32) {
    %c0_i32 = arith.constant 0 : i32
    %c0_i32_0 = arith.constant 0 : i32
    %c0_i32_1 = arith.constant 0 : i32
    return %c0_i32, %c0_i32_0 : i32, i32
  }
  func.func @transform_8(%arg0: i32, %arg1: i32) -> (i32, i32) {
    %c0_i32 = arith.constant 0 : i32
    %c0_i32_0 = arith.constant 0 : i32
    %c0_i32_1 = arith.constant 0 : i32
    return %c0_i32, %c0_i32_0 : i32, i32
  }
  func.func @transform_9(%arg0: i32, %arg1: i32) -> (i32, i32) {
    %c0_i32 = arith.constant 0 : i32
    %c0_i32_0 = arith.constant 0 : i32
    %c0_i32_1 = arith.constant 0 : i32
    return %c0_i32, %c0_i32_0 : i32, i32
  }
  func.func @transform_10(%arg0: i32, %arg1: i32) -> (i32, i32) {
    %c0_i32 = arith.constant 0 : i32
    %c0_i32_0 = arith.constant 0 : i32
    %c0_i32_1 = arith.constant 0 : i32
    return %c0_i32, %c0_i32_0 : i32, i32
  }
  func.func @transform_11(%arg0: i32, %arg1: i32) -> (i32, i32) {
    %c0_i32 = arith.constant 0 : i32
    %c0_i32_0 = arith.constant 0 : i32
    %c0_i32_1 = arith.constant 0 : i32
    return %c0_i32, %c0_i32_0 : i32, i32
  }
  func.func @transform_12(%arg0: i32, %arg1: i32) -> (i32, i32) {
    %c0_i32 = arith.constant 0 : i32
    %c0_i32_0 = arith.constant 0 : i32
    %c0_i32_1 = arith.constant 0 : i32
    return %c0_i32, %c0_i32_0 : i32, i32
  }
  func.func @transform_13(%arg0: i32, %arg1: i32) -> (i32, i32) {
    %c0_i32 = arith.constant 0 : i32
    %c0_i32_0 = arith.constant 0 : i32
    %c0_i32_1 = arith.constant 0 : i32
    return %c0_i32, %c0_i32_0 : i32, i32
  }
  func.func @transform_14(%arg0: i32, %arg1: i32) -> (i32, i32, i32) {
    %c0_i32 = arith.constant 0 : i32
    %c0_i32_0 = arith.constant 0 : i32
    return %arg0, %arg1, %c0_i32 : i32, i32, i32
  }
}

</mosaic_0001>

<llo_original>
// kernel: tpu_custom_call.1
$region0: #{tpu_custom_call.1}
  #allocation0 [shape = 'u32[]', space=smem, size = 0x4, offset = 0x4, fixed_abs, tag = 'smem constant byte address 0x4 - core index']
  #allocation1 [shape = 'u32[72,128]{1,0:T(1,128)}', space=vmem, size = 0x9000, scoped, tag = 'internal scratch']
  %s0 = inlined_call_operand.vmem [shape: f32[2,128,4], index: 0, kind: input, shape index: {}]
  %s1 = inlined_call_operand.vmem [shape: f32[2,4,128], index: 1, kind: input, shape index: {}]
  %s2 = inlined_call_operand.vmem [shape: f32[2,128,3], index: 2, kind: input, shape index: {}]
  %s3 = inlined_call_operand.vmem [shape: bf16[128,128], index: 3, kind: input, shape index: {}]
  %s4 = inlined_call_operand.vmem [shape: f32[18,32], index: 4, kind: input, shape index: {}]
  %s5 = inlined_call_operand.vmem [shape: f32[1,32], index: 5, kind: input, shape index: {}]
  %s6 = inlined_call_operand.vmem [shape: f32[32,32], index: 6, kind: input, shape index: {}]
  %s7 = inlined_call_operand.vmem [shape: f32[1,32], index: 7, kind: input, shape index: {}]
  %s8 = inlined_call_operand.vmem [shape: f32[1,32], index: 8, kind: input, shape index: {}]
  %s9 = inlined_call_operand.vmem [shape: f32[1,32], index: 9, kind: input, shape index: {}]
  %s10 = inlined_call_operand.vmem [shape: f32[1,32], index: 10, kind: input, shape index: {}]
  %s11 = inlined_call_operand.vmem [shape: f32[1,32], index: 11, kind: input, shape index: {}]
  %s12 = inlined_call_operand.vmem [shape: f32[1,32], index: 12, kind: input, shape index: {}]
  %s13 = inlined_call_operand.vmem [shape: f32[1,32], index: 13, kind: input, shape index: {}]
  %s14 = inlined_call_operand.vmem [shape: f32[2,128,32], index: 14, kind: output, shape index: {}]
  %s15 = sld [smem:[#allocation0]]
  $region89: #{tpu_custom_call.1} parent=0
    _
  %s17 = ssub.s32 1, %s15
  %s18 = scalar_select 0, %s17, %s15
  loop: start=0, step=1, limit=4
  $region2: #{tpu_custom_call.1} parent=0 // loop_pre_header
    _
  $region3: #{tpu_custom_call.1} parent=0 // loop_header
    %s20 = sphi 0, %s24
    %p21 = scmp.ge.s32.totalorder %s20, 4
    %s27 = sphi 0, %s39
    %s28 = sphi 0, %s35
    %s29 = sphi 0, %s27
    %s30 = sphi 0, %s28
    %s31 = sphi 0, %s29
    %s32 = sphi 0, %s30
    %s44 = sphi 0, %s46
    %s47 = sphi 0, %s44
    %s48 = sphi 0, %s47
    %s64 = sphi 0, %s48
    %s70 = sphi 0, %s72
    %s73 = sphi 0, %s70
    %s74 = sphi 0, %s73
    %s90 = sphi 0, %s74
    %s96 = sphi 0, %s98
    %s99 = sphi 0, %s96
    %s100 = sphi 0, %s99
    %s116 = sphi 0, %s100
    %s120 = sphi 0, %s120
    %s122 = sphi 0, %s120
    %s123 = sphi 0, %s122
    %s137 = sphi 0, %s123
    %s141 = sphi 0, %s141
    %s143 = sphi 0, %s141
    %s144 = sphi 0, %s143
    %s158 = sphi 0, %s144
    %s162 = sphi 0, %s162
    %s164 = sphi 0, %s162
    %s165 = sphi 0, %s164
    %s179 = sphi 0, %s165
    %s183 = sphi 0, %s183
    %s185 = sphi 0, %s183
    %s186 = sphi 0, %s185
    %s200 = sphi 0, %s186
    %s204 = sphi 0, %s204
    %s206 = sphi 0, %s204
    %s207 = sphi 0, %s206
    %s221 = sphi 0, %s207
    %s225 = sphi 0, %s225
    %s227 = sphi 0, %s225
    %s228 = sphi 0, %s227
    %s242 = sphi 0, %s228
    %s246 = sphi 0, %s246
    %s248 = sphi 0, %s246
    %s249 = sphi 0, %s248
    %s263 = sphi 0, %s249
    %s267 = sphi 0, %s267
    %s269 = sphi 0, %s267
    %s270 = sphi 0, %s269
    %s284 = sphi 0, %s270
    %s288 = sphi 0, %s288
    %s290 = sphi 0, %s288
    %s291 = sphi 0, %s290
    %s305 = sphi 0, %s291
    %s309 = sphi 0, %s309
    %s311 = sphi 0, %s309
    %s312 = sphi 0, %s311
    %s326 = sphi 0, %s312
    %s330 = sphi 0, %s330
    %s332 = sphi 0, %s330
    %s333 = sphi 0, %s332
    %s347 = sphi 0, %s333
    %s355 = sphi 0, %s357
    %s358 = sphi 0, %s355
    %s359 = sphi 0, %s358
    %s375 = sphi 0, %s359
  $region4: #{tpu_custom_call.1} parent=0 // loop_header_branch
    %23 = sbr.rel (%p21) target = $region8
  $region5: #{tpu_custom_call.1} parent=0 // loop_body
    %s25 = ssub.s32 %s20, 1
    %s26 = ssub.s32 %s20, 2
    %s33 = sadd.s32 1, %s28
    %p34 = scmp.ge.s32.totalorder %s33, 1
    %s35 = scalar_select %p34, 0, %s33
    %s36 = sadd.s32 1, %s27
    %s37 = scalar_select %p34, %s36, %s27
    %p38 = scmp.ge.s32.totalorder %s37, 2
    %s39 = scalar_select %p38, 0, %s37
    %s40 = ssub.s32 %s27, %s39
    %s41 = ssub.s32 %s28, %s35
    %s42 = sor.u32 %s40, %s41
    %p43 = scmp.eq.s32.totalorder %s42, 0
    %s45 = sadd.s32 %s44, 1
    %s46 = scalar_select %p43, %s44, %s45
    %p49 = pneg %p43
    %p50 = scmp.eq.s32.totalorder %s20, 1
    %p51 = por %p49, %p50
    %p52 = scmp.ne.s32.totalorder %s44, %s47
    %p53 = scmp.eq.s32.totalorder %s20, 0
    %p54 = por %p52, %p53
    %p55 = scmp.ne.s32.totalorder %s44, %s47
    %p56 = scmp.eq.s32.totalorder %s25, 1
    %p57 = por %p55, %p56
    %p58 = scmp.ne.s32.totalorder %s47, %s48
    %p59 = scmp.eq.s32.totalorder %s25, 0
    %p60 = por %p58, %p59
    %p61 = scmp.ne.s32.totalorder %s47, %s48
    %p62 = scmp.eq.s32.totalorder %s26, 1
    %p63 = por %p61, %p62
    %p65 = scmp.ne.s32.totalorder %s48, %s64
    %p66 = scmp.eq.s32.totalorder %s26, 0
    %p67 = por %p65, %p66
    %s68 = ssub.s32 %s27, %s39
    %p69 = scmp.eq.s32.totalorder %s68, 0
    %s71 = sadd.s32 %s70, 1
    %s72 = scalar_select %p69, %s70, %s71
    %p75 = pneg %p69
    %p76 = scmp.eq.s32.totalorder %s20, 1
    %p77 = por %p75, %p76
    %p78 = scmp.ne.s32.totalorder %s70, %s73
    %p79 = scmp.eq.s32.totalorder %s20, 0
    %p80 = por %p78, %p79
    %p81 = scmp.ne.s32.totalorder %s70, %s73
    %p82 = scmp.eq.s32.totalorder %s25, 1
    %p83 = por %p81, %p82
    %p84 = scmp.ne.s32.totalorder %s73, %s74
    %p85 = scmp.eq.s32.totalorder %s25, 0
    %p86 = por %p84, %p85
    %p87 = scmp.ne.s32.totalorder %s73, %s74
    %p88 = scmp.eq.s32.totalorder %s26, 1
    %p89 = por %p87, %p88
    %p91 = scmp.ne.s32.totalorder %s74, %s90
    %p92 = scmp.eq.s32.totalorder %s26, 0
    %p93 = por %p91, %p92
    %s94 = ssub.s32 %s27, %s39
    %p95 = scmp.eq.s32.totalorder %s94, 0
    %s97 = sadd.s32 %s96, 1
    %s98 = scalar_select %p95, %s96, %s97
    %p101 = pneg %p95
    %p102 = scmp.eq.s32.totalorder %s20, 1
    %p103 = por %p101, %p102
    %p104 = scmp.ne.s32.totalorder %s96, %s99
    %p105 = scmp.eq.s32.totalorder %s20, 0
    %p106 = por %p104, %p105
    %p107 = scmp.ne.s32.totalorder %s96, %s99
    %p108 = scmp.eq.s32.totalorder %s25, 1
    %p109 = por %p107, %p108
    %p110 = scmp.ne.s32.totalorder %s99, %s100
    %p111 = scmp.eq.s32.totalorder %s25, 0
    %p112 = por %p110, %p111
    %p113 = scmp.ne.s32.totalorder %s99, %s100
    %p114 = scmp.eq.s32.totalorder %s26, 1
    %p115 = por %p113, %p114
    %p117 = scmp.ne.s32.totalorder %s100, %s116
    %p118 = scmp.eq.s32.totalorder %s26, 0
    %p119 = por %p117, %p118
    %s121 = sadd.s32 %s120, 1
    %p124 = scmp.eq.s32.totalorder %s20, 1
    %p125 = scmp.ne.s32.totalorder %s120, %s122
    %p126 = scmp.eq.s32.totalorder %s20, 0
    %p127 = por %p125, %p126
    %p128 = scmp.ne.s32.totalorder %s120, %s122
    %p129 = scmp.eq.s32.totalorder %s25, 1
    %p130 = por %p128, %p129
    %p131 = scmp.ne.s32.totalorder %s122, %s123
    %p132 = scmp.eq.s32.totalorder %s25, 0
    %p133 = por %p131, %p132
    %p134 = scmp.ne.s32.totalorder %s122, %s123
    %p135 = scmp.eq.s32.totalorder %s26, 1
    %p136 = por %p134, %p135
    %p138 = scmp.ne.s32.totalorder %s123, %s137
    %p139 = scmp.eq.s32.totalorder %s26, 0
    %p140 = por %p138, %p139
    %s142 = sadd.s32 %s141, 1
    %p145 = scmp.eq.s32.totalorder %s20, 1
    %p146 = scmp.ne.s32.totalorder %s141, %s143
    %p147 = scmp.eq.s32.totalorder %s20, 0
    %p148 = por %p146, %p147
    %p149 = scmp.ne.s32.totalorder %s141, %s143
    %p150 = scmp.eq.s32.totalorder %s25, 1
    %p151 = por %p149, %p150
    %p152 = scmp.ne.s32.totalorder %s143, %s144
    %p153 = scmp.eq.s32.totalorder %s25, 0
    %p154 = por %p152, %p153
    %p155 = scmp.ne.s32.totalorder %s143, %s144
    %p156 = scmp.eq.s32.totalorder %s26, 1
    %p157 = por %p155, %p156
    %p159 = scmp.ne.s32.totalorder %s144, %s158
    %p160 = scmp.eq.s32.totalorder %s26, 0
    %p161 = por %p159, %p160
    %s163 = sadd.s32 %s162, 1
    %p166 = scmp.eq.s32.totalorder %s20, 1
    %p167 = scmp.ne.s32.totalorder %s162, %s164
    %p168 = scmp.eq.s32.totalorder %s20, 0
    %p169 = por %p167, %p168
    %p170 = scmp.ne.s32.totalorder %s162, %s164
    %p171 = scmp.eq.s32.totalorder %s25, 1
    %p172 = por %p170, %p171
    %p173 = scmp.ne.s32.totalorder %s164, %s165
    %p174 = scmp.eq.s32.totalorder %s25, 0
    %p175 = por %p173, %p174
    %p176 = scmp.ne.s32.totalorder %s164, %s165
    %p177 = scmp.eq.s32.totalorder %s26, 1
    %p178 = por %p176, %p177
    %p180 = scmp.ne.s32.totalorder %s165, %s179
    %p181 = scmp.eq.s32.totalorder %s26, 0
    %p182 = por %p180, %p181
    %s184 = sadd.s32 %s183, 1
    %p187 = scmp.eq.s32.totalorder %s20, 1
    %p188 = scmp.ne.s32.totalorder %s183, %s185
    %p189 = scmp.eq.s32.totalorder %s20, 0
    %p190 = por %p188, %p189
    %p191 = scmp.ne.s32.totalorder %s183, %s185
    %p192 = scmp.eq.s32.totalorder %s25, 1
    %p193 = por %p191, %p192
    %p194 = scmp.ne.s32.totalorder %s185, %s186
    %p195 = scmp.eq.s32.totalorder %s25, 0
    %p196 = por %p194, %p195
    %p197 = scmp.ne.s32.totalorder %s185, %s186
    %p198 = scmp.eq.s32.totalorder %s26, 1
    %p199 = por %p197, %p198
    %p201 = scmp.ne.s32.totalorder %s186, %s200
    %p202 = scmp.eq.s32.totalorder %s26, 0
    %p203 = por %p201, %p202
    %s205 = sadd.s32 %s204, 1
    %p208 = scmp.eq.s32.totalorder %s20, 1
    %p209 = scmp.ne.s32.totalorder %s204, %s206
    %p210 = scmp.eq.s32.totalorder %s20, 0
    %p211 = por %p209, %p210
    %p212 = scmp.ne.s32.totalorder %s204, %s206
    %p213 = scmp.eq.s32.totalorder %s25, 1
    %p214 = por %p212, %p213
    %p215 = scmp.ne.s32.totalorder %s206, %s207
    %p216 = scmp.eq.s32.totalorder %s25, 0
    %p217 = por %p215, %p216
    %p218 = scmp.ne.s32.totalorder %s206, %s207
    %p219 = scmp.eq.s32.totalorder %s26, 1
    %p220 = por %p218, %p219
    %p222 = scmp.ne.s32.totalorder %s207, %s221
    %p223 = scmp.eq.s32.totalorder %s26, 0
    %p224 = por %p222, %p223
    %s226 = sadd.s32 %s225, 1
    %p229 = scmp.eq.s32.totalorder %s20, 1
    %p230 = scmp.ne.s32.totalorder %s225, %s227
    %p231 = scmp.eq.s32.totalorder %s20, 0
    %p232 = por %p230, %p231
    %p233 = scmp.ne.s32.totalorder %s225, %s227
    %p234 = scmp.eq.s32.totalorder %s25, 1
    %p235 = por %p233, %p234
    %p236 = scmp.ne.s32.totalorder %s227, %s228
    %p237 = scmp.eq.s32.totalorder %s25, 0
    %p238 = por %p236, %p237
    %p239 = scmp.ne.s32.totalorder %s227, %s228
    %p240 = scmp.eq.s32.totalorder %s26, 1
    %p241 = por %p239, %p240
    %p243 = scmp.ne.s32.totalorder %s228, %s242
    %p244 = scmp.eq.s32.totalorder %s26, 0
    %p245 = por %p243, %p244
    %s247 = sadd.s32 %s246, 1
    %p250 = scmp.eq.s32.totalorder %s20, 1
    %p251 = scmp.ne.s32.totalorder %s246, %s248
    %p252 = scmp.eq.s32.totalorder %s20, 0
    %p253 = por %p251, %p252
    %p254 = scmp.ne.s32.totalorder %s246, %s248
    %p255 = scmp.eq.s32.totalorder %s25, 1
    %p256 = por %p254, %p255
    %p257 = scmp.ne.s32.totalorder %s248, %s249
    %p258 = scmp.eq.s32.totalorder %s25, 0
    %p259 = por %p257, %p258
    %p260 = scmp.ne.s32.totalorder %s248, %s249
    %p261 = scmp.eq.s32.totalorder %s26, 1
    %p262 = por %p260, %p261
    %p264 = scmp.ne.s32.totalorder %s249, %s263
    %p265 = scmp.eq.s32.totalorder %s26, 0
    %p266 = por %p264, %p265
    %s268 = sadd.s32 %s267, 1
    %p271 = scmp.eq.s32.totalorder %s20, 1
    %p272 = scmp.ne.s32.totalorder %s267, %s269
    %p273 = scmp.eq.s32.totalorder %s20, 0
    %p274 = por %p272, %p273
    %p275 = scmp.ne.s32.totalorder %s267, %s269
    %p276 = scmp.eq.s32.totalorder %s25, 1
    %p277 = por %p275, %p276
    %p278 = scmp.ne.s32.totalorder %s269, %s270
    %p279 = scmp.eq.s32.totalorder %s25, 0
    %p280 = por %p278, %p279
    %p281 = scmp.ne.s32.totalorder %s269, %s270
    %p282 = scmp.eq.s32.totalorder %s26, 1
    %p283 = por %p281, %p282
    %p285 = scmp.ne.s32.totalorder %s270, %s284
    %p286 = scmp.eq.s32.totalorder %s26, 0
    %p287 = por %p285, %p286
    %s289 = sadd.s32 %s288, 1
    %p292 = scmp.eq.s32.totalorder %s20, 1
    %p293 = scmp.ne.s32.totalorder %s288, %s290
    %p294 = scmp.eq.s32.totalorder %s20, 0
    %p295 = por %p293, %p294
    %p296 = scmp.ne.s32.totalorder %s288, %s290
    %p297 = scmp.eq.s32.totalorder %s25, 1
    %p298 = por %p296, %p297
    %p299 = scmp.ne.s32.totalorder %s290, %s291
    %p300 = scmp.eq.s32.totalorder %s25, 0
    %p301 = por %p299, %p300
    %p302 = scmp.ne.s32.totalorder %s290, %s291
    %p303 = scmp.eq.s32.totalorder %s26, 1
    %p304 = por %p302, %p303
    %p306 = scmp.ne.s32.totalorder %s291, %s305
    %p307 = scmp.eq.s32.totalorder %s26, 0
    %p308 = por %p306, %p307
    %s310 = sadd.s32 %s309, 1
    %p313 = scmp.eq.s32.totalorder %s20, 1
    %p314 = scmp.ne.s32.totalorder %s309, %s311
    %p315 = scmp.eq.s32.totalorder %s20, 0
    %p316 = por %p314, %p315
    %p317 = scmp.ne.s32.totalorder %s309, %s311
    %p318 = scmp.eq.s32.totalorder %s25, 1
    %p319 = por %p317, %p318
    %p320 = scmp.ne.s32.totalorder %s311, %s312
    %p321 = scmp.eq.s32.totalorder %s25, 0
    %p322 = por %p320, %p321
    %p323 = scmp.ne.s32.totalorder %s311, %s312
    %p324 = scmp.eq.s32.totalorder %s26, 1
    %p325 = por %p323, %p324
    %p327 = scmp.ne.s32.totalorder %s312, %s326
    %p328 = scmp.eq.s32.totalorder %s26, 0
    %p329 = por %p327, %p328
    %s331 = sadd.s32 %s330, 1
    %p334 = scmp.eq.s32.totalorder %s20, 1
    %p335 = scmp.ne.s32.totalorder %s330, %s332
    %p336 = scmp.eq.s32.totalorder %s20, 0
    %p337 = por %p335, %p336
    %p338 = scmp.ne.s32.totalorder %s330, %s332
    %p339 = scmp.eq.s32.totalorder %s25, 1
    %p340 = por %p338, %p339
    %p341 = scmp.ne.s32.totalorder %s332, %s333
    %p342 = scmp.eq.s32.totalorder %s25, 0
    %p343 = por %p341, %p342
    %p344 = scmp.ne.s32.totalorder %s332, %s333
    %p345 = scmp.eq.s32.totalorder %s26, 1
    %p346 = por %p344, %p345
    %p348 = scmp.ne.s32.totalorder %s333, %s347
    %p349 = scmp.eq.s32.totalorder %s26, 0
    %p350 = por %p348, %p349
    %s351 = ssub.s32 %s27, %s39
    %s352 = ssub.s32 %s28, %s35
    %s353 = sor.u32 %s351, %s352
    %p354 = scmp.eq.s32.totalorder %s353, 0
    %s356 = sadd.s32 %s355, 1
    %s357 = scalar_select %p354, %s355, %s356
    %p360 = pneg %p354
    %p361 = scmp.eq.s32.totalorder %s20, 1
    %p362 = por %p360, %p361
    %p363 = scmp.ne.s32.totalorder %s355, %s358
    %p364 = scmp.eq.s32.totalorder %s20, 0
    %p365 = por %p363, %p364
    %p366 = scmp.ne.s32.totalorder %s355, %s358
    %p367 = scmp.eq.s32.totalorder %s25, 1
    %p368 = por %p366, %p367
    %p369 = scmp.ne.s32.totalorder %s358, %s359
    %p370 = scmp.eq.s32.totalorder %s25, 0
    %p371 = por %p369, %p370
    %p372 = scmp.ne.s32.totalorder %s358, %s359
    %p373 = scmp.eq.s32.totalorder %s26, 1
    %p374 = por %p372, %p373
    %p376 = scmp.ne.s32.totalorder %s359, %s375
    %p377 = scmp.eq.s32.totalorder %s26, 0
    %p378 = por %p376, %p377
    %p379 = scmp.le.s32.totalorder 1, %s20
    %p380 = scmp.lt.s32.totalorder %s20, 3
    %p381 = pnand %p379, %p380
    %p382 = pneg %p381
    // Predicated region
    $region9: #{tpu_custom_call.1} parent=5 // pred_check
      _
    $region10: #{tpu_custom_call.1} parent=5 // pred_check_branch
      %384 = sbr.rel (%p381) target = $region12
    $region11: #{tpu_custom_call.1} parent=5 // pred_region
      %s385 = ssub.s32 %s20, 1
      // Predicated region
      $region13: #{tpu_custom_call.1} parent=11 // pred_check
        %p386 = pneg %p133
      $region14: #{tpu_custom_call.1} parent=11 // pred_check_branch
        %388 = sbr.rel (%p386) target = $region16
      $region15: #{tpu_custom_call.1} parent=11 // pred_region
        _
      $region16: #{tpu_custom_call.1} parent=11 // pred_fallthru
        _
      // Predicated region
      $region17: #{tpu_custom_call.1} parent=11 // pred_check
        %p389 = pneg %p154
      $region18: #{tpu_custom_call.1} parent=11 // pred_check_branch
        %391 = sbr.rel (%p389) target = $region20
      $region19: #{tpu_custom_call.1} parent=11 // pred_region
        _
      $region20: #{tpu_custom_call.1} parent=11 // pred_fallthru
        _
      // Predicated region
      $region21: #{tpu_custom_call.1} parent=11 // pred_check
        %p392 = pneg %p175
      $region22: #{tpu_custom_call.1} parent=11 // pred_check_branch
        %394 = sbr.rel (%p392) target = $region24
      $region23: #{tpu_custom_call.1} parent=11 // pred_region
        _
      $region24: #{tpu_custom_call.1} parent=11 // pred_fallthru
        _
      // Predicated region
      $region25: #{tpu_custom_call.1} parent=11 // pred_check
        %p395 = pneg %p196
      $region26: #{tpu_custom_call.1} parent=11 // pred_check_branch
        %397 = sbr.rel (%p395) target = $region28
      $region27: #{tpu_custom_call.1} parent=11 // pred_region
        _
      $region28: #{tpu_custom_call.1} parent=11 // pred_fallthru
        _
      // Predicated region
      $region29: #{tpu_custom_call.1} parent=11 // pred_check
        %p398 = pneg %p217
      $region30: #{tpu_custom_call.1} parent=11 // pred_check_branch
        %400 = sbr.rel (%p398) target = $region32
      $region31: #{tpu_custom_call.1} parent=11 // pred_region
        _
      $region32: #{tpu_custom_call.1} parent=11 // pred_fallthru
        _
      // Predicated region
      $region33: #{tpu_custom_call.1} parent=11 // pred_check
        %p401 = pneg %p238
      $region34: #{tpu_custom_call.1} parent=11 // pred_check_branch
        %403 = sbr.rel (%p401) target = $region36
      $region35: #{tpu_custom_call.1} parent=11 // pred_region
        _
      $region36: #{tpu_custom_call.1} parent=11 // pred_fallthru
        _
      // Predicated region
      $region37: #{tpu_custom_call.1} parent=11 // pred_check
        %p404 = pneg %p259
      $region38: #{tpu_custom_call.1} parent=11 // pred_check_branch
        %406 = sbr.rel (%p404) target = $region40
      $region39: #{tpu_custom_call.1} parent=11 // pred_region
        _
      $region40: #{tpu_custom_call.1} parent=11 // pred_fallthru
        _
      // Predicated region
      $region41: #{tpu_custom_call.1} parent=11 // pred_check
        %p407 = pneg %p280
      $region42: #{tpu_custom_call.1} parent=11 // pred_check_branch
        %409 = sbr.rel (%p407) target = $region44
      $region43: #{tpu_custom_call.1} parent=11 // pred_region
        _
      $region44: #{tpu_custom_call.1} parent=11 // pred_fallthru
        _
      // Predicated region
      $region45: #{tpu_custom_call.1} parent=11 // pred_check
        %p410 = pneg %p301
      $region46: #{tpu_custom_call.1} parent=11 // pred_check_branch
        %412 = sbr.rel (%p410) target = $region48
      $region47: #{tpu_custom_call.1} parent=11 // pred_region
        _
      $region48: #{tpu_custom_call.1} parent=11 // pred_fallthru
        _
      // Predicated region
      $region49: #{tpu_custom_call.1} parent=11 // pred_check
        %p413 = pneg %p322
      $region50: #{tpu_custom_call.1} parent=11 // pred_check_branch
        %415 = sbr.rel (%p413) target = $region52
      $region51: #{tpu_custom_call.1} parent=11 // pred_region
        _
      $region52: #{tpu_custom_call.1} parent=11 // pred_fallthru
        _
      // Predicated region
      $region53: #{tpu_custom_call.1} parent=11 // pred_check
        %p416 = pneg %p343
      $region54: #{tpu_custom_call.1} parent=11 // pred_check_branch
        %418 = sbr.rel (%p416) target = $region56
      $region55: #{tpu_custom_call.1} parent=11 // pred_region
        _
      $region56: #{tpu_custom_call.1} parent=11 // pred_fallthru
        _
    $region12: #{tpu_custom_call.1} parent=5 // pred_fallthru
      _
    %p419 = scmp.lt.s32.totalorder %s20, 2
    // Predicated region
    $region57: #{tpu_custom_call.1} parent=5 // pred_check
      %p420 = pneg %p419
    $region58: #{tpu_custom_call.1} parent=5 // pred_check_branch
      %422 = sbr.rel (%p420) target = $region60
    $region59: #{tpu_custom_call.1} parent=5 // pred_region
      // Predicated region
      $region61: #{tpu_custom_call.1} parent=59 // pred_check
        %p423 = pneg %p54
      $region62: #{tpu_custom_call.1} parent=59 // pred_check_branch
        %425 = sbr.rel (%p423) target = $region64
      $region63: #{tpu_custom_call.1} parent=59 // pred_region
        %s426 = smul.u32 16, %s28
        %p427 = scmp.lt.s32.totalorder %s27, 1
        %s428 = scalar_select %p427, %s27, 1
        %p429 = scmp.lt.s32.totalorder %s426, 15
        %s430 = scalar_select %p429, %s426, 15
        %s431 = smul.addr %s428, 16
        %s432 = sadd.s32 %s430, %s431
        %s433 = smul.addr %s432, 8
        %s434 = scalar_lea.vmem %s0, %s433
        %s435 = smul.u32 16, %s28
      $region64: #{tpu_custom_call.1} parent=59 // pred_fallthru
        _
      // Predicated region
      $region65: #{tpu_custom_call.1} parent=59 // pred_check
        %p436 = pneg %p80
      $region66: #{tpu_custom_call.1} parent=59 // pred_check_branch
        %438 = sbr.rel (%p436) target = $region68
      $region67: #{tpu_custom_call.1} parent=59 // pred_region
        %p439 = scmp.lt.s32.totalorder %s27, 1
        %s440 = scalar_select %p439, %s27, 1
        %s441 = smul.addr %s440, 4
        %s442 = scalar_lea.vmem %s1, %s441
      $region68: #{tpu_custom_call.1} parent=59 // pred_fallthru
        _
      // Predicated region
      $region69: #{tpu_custom_call.1} parent=59 // pred_check
        %p443 = pneg %p106
      $region70: #{tpu_custom_call.1} parent=59 // pred_check_branch
        %445 = sbr.rel (%p443) target = $region72
      $region71: #{tpu_custom_call.1} parent=59 // pred_region
        %p446 = scmp.lt.s32.totalorder %s27, 1
        %s447 = scalar_select %p446, %s27, 1
        %s448 = smul.addr %s447, 16
        %s449 = smul.addr %s448, 8
        %s450 = scalar_lea.vmem %s2, %s449
      $region72: #{tpu_custom_call.1} parent=59 // pred_fallthru
        _
    $region60: #{tpu_custom_call.1} parent=5 // pred_fallthru
      _
    %p451 = scmp.le.s32.totalorder 1, %s20
    %p452 = scmp.lt.s32.totalorder %s20, 3
    %p453 = pnand %p451, %p452
    %p454 = pneg %p453
    // Predicated region
    $region73: #{tpu_custom_call.1} parent=5 // pred_check
      _
    $region74: #{tpu_custom_call.1} parent=5 // pred_check_branch
      %456 = sbr.rel (%p453) target = $region76
    $region75: #{tpu_custom_call.1} parent=5 // pred_region
      %s457 = ssub.s32 %s20, 1
      %s458 = smul.u32 16, %s30
      %p459 = scmp.lt.s32.totalorder %s29, 1
      %s460 = scalar_select %p459, %s29, 1
      %p461 = scmp.lt.s32.totalorder %s458, 15
      %s462 = scalar_select %p461, %s458, 15
      %s463 = smul.addr %s460, 16
      %s464 = sadd.s32 %s462, %s463
      %s465 = smul.addr %s464, 8
      %s466 = scalar_lea.vmem %s0, %s465
      %p467 = pneg %p60
      %p468 = pneg %p57
      %p469 = scmp.lt.s32.totalorder %s29, 1
      %s470 = scalar_select %p469, %s29, 1
      %s471 = smul.addr %s470, 4
      %s472 = scalar_lea.vmem %s1, %s471
      %p473 = pneg %p86
      %p474 = pneg %p83
      %p475 = scmp.lt.s32.totalorder %s29, 1
      %s476 = scalar_select %p475, %s29, 1
      %s477 = smul.addr %s476, 16
      %s478 = smul.addr %s477, 8
      %s479 = scalar_lea.vmem %s2, %s478
      %p480 = pneg %p112
      %p481 = pneg %p109
      %p482 = pneg %p133
      %p483 = pneg %p130
      %p484 = pneg %p154
      %p485 = pneg %p151
      %p486 = pneg %p175
      %p487 = pneg %p172
      %p488 = pneg %p196
      %p489 = pneg %p193
      %p490 = pneg %p217
      %p491 = pneg %p214
      %p492 = pneg %p238
      %p493 = pneg %p235
      %p494 = pneg %p259
      %p495 = pneg %p256
      %p496 = pneg %p280
      %p497 = pneg %p277
      %p498 = pneg %p301
      %p499 = pneg %p298
      %p500 = pneg %p322
      %p501 = pneg %p319
      %p502 = pneg %p343
      %p503 = pneg %p340
      %p504 = pneg %p371
      %p505 = pneg %p368
      %s506 = smul.u32 16, %s30
      %p507 = scmp.lt.s32.totalorder %s29, 1
      %s508 = scalar_select %p507, %s29, 1
      %p509 = scmp.lt.s32.totalorder %s506, 15
      %s510 = scalar_select %p509, %s506, 15
      %s511 = smul.addr %s508, 16
      %s512 = sadd.s32 %s510, %s511
      %s513 = smul.addr %s512, 8
      %s514 = scalar_lea.vmem %s14, %s513
      %s515 = smul.u32 16, %s30
      %p516 = scmp.lt.s32.totalorder %s29, 1
      %s517 = scalar_select %p516, %s29, 1
      %p518 = scmp.lt.s32.totalorder %s515, 15
      %s519 = scalar_select %p518, %s515, 15
      %s520 = smul.addr %s517, 16
      %s521 = sadd.s32 %s519, %s520
      %s522 = smul.addr %s521, 8
      %s523 = scalar_lea.vmem %s0, %s522
      %s524 = smul.u32 16, %s30
      %p525 = scmp.lt.s32.totalorder %s29, 1
      %s526 = scalar_select %p525, %s29, 1
      %s527 = smul.addr %s526, 4
      %s528 = scalar_lea.vmem %s1, %s527
      %p529 = scmp.lt.s32.totalorder %s29, 1
      %s530 = scalar_select %p529, %s29, 1
      %s531 = smul.addr %s530, 16
      %s532 = smul.addr %s531, 8
      %s533 = scalar_lea.vmem %s2, %s532
      %s534 = smul.u32 16, %s30
      %p535 = scmp.lt.s32.totalorder %s29, 1
      %s536 = scalar_select %p535, %s29, 1
      %p537 = scmp.lt.s32.totalorder %s534, 15
      %s538 = scalar_select %p537, %s534, 15
      %s539 = smul.addr %s536, 16
      %s540 = sadd.s32 %s538, %s539
      %s541 = smul.addr %s540, 8
      %s542 = scalar_lea.vmem %s14, %s541
      %s543 = smul.u32 16, %s30
      %v544 = vld [vmem:[%s523] sm:$0xff]
      %v545 = vld [vmem:[%s523 + $0x8] sm:$0xff]
      %v546 = vld [vmem:[%s523 + $0x10] sm:$0xff]
      %v547 = vld [vmem:[%s523 + $0x18] sm:$0xff]
      %v548 = vld [vmem:[%s523 + $0x20] sm:$0xff]
      %v549 = vld [vmem:[%s523 + $0x28] sm:$0xff]
      %v550 = vld [vmem:[%s523 + $0x30] sm:$0xff]
      %v551 = vld [vmem:[%s523 + $0x38] sm:$0xff]
      %v552 = vld [vmem:[%s523 + $0x40] sm:$0xff]
      %v553 = vld [vmem:[%s523 + $0x48] sm:$0xff]
      %v554 = vld [vmem:[%s523 + $0x50] sm:$0xff]
      %v555 = vld [vmem:[%s523 + $0x58] sm:$0xff]
      %v556 = vld [vmem:[%s523 + $0x60] sm:$0xff]
      %v557 = vld [vmem:[%s523 + $0x68] sm:$0xff]
      %v558 = vld [vmem:[%s523 + $0x70] sm:$0xff]
      %v559 = vld [vmem:[%s523 + $0x78] sm:$0xff]
      %v560 = vld [vmem:[%s528] sm:$0xf]
      %v561 = vld [vmem:[%s533] sm:$0xff]
      %v562 = vld [vmem:[%s533 + $0x8] sm:$0xff]
      %v563 = vld [vmem:[%s533 + $0x10] sm:$0xff]
      %v564 = vld [vmem:[%s533 + $0x18] sm:$0xff]
      %v565 = vld [vmem:[%s533 + $0x20] sm:$0xff]
      %v566 = vld [vmem:[%s533 + $0x28] sm:$0xff]
      %v567 = vld [vmem:[%s533 + $0x30] sm:$0xff]
      %v568 = vld [vmem:[%s533 + $0x38] sm:$0xff]
      %v569 = vld [vmem:[%s533 + $0x40] sm:$0xff]
      %v570 = vld [vmem:[%s533 + $0x48] sm:$0xff]
      %v571 = vld [vmem:[%s533 + $0x50] sm:$0xff]
      %v572 = vld [vmem:[%s533 + $0x58] sm:$0xff]
      %v573 = vld [vmem:[%s533 + $0x60] sm:$0xff]
      %v574 = vld [vmem:[%s533 + $0x68] sm:$0xff]
      %v575 = vld [vmem:[%s533 + $0x70] sm:$0xff]
      %v576 = vld [vmem:[%s533 + $0x78] sm:$0xff]
      %578 = vset.pattern.permute.xlu0 1
      %579 = vperm.xlu0 %578, %v544
      %v580 = vpop.permute.xlu0 %579
      %583 = vset.pattern.permute.xlu0 1
      %584 = vperm.xlu0 %583, %v545
      %v585 = vpop.permute.xlu0 %584
      %588 = vset.pattern.permute.xlu0 1
      %589 = vperm.xlu0 %588, %v546
      %v590 = vpop.permute.xlu0 %589
      %593 = vset.pattern.permute.xlu0 1
      %594 = vperm.xlu0 %593, %v547
      %v595 = vpop.permute.xlu0 %594
      %598 = vset.pattern.permute.xlu0 1
      %599 = vperm.xlu0 %598, %v548
      %v600 = vpop.permute.xlu0 %599
      %603 = vset.pattern.permute.xlu0 1
      %604 = vperm.xlu0 %603, %v549
      %v605 = vpop.permute.xlu0 %604
      %608 = vset.pattern.permute.xlu0 1
      %609 = vperm.xlu0 %608, %v550
      %v610 = vpop.permute.xlu0 %609
      %613 = vset.pattern.permute.xlu0 1
      %614 = vperm.xlu0 %613, %v551
      %v615 = vpop.permute.xlu0 %614
      %618 = vset.pattern.permute.xlu0 1
      %619 = vperm.xlu0 %618, %v552
      %v620 = vpop.permute.xlu0 %619
      %623 = vset.pattern.permute.xlu0 1
      %624 = vperm.xlu0 %623, %v553
      %v625 = vpop.permute.xlu0 %624
      %628 = vset.pattern.permute.xlu0 1
      %629 = vperm.xlu0 %628, %v554
      %v630 = vpop.permute.xlu0 %629
      %633 = vset.pattern.permute.xlu0 1
      %634 = vperm.xlu0 %633, %v555
      %v635 = vpop.permute.xlu0 %634
      %638 = vset.pattern.permute.xlu0 1
      %639 = vperm.xlu0 %638, %v556
      %v640 = vpop.permute.xlu0 %639
      %643 = vset.pattern.permute.xlu0 1
      %644 = vperm.xlu0 %643, %v557
      %v645 = vpop.permute.xlu0 %644
      %648 = vset.pattern.permute.xlu0 1
      %649 = vperm.xlu0 %648, %v558
      %v650 = vpop.permute.xlu0 %649
      %653 = vset.pattern.permute.xlu0 1
      %654 = vperm.xlu0 %653, %v559
      %v655 = vpop.permute.xlu0 %654
      %v657 = vperm.slane %v560, 1
      %v658 = vsub.f32 %v580, %v657
      %v659 = vsub.f32 %v585, %v657
      %v660 = vsub.f32 %v590, %v657
      %v661 = vsub.f32 %v595, %v657
      %v662 = vsub.f32 %v600, %v657
      %v663 = vsub.f32 %v605, %v657
      %v664 = vsub.f32 %v610, %v657
      %v665 = vsub.f32 %v615, %v657
      %v666 = vsub.f32 %v620, %v657
      %v667 = vsub.f32 %v625, %v657
      %v668 = vsub.f32 %v630, %v657
      %v669 = vsub.f32 %v635, %v657
      %v670 = vsub.f32 %v640, %v657
      %v671 = vsub.f32 %v645, %v657
      %v672 = vsub.f32 %v650, %v657
      %v673 = vsub.f32 %v655, %v657
      %674 = vset.pattern.permute.xlu0 2
      %675 = vperm.xlu0 %674, %v544
      %v676 = vpop.permute.xlu0 %675
      %678 = vset.pattern.permute.xlu0 2
      %679 = vperm.xlu0 %678, %v545
      %v680 = vpop.permute.xlu0 %679
      %682 = vset.pattern.permute.xlu0 2
      %683 = vperm.xlu0 %682, %v546
      %v684 = vpop.permute.xlu0 %683
      %686 = vset.pattern.permute.xlu0 2
      %687 = vperm.xlu0 %686, %v547
      %v688 = vpop.permute.xlu0 %687
      %690 = vset.pattern.permute.xlu0 2
      %691 = vperm.xlu0 %690, %v548
      %v692 = vpop.permute.xlu0 %691
      %694 = vset.pattern.permute.xlu0 2
      %695 = vperm.xlu0 %694, %v549
      %v696 = vpop.permute.xlu0 %695
      %698 = vset.pattern.permute.xlu0 2
      %699 = vperm.xlu0 %698, %v550
      %v700 = vpop.permute.xlu0 %699
      %702 = vset.pattern.permute.xlu0 2
      %703 = vperm.xlu0 %702, %v551
      %v704 = vpop.permute.xlu0 %703
      %706 = vset.pattern.permute.xlu0 2
      %707 = vperm.xlu0 %706, %v552
      %v708 = vpop.permute.xlu0 %707
      %710 = vset.pattern.permute.xlu0 2
      %711 = vperm.xlu0 %710, %v553
      %v712 = vpop.permute.xlu0 %711
      %714 = vset.pattern.permute.xlu0 2
      %715 = vperm.xlu0 %714, %v554
      %v716 = vpop.permute.xlu0 %715
      %718 = vset.pattern.permute.xlu0 2
      %719 = vperm.xlu0 %718, %v555
      %v720 = vpop.permute.xlu0 %719
      %722 = vset.pattern.permute.xlu0 2
      %723 = vperm.xlu0 %722, %v556
      %v724 = vpop.permute.xlu0 %723
      %726 = vset.pattern.permute.xlu0 2
      %727 = vperm.xlu0 %726, %v557
      %v728 = vpop.permute.xlu0 %727
      %730 = vset.pattern.permute.xlu0 2
      %731 = vperm.xlu0 %730, %v558
      %v732 = vpop.permute.xlu0 %731
      %734 = vset.pattern.permute.xlu0 2
      %735 = vperm.xlu0 %734, %v559
      %v736 = vpop.permute.xlu0 %735
      %v738 = vperm.slane %v560, 2
      %v739 = vsub.f32 %v676, %v738
      %v740 = vsub.f32 %v680, %v738
      %v741 = vsub.f32 %v684, %v738
      %v742 = vsub.f32 %v688, %v738
      %v743 = vsub.f32 %v692, %v738
      %v744 = vsub.f32 %v696, %v738
      %v745 = vsub.f32 %v700, %v738
      %v746 = vsub.f32 %v704, %v738
      %v747 = vsub.f32 %v708, %v738
      %v748 = vsub.f32 %v712, %v738
      %v749 = vsub.f32 %v716, %v738
      %v750 = vsub.f32 %v720, %v738
      %v751 = vsub.f32 %v724, %v738
      %v752 = vsub.f32 %v728, %v738
      %v753 = vsub.f32 %v732, %v738
      %v754 = vsub.f32 %v736, %v738
      %v755 = vmul.f32 %v658, %v658
      %v756 = vmul.f32 %v659, %v659
      %v757 = vmul.f32 %v660, %v660
      %v758 = vmul.f32 %v661, %v661
      %v759 = vmul.f32 %v662, %v662
      %v760 = vmul.f32 %v663, %v663
      %v761 = vmul.f32 %v664, %v664
      %v762 = vmul.f32 %v665, %v665
      %v763 = vmul.f32 %v666, %v666
      %v764 = vmul.f32 %v667, %v667
      %v765 = vmul.f32 %v668, %v668
      %v766 = vmul.f32 %v669, %v669
      %v767 = vmul.f32 %v670, %v670
      %v768 = vmul.f32 %v671, %v671
      %v769 = vmul.f32 %v672, %v672
      %v770 = vmul.f32 %v673, %v673
      %v771 = vmul.f32 %v739, %v739
      %v772 = vmul.f32 %v740, %v740
      %v773 = vmul.f32 %v741, %v741
      %v774 = vmul.f32 %v742, %v742
      %v775 = vmul.f32 %v743, %v743
      %v776 = vmul.f32 %v744, %v744
      %v777 = vmul.f32 %v745, %v745
      %v778 = vmul.f32 %v746, %v746
      %v779 = vmul.f32 %v747, %v747
      %v780 = vmul.f32 %v748, %v748
      %v781 = vmul.f32 %v749, %v749
      %v782 = vmul.f32 %v750, %v750
      %v783 = vmul.f32 %v751, %v751
      %v784 = vmul.f32 %v752, %v752
      %v785 = vmul.f32 %v753, %v753
      %v786 = vmul.f32 %v754, %v754
      %v787 = vadd.f32 %v755, %v771
      %v788 = vadd.f32 %v756, %v772
      %v789 = vadd.f32 %v757, %v773
      %v790 = vadd.f32 %v758, %v774
      %v791 = vadd.f32 %v759, %v775
      %v792 = vadd.f32 %v760, %v776
      %v793 = vadd.f32 %v761, %v777
      %v794 = vadd.f32 %v762, %v778
      %v795 = vadd.f32 %v763, %v779
      %v796 = vadd.f32 %v764, %v780
      %v797 = vadd.f32 %v765, %v781
      %v798 = vadd.f32 %v766, %v782
      %v799 = vadd.f32 %v767, %v783
      %v800 = vadd.f32 %v768, %v784
      %v801 = vadd.f32 %v769, %v785
      %v802 = vadd.f32 %v770, %v786
      %vm803 = vcmp.lt.f32.partialorder %v787, 0.09765625
      %vm804 = vcmp.lt.f32.partialorder %v788, 0.09765625
      %vm805 = vcmp.lt.f32.partialorder %v789, 0.09765625
      %vm806 = vcmp.lt.f32.partialorder %v790, 0.09765625
      %vm807 = vcmp.lt.f32.partialorder %v791, 0.09765625
      %vm808 = vcmp.lt.f32.partialorder %v792, 0.09765625
      %vm809 = vcmp.lt.f32.partialorder %v793, 0.09765625
      %vm810 = vcmp.lt.f32.partialorder %v794, 0.09765625
      %vm811 = vcmp.lt.f32.partialorder %v795, 0.09765625
      %vm812 = vcmp.lt.f32.partialorder %v796, 0.09765625
      %vm813 = vcmp.lt.f32.partialorder %v797, 0.09765625
      %vm814 = vcmp.lt.f32.partialorder %v798, 0.09765625
      %vm815 = vcmp.lt.f32.partialorder %v799, 0.09765625
      %vm816 = vcmp.lt.f32.partialorder %v800, 0.09765625
      %vm817 = vcmp.lt.f32.partialorder %v801, 0.09765625
      %vm818 = vcmp.lt.f32.partialorder %v802, 0.09765625
      %v819 = vsel %vm803, 1, 0
      %v820 = vsel %vm804, 1, 0
      %v821 = vsel %vm805, 1, 0
      %v822 = vsel %vm806, 1, 0
      %v823 = vsel %vm807, 1, 0
      %v824 = vsel %vm808, 1, 0
      %v825 = vsel %vm809, 1, 0
      %v826 = vsel %vm810, 1, 0
      %v827 = vsel %vm811, 1, 0
      %v828 = vsel %vm812, 1, 0
      %v829 = vsel %vm813, 1, 0
      %v830 = vsel %vm814, 1, 0
      %v831 = vsel %vm815, 1, 0
      %v832 = vsel %vm816, 1, 0
      %v833 = vsel %vm817, 1, 0
      %v834 = vsel %vm818, 1, 0
      %v835 = vcvt.s32.f32 %v819
      %v836 = vcvt.s32.f32 %v820
      %v837 = vcvt.s32.f32 %v821
      %v838 = vcvt.s32.f32 %v822
      %v839 = vcvt.s32.f32 %v823
      %v840 = vcvt.s32.f32 %v824
      %v841 = vcvt.s32.f32 %v825
      %v842 = vcvt.s32.f32 %v826
      %v843 = vcvt.s32.f32 %v827
      %v844 = vcvt.s32.f32 %v828
      %v845 = vcvt.s32.f32 %v829
      %v846 = vcvt.s32.f32 %v830
      %v847 = vcvt.s32.f32 %v831
      %v848 = vcvt.s32.f32 %v832
      %v849 = vcvt.s32.f32 %v833
      %v850 = vcvt.s32.f32 %v834
      %v851 = vpack.c.bf16 %v836, %v835
      %v852 = vpack.c.bf16 %v838, %v837
      %v853 = vpack.c.bf16 %v840, %v839
      %v854 = vpack.c.bf16 %v842, %v841
      %v855 = vpack.c.bf16 %v844, %v843
      %v856 = vpack.c.bf16 %v846, %v845
      %v857 = vpack.c.bf16 %v848, %v847
      %v858 = vpack.c.bf16 %v850, %v849
      %v859 = vld [vmem:[%s3] sm:$0xf]
      %v860 = vld [vmem:[%s3 + $0x4] sm:$0xf]
      %v861 = vld [vmem:[%s3 + $0x8] sm:$0xf]
      %v862 = vld [vmem:[%s3 + $0xc] sm:$0xf]
      %v863 = vld [vmem:[%s3 + $0x10] sm:$0xf]
      %v864 = vld [vmem:[%s3 + $0x14] sm:$0xf]
      %v865 = vld [vmem:[%s3 + $0x18] sm:$0xf]
      %v866 = vld [vmem:[%s3 + $0x1c] sm:$0xf]
      %v867 = vld [vmem:[%s3 + $0x20] sm:$0xf]
      %v868 = vld [vmem:[%s3 + $0x24] sm:$0xf]
      %v869 = vld [vmem:[%s3 + $0x28] sm:$0xf]
      %v870 = vld [vmem:[%s3 + $0x2c] sm:$0xf]
      %v871 = vld [vmem:[%s3 + $0x30] sm:$0xf]
      %v872 = vld [vmem:[%s3 + $0x34] sm:$0xf]
      %v873 = vld [vmem:[%s3 + $0x38] sm:$0xf]
      %v874 = vld [vmem:[%s3 + $0x3c] sm:$0xf]
      %v891 = vunpack.c.l.b16 %v859
      %v892 = vunpack.c.l.b16 %v860
      %v893 = vunpack.c.l.b16 %v861
      %v894 = vunpack.c.l.b16 %v862
      %v895 = vunpack.c.l.b16 %v863
      %v896 = vunpack.c.l.b16 %v864
      %v897 = vunpack.c.l.b16 %v865
      %v898 = vunpack.c.l.b16 %v866
      %v899 = vunpack.c.l.b16 %v867
      %v900 = vunpack.c.l.b16 %v868
      %v901 = vunpack.c.l.b16 %v869
      %v902 = vunpack.c.l.b16 %v870
      %v903 = vunpack.c.l.b16 %v871
      %v904 = vunpack.c.l.b16 %v872
      %v905 = vunpack.c.l.b16 %v873
      %v906 = vunpack.c.l.b16 %v874
      %v907 = vpack.c.b16 %v892, %v891
      %v908 = vpack.c.b16 %v894, %v893
      %v909 = vpack.c.b16 %v896, %v895
      %v910 = vpack.c.b16 %v898, %v897
      %v911 = vpack.c.b16 %v900, %v899
      %v912 = vpack.c.b16 %v902, %v901
      %v913 = vpack.c.b16 %v904, %v903
      %v914 = vpack.c.b16 %v906, %v905
      %923 = vmatpush.bf16.msra.mxu0 %v914
      %924 = vmatpush.bf16.msra.mxu0 %v913
      %925 = vmatpush.bf16.msra.mxu0 %v912
      %926 = vmatpush.bf16.msra.mxu0 %v911
      %927 = vmatpush.bf16.msra.mxu0 %v910
      %928 = vmatpush.bf16.msra.mxu0 %v909
      %929 = vmatpush.bf16.msra.mxu0 %v908
      %930 = vmatpush.bf16.msra.mxu0 %v907
      %931 = vmatmul.bf16.gmra.mxu0 %v851
      %v932 = vpop.f32.mrf.mxu0
      %v933 = vadd.f32 0.0, %v932
      %v934 = vpop.f32.mrf.mxu0
      %v935 = vadd.f32 0.0, %v934
      %936 = vmatmul.bf16.gmra.mxu0 %v852
      %v937 = vpop.f32.mrf.mxu0
      %v938 = vadd.f32 0.0, %v937
      %v939 = vpop.f32.mrf.mxu0
      %v940 = vadd.f32 0.0, %v939
      %941 = vmatmul.bf16.gmra.mxu0 %v853
      %v942 = vpop.f32.mrf.mxu0
      %v943 = vadd.f32 0.0, %v942
      %v944 = vpop.f32.mrf.mxu0
      %v945 = vadd.f32 0.0, %v944
      %946 = vmatmul.bf16.gmra.mxu0 %v854
      %v947 = vpop.f32.mrf.mxu0
      %v948 = vadd.f32 0.0, %v947
      %v949 = vpop.f32.mrf.mxu0
      %v950 = vadd.f32 0.0, %v949
      %951 = vmatmul.bf16.gmra.mxu0 %v855
      %v952 = vpop.f32.mrf.mxu0
      %v953 = vadd.f32 0.0, %v952
      %v954 = vpop.f32.mrf.mxu0
      %v955 = vadd.f32 0.0, %v954
      %956 = vmatmul.bf16.gmra.mxu0 %v856
      %v957 = vpop.f32.mrf.mxu0
      %v958 = vadd.f32 0.0, %v957
      %v959 = vpop.f32.mrf.mxu0
      %v960 = vadd.f32 0.0, %v959
      %961 = vmatmul.bf16.gmra.mxu0 %v857
      %v962 = vpop.f32.mrf.mxu0
      %v963 = vadd.f32 0.0, %v962
      %v964 = vpop.f32.mrf.mxu0
      %v965 = vadd.f32 0.0, %v964
      %966 = vmatmul.bf16.gmra.mxu0 %v858
      %v967 = vpop.f32.mrf.mxu0
      %v968 = vadd.f32 0.0, %v967
      %v969 = vpop.f32.mrf.mxu0
      %v970 = vadd.f32 0.0, %v969
      %971 = vdwg.mxu0
      %v972 = vsel %vm803, %v933, 0.0
      %v973 = vsel %vm804, %v935, 0.0
      %v974 = vsel %vm805, %v938, 0.0
      %v975 = vsel %vm806, %v940, 0.0
      %v976 = vsel %vm807, %v943, 0.0
      %v977 = vsel %vm808, %v945, 0.0
      %v978 = vsel %vm809, %v948, 0.0
      %v979 = vsel %vm810, %v950, 0.0
      %v980 = vsel %vm811, %v953, 0.0
      %v981 = vsel %vm812, %v955, 0.0
      %v982 = vsel %vm813, %v958, 0.0
      %v983 = vsel %vm814, %v960, 0.0
      %v984 = vsel %vm815, %v963, 0.0
      %v985 = vsel %vm816, %v965, 0.0
      %v986 = vsel %vm817, %v968, 0.0
      %v987 = vsel %vm818, %v970, 0.0
      %v988 = vld [vmem:[%s4] sm:$0xff]
      %v989 = vld [vmem:[%s4 + $0x8] sm:$0xff]
      %v990 = vld [vmem:[%s4 + $0x10] sm:$0x3]
      %vm991 = vcmp.eq.f32.partialorder %v972, 1.0
      %vm992 = vcmp.eq.f32.partialorder %v973, 1.0
      %vm993 = vcmp.eq.f32.partialorder %v974, 1.0
      %vm994 = vcmp.eq.f32.partialorder %v975, 1.0
      %vm995 = vcmp.eq.f32.partialorder %v976, 1.0
      %vm996 = vcmp.eq.f32.partialorder %v977, 1.0
      %vm997 = vcmp.eq.f32.partialorder %v978, 1.0
      %vm998 = vcmp.eq.f32.partialorder %v979, 1.0
      %vm999 = vcmp.eq.f32.partialorder %v980, 1.0
      %vm1000 = vcmp.eq.f32.partialorder %v981, 1.0
      %vm1001 = vcmp.eq.f32.partialorder %v982, 1.0
      %vm1002 = vcmp.eq.f32.partialorder %v983, 1.0
      %vm1003 = vcmp.eq.f32.partialorder %v984, 1.0
      %vm1004 = vcmp.eq.f32.partialorder %v985, 1.0
      %vm1005 = vcmp.eq.f32.partialorder %v986, 1.0
      %vm1006 = vcmp.eq.f32.partialorder %v987, 1.0
      %v1007 = vsel %vm991, 1, 0
      %v1008 = vsel %vm992, 1, 0
      %v1009 = vsel %vm993, 1, 0
      %v1010 = vsel %vm994, 1, 0
      %v1011 = vsel %vm995, 1, 0
      %v1012 = vsel %vm996, 1, 0
      %v1013 = vsel %vm997, 1, 0
      %v1014 = vsel %vm998, 1, 0
      %v1015 = vsel %vm999, 1, 0
      %v1016 = vsel %vm1000, 1, 0
      %v1017 = vsel %vm1001, 1, 0
      %v1018 = vsel %vm1002, 1, 0
      %v1019 = vsel %vm1003, 1, 0
      %v1020 = vsel %vm1004, 1, 0
      %v1021 = vsel %vm1005, 1, 0
      %v1022 = vsel %vm1006, 1, 0
      %v1023 = vcvt.s32.f32 %v1007
      %v1024 = vcvt.s32.f32 %v1008
      %v1025 = vcvt.s32.f32 %v1009
      %v1026 = vcvt.s32.f32 %v1010
      %v1027 = vcvt.s32.f32 %v1011
      %v1028 = vcvt.s32.f32 %v1012
      %v1029 = vcvt.s32.f32 %v1013
      %v1030 = vcvt.s32.f32 %v1014
      %v1031 = vcvt.s32.f32 %v1015
      %v1032 = vcvt.s32.f32 %v1016
      %v1033 = vcvt.s32.f32 %v1017
      %v1034 = vcvt.s32.f32 %v1018
      %v1035 = vcvt.s32.f32 %v1019
      %v1036 = vcvt.s32.f32 %v1020
      %v1037 = vcvt.s32.f32 %v1021
      %v1038 = vcvt.s32.f32 %v1022
      %1039 = vmatpush.msra.mxu0 %v576
      %1040 = vmatpush.msra.mxu0 %v575
      %1041 = vmatpush.msra.mxu0 %v574
      %1042 = vmatpush.msra.mxu0 %v573
      %1043 = vmatpush.msra.mxu0 %v572
      %1044 = vmatpush.msra.mxu0 %v571
      %1045 = vmatpush.msra.mxu0 %v570
      %1046 = vmatpush.msra.mxu0 %v569
      %1047 = vmatpush.msra.mxu0 %v568
      %1048 = vmatpush.msra.mxu0 %v567
      %1049 = vmatpush.msra.mxu0 %v566
      %1050 = vmatpush.msra.mxu0 %v565
      %1051 = vmatpush.msra.mxu0 %v564
      %1052 = vmatpush.msra.mxu0 %v563
      %1053 = vmatpush.msra.mxu0 %v562
      %1054 = vmatpush.msra.mxu0 %v561
      %1055 = vmatmul.f32.gmra.mxu0 %v1023
      %v1056 = vpop.f32.mrf.mxu0
      %v1057 = vadd.f32 0.0, %v1056
      %1058 = vmatmul.f32.gmra.mxu0 %v1024
      %v1059 = vpop.f32.mrf.mxu0
      %v1060 = vadd.f32 0.0, %v1059
      %1061 = vmatmul.f32.gmra.mxu0 %v1025
      %v1062 = vpop.f32.mrf.mxu0
      %v1063 = vadd.f32 0.0, %v1062
      %1064 = vmatmul.f32.gmra.mxu0 %v1026
      %v1065 = vpop.f32.mrf.mxu0
      %v1066 = vadd.f32 0.0, %v1065
      %1067 = vmatmul.f32.gmra.mxu0 %v1027
      %v1068 = vpop.f32.mrf.mxu0
      %v1069 = vadd.f32 0.0, %v1068
      %1070 = vmatmul.f32.gmra.mxu0 %v1028
      %v1071 = vpop.f32.mrf.mxu0
      %v1072 = vadd.f32 0.0, %v1071
      %1073 = vmatmul.f32.gmra.mxu0 %v1029
      %v1074 = vpop.f32.mrf.mxu0
      %v1075 = vadd.f32 0.0, %v1074
      %1076 = vmatmul.f32.gmra.mxu0 %v1030
      %v1077 = vpop.f32.mrf.mxu0
      %v1078 = vadd.f32 0.0, %v1077
      %1079 = vmatmul.f32.gmra.mxu0 %v1031
      %v1080 = vpop.f32.mrf.mxu0
      %v1081 = vadd.f32 0.0, %v1080
      %1082 = vmatmul.f32.gmra.mxu0 %v1032
      %v1083 = vpop.f32.mrf.mxu0
      %v1084 = vadd.f32 0.0, %v1083
      %1085 = vmatmul.f32.gmra.mxu0 %v1033
      %v1086 = vpop.f32.mrf.mxu0
      %v1087 = vadd.f32 0.0, %v1086
      %1088 = vmatmul.f32.gmra.mxu0 %v1034
      %v1089 = vpop.f32.mrf.mxu0
      %v1090 = vadd.f32 0.0, %v1089
      %1091 = vmatmul.f32.gmra.mxu0 %v1035
      %v1092 = vpop.f32.mrf.mxu0
      %v1093 = vadd.f32 0.0, %v1092
      %1094 = vmatmul.f32.gmra.mxu0 %v1036
      %v1095 = vpop.f32.mrf.mxu0
      %v1096 = vadd.f32 0.0, %v1095
      %1097 = vmatmul.f32.gmra.mxu0 %v1037
      %v1098 = vpop.f32.mrf.mxu0
      %v1099 = vadd.f32 0.0, %v1098
      %1100 = vmatmul.f32.gmra.mxu0 %v1038
      %v1101 = vpop.f32.mrf.mxu0
      %v1102 = vadd.f32 0.0, %v1101
      %1103 = vdwg.mxu0
      %1105 = vset.pattern.permute.xlu0 0
      %1106 = vperm.xlu0 %1105, %v1057
      %v1107 = vpop.permute.xlu0 %1106
      %1110 = vset.pattern.permute.xlu0 0
      %1111 = vperm.xlu0 %1110, %v1060
      %v1112 = vpop.permute.xlu0 %1111
      %1115 = vset.pattern.permute.xlu0 0
      %1116 = vperm.xlu0 %1115, %v1063
      %v1117 = vpop.permute.xlu0 %1116
      %1120 = vset.pattern.permute.xlu0 0
      %1121 = vperm.xlu0 %1120, %v1066
      %v1122 = vpop.permute.xlu0 %1121
      %1125 = vset.pattern.permute.xlu0 0
      %1126 = vperm.xlu0 %1125, %v1069
      %v1127 = vpop.permute.xlu0 %1126
      %1130 = vset.pattern.permute.xlu0 0
      %1131 = vperm.xlu0 %1130, %v1072
      %v1132 = vpop.permute.xlu0 %1131
      %1135 = vset.pattern.permute.xlu0 0
      %1136 = vperm.xlu0 %1135, %v1075
      %v1137 = vpop.permute.xlu0 %1136
      %1140 = vset.pattern.permute.xlu0 0
      %1141 = vperm.xlu0 %1140, %v1078
      %v1142 = vpop.permute.xlu0 %1141
      %1145 = vset.pattern.permute.xlu0 0
      %1146 = vperm.xlu0 %1145, %v1081
      %v1147 = vpop.permute.xlu0 %1146
      %1150 = vset.pattern.permute.xlu0 0
      %1151 = vperm.xlu0 %1150, %v1084
      %v1152 = vpop.permute.xlu0 %1151
      %1155 = vset.pattern.permute.xlu0 0
      %1156 = vperm.xlu0 %1155, %v1087
      %v1157 = vpop.permute.xlu0 %1156
      %1160 = vset.pattern.permute.xlu0 0
      %1161 = vperm.xlu0 %1160, %v1090
      %v1162 = vpop.permute.xlu0 %1161
      %1165 = vset.pattern.permute.xlu0 0
      %1166 = vperm.xlu0 %1165, %v1093
      %v1167 = vpop.permute.xlu0 %1166
      %1170 = vset.pattern.permute.xlu0 0
      %1171 = vperm.xlu0 %1170, %v1096
      %v1172 = vpop.permute.xlu0 %1171
      %1175 = vset.pattern.permute.xlu0 0
      %1176 = vperm.xlu0 %1175, %v1099
      %v1177 = vpop.permute.xlu0 %1176
      %1180 = vset.pattern.permute.xlu0 0
      %1181 = vperm.xlu0 %1180, %v1102
      %v1182 = vpop.permute.xlu0 %1181
      %v1184 = vmul.f32 %v1107, %v544
      %v1185 = vmul.f32 %v1112, %v545
      %v1186 = vmul.f32 %v1117, %v546
      %v1187 = vmul.f32 %v1122, %v547
      %v1188 = vmul.f32 %v1127, %v548
      %v1189 = vmul.f32 %v1132, %v549
      %v1190 = vmul.f32 %v1137, %v550
      %v1191 = vmul.f32 %v1142, %v551
      %v1192 = vmul.f32 %v1147, %v552
      %v1193 = vmul.f32 %v1152, %v553
      %v1194 = vmul.f32 %v1157, %v554
      %v1195 = vmul.f32 %v1162, %v555
      %v1196 = vmul.f32 %v1167, %v556
      %v1197 = vmul.f32 %v1172, %v557
      %v1198 = vmul.f32 %v1177, %v558
      %v1199 = vmul.f32 %v1182, %v559
      %v1200 = vsub.f32 %v1184, %v1057
      %v1201 = vsub.f32 %v1185, %v1060
      %v1202 = vsub.f32 %v1186, %v1063
      %v1203 = vsub.f32 %v1187, %v1066
      %v1204 = vsub.f32 %v1188, %v1069
      %v1205 = vsub.f32 %v1189, %v1072
      %v1206 = vsub.f32 %v1190, %v1075
      %v1207 = vsub.f32 %v1191, %v1078
      %v1208 = vsub.f32 %v1192, %v1081
      %v1209 = vsub.f32 %v1193, %v1084
      %v1210 = vsub.f32 %v1194, %v1087
      %v1211 = vsub.f32 %v1195, %v1090
      %v1212 = vsub.f32 %v1196, %v1093
      %v1213 = vsub.f32 %v1197, %v1096
      %v1214 = vsub.f32 %v1198, %v1099
      %v1215 = vsub.f32 %v1199, %v1102
      %vm1216 = vcmp.eq.f32.partialorder %v972, 2.0
      %vm1217 = vcmp.eq.f32.partialorder %v973, 2.0
      %vm1218 = vcmp.eq.f32.partialorder %v974, 2.0
      %vm1219 = vcmp.eq.f32.partialorder %v975, 2.0
      %vm1220 = vcmp.eq.f32.partialorder %v976, 2.0
      %vm1221 = vcmp.eq.f32.partialorder %v977, 2.0
      %vm1222 = vcmp.eq.f32.partialorder %v978, 2.0
      %vm1223 = vcmp.eq.f32.partialorder %v979, 2.0
      %vm1224 = vcmp.eq.f32.partialorder %v980, 2.0
      %vm1225 = vcmp.eq.f32.partialorder %v981, 2.0
      %vm1226 = vcmp.eq.f32.partialorder %v982, 2.0
      %vm1227 = vcmp.eq.f32.partialorder %v983, 2.0
      %vm1228 = vcmp.eq.f32.partialorder %v984, 2.0
      %vm1229 = vcmp.eq.f32.partialorder %v985, 2.0
      %vm1230 = vcmp.eq.f32.partialorder %v986, 2.0
      %vm1231 = vcmp.eq.f32.partialorder %v987, 2.0
      %v1232 = vsel %vm1216, 1, 0
      %v1233 = vsel %vm1217, 1, 0
      %v1234 = vsel %vm1218, 1, 0
      %v1235 = vsel %vm1219, 1, 0
      %v1236 = vsel %vm1220, 1, 0
      %v1237 = vsel %vm1221, 1, 0
      %v1238 = vsel %vm1222, 1, 0
      %v1239 = vsel %vm1223, 1, 0
      %v1240 = vsel %vm1224, 1, 0
      %v1241 = vsel %vm1225, 1, 0
      %v1242 = vsel %vm1226, 1, 0
      %v1243 = vsel %vm1227, 1, 0
      %v1244 = vsel %vm1228, 1, 0
      %v1245 = vsel %vm1229, 1, 0
      %v1246 = vsel %vm1230, 1, 0
      %v1247 = vsel %vm1231, 1, 0
      %v1248 = vcvt.s32.f32 %v1232
      %v1249 = vcvt.s32.f32 %v1233
      %v1250 = vcvt.s32.f32 %v1234
      %v1251 = vcvt.s32.f32 %v1235
      %v1252 = vcvt.s32.f32 %v1236
      %v1253 = vcvt.s32.f32 %v1237
      %v1254 = vcvt.s32.f32 %v1238
      %v1255 = vcvt.s32.f32 %v1239
      %v1256 = vcvt.s32.f32 %v1240
      %v1257 = vcvt.s32.f32 %v1241
      %v1258 = vcvt.s32.f32 %v1242
      %v1259 = vcvt.s32.f32 %v1243
      %v1260 = vcvt.s32.f32 %v1244
      %v1261 = vcvt.s32.f32 %v1245
      %v1262 = vcvt.s32.f32 %v1246
      %v1263 = vcvt.s32.f32 %v1247
      %1264 = vmatpush.msra.mxu0 %v576
      %1265 = vmatpush.msra.mxu0 %v575
      %1266 = vmatpush.msra.mxu0 %v574
      %1267 = vmatpush.msra.mxu0 %v573
      %1268 = vmatpush.msra.mxu0 %v572
      %1269 = vmatpush.msra.mxu0 %v571
      %1270 = vmatpush.msra.mxu0 %v570
      %1271 = vmatpush.msra.mxu0 %v569
      %1272 = vmatpush.msra.mxu0 %v568
      %1273 = vmatpush.msra.mxu0 %v567
      %1274 = vmatpush.msra.mxu0 %v566
      %1275 = vmatpush.msra.mxu0 %v565
      %1276 = vmatpush.msra.mxu0 %v564
      %1277 = vmatpush.msra.mxu0 %v563
      %1278 = vmatpush.msra.mxu0 %v562
      %1279 = vmatpush.msra.mxu0 %v561
      %1280 = vmatmul.f32.gmra.mxu0 %v1248
      %v1281 = vpop.f32.mrf.mxu0
      %v1282 = vadd.f32 0.0, %v1281
      %1283 = vmatmul.f32.gmra.mxu0 %v1249
      %v1284 = vpop.f32.mrf.mxu0
      %v1285 = vadd.f32 0.0, %v1284
      %1286 = vmatmul.f32.gmra.mxu0 %v1250
      %v1287 = vpop.f32.mrf.mxu0
      %v1288 = vadd.f32 0.0, %v1287
      %1289 = vmatmul.f32.gmra.mxu0 %v1251
      %v1290 = vpop.f32.mrf.mxu0
      %v1291 = vadd.f32 0.0, %v1290
      %1292 = vmatmul.f32.gmra.mxu0 %v1252
      %v1293 = vpop.f32.mrf.mxu0
      %v1294 = vadd.f32 0.0, %v1293
      %1295 = vmatmul.f32.gmra.mxu0 %v1253
      %v1296 = vpop.f32.mrf.mxu0
      %v1297 = vadd.f32 0.0, %v1296
      %1298 = vmatmul.f32.gmra.mxu0 %v1254
      %v1299 = vpop.f32.mrf.mxu0
      %v1300 = vadd.f32 0.0, %v1299
      %1301 = vmatmul.f32.gmra.mxu0 %v1255
      %v1302 = vpop.f32.mrf.mxu0
      %v1303 = vadd.f32 0.0, %v1302
      %1304 = vmatmul.f32.gmra.mxu0 %v1256
      %v1305 = vpop.f32.mrf.mxu0
      %v1306 = vadd.f32 0.0, %v1305
      %1307 = vmatmul.f32.gmra.mxu0 %v1257
      %v1308 = vpop.f32.mrf.mxu0
      %v1309 = vadd.f32 0.0, %v1308
      %1310 = vmatmul.f32.gmra.mxu0 %v1258
      %v1311 = vpop.f32.mrf.mxu0
      %v1312 = vadd.f32 0.0, %v1311
      %1313 = vmatmul.f32.gmra.mxu0 %v1259
      %v1314 = vpop.f32.mrf.mxu0
      %v1315 = vadd.f32 0.0, %v1314
      %1316 = vmatmul.f32.gmra.mxu0 %v1260
      %v1317 = vpop.f32.mrf.mxu0
      %v1318 = vadd.f32 0.0, %v1317
      %1319 = vmatmul.f32.gmra.mxu0 %v1261
      %v1320 = vpop.f32.mrf.mxu0
      %v1321 = vadd.f32 0.0, %v1320
      %1322 = vmatmul.f32.gmra.mxu0 %v1262
      %v1323 = vpop.f32.mrf.mxu0
      %v1324 = vadd.f32 0.0, %v1323
      %1325 = vmatmul.f32.gmra.mxu0 %v1263
      %v1326 = vpop.f32.mrf.mxu0
      %v1327 = vadd.f32 0.0, %v1326
      %1328 = vdwg.mxu0
      %1330 = vset.pattern.permute.xlu0 0
      %1331 = vperm.xlu0 %1330, %v1282
      %v1332 = vpop.permute.xlu0 %1331
      %1335 = vset.pattern.permute.xlu0 0
      %1336 = vperm.xlu0 %1335, %v1285
      %v1337 = vpop.permute.xlu0 %1336
      %1340 = vset.pattern.permute.xlu0 0
      %1341 = vperm.xlu0 %1340, %v1288
      %v1342 = vpop.permute.xlu0 %1341
      %1345 = vset.pattern.permute.xlu0 0
      %1346 = vperm.xlu0 %1345, %v1291
      %v1347 = vpop.permute.xlu0 %1346
      %1350 = vset.pattern.permute.xlu0 0
      %1351 = vperm.xlu0 %1350, %v1294
      %v1352 = vpop.permute.xlu0 %1351
      %1355 = vset.pattern.permute.xlu0 0
      %1356 = vperm.xlu0 %1355, %v1297
      %v1357 = vpop.permute.xlu0 %1356
      %1360 = vset.pattern.permute.xlu0 0
      %1361 = vperm.xlu0 %1360, %v1300
      %v1362 = vpop.permute.xlu0 %1361
      %1365 = vset.pattern.permute.xlu0 0
      %1366 = vperm.xlu0 %1365, %v1303
      %v1367 = vpop.permute.xlu0 %1366
      %1370 = vset.pattern.permute.xlu0 0
      %1371 = vperm.xlu0 %1370, %v1306
      %v1372 = vpop.permute.xlu0 %1371
      %1375 = vset.pattern.permute.xlu0 0
      %1376 = vperm.xlu0 %1375, %v1309
      %v1377 = vpop.permute.xlu0 %1376
      %1380 = vset.pattern.permute.xlu0 0
      %1381 = vperm.xlu0 %1380, %v1312
      %v1382 = vpop.permute.xlu0 %1381
      %1385 = vset.pattern.permute.xlu0 0
      %1386 = vperm.xlu0 %1385, %v1315
      %v1387 = vpop.permute.xlu0 %1386
      %1390 = vset.pattern.permute.xlu0 0
      %1391 = vperm.xlu0 %1390, %v1318
      %v1392 = vpop.permute.xlu0 %1391
      %1395 = vset.pattern.permute.xlu0 0
      %1396 = vperm.xlu0 %1395, %v1321
      %v1397 = vpop.permute.xlu0 %1396
      %1400 = vset.pattern.permute.xlu0 0
      %1401 = vperm.xlu0 %1400, %v1324
      %v1402 = vpop.permute.xlu0 %1401
      %1405 = vset.pattern.permute.xlu0 0
      %1406 = vperm.xlu0 %1405, %v1327
      %v1407 = vpop.permute.xlu0 %1406
      %v1409 = vmul.f32 %v1332, %v544
      %v1410 = vmul.f32 %v1337, %v545
      %v1411 = vmul.f32 %v1342, %v546
      %v1412 = vmul.f32 %v1347, %v547
      %v1413 = vmul.f32 %v1352, %v548
      %v1414 = vmul.f32 %v1357, %v549
      %v1415 = vmul.f32 %v1362, %v550
      %v1416 = vmul.f32 %v1367, %v551
      %v1417 = vmul.f32 %v1372, %v552
      %v1418 = vmul.f32 %v1377, %v553
      %v1419 = vmul.f32 %v1382, %v554
      %v1420 = vmul.f32 %v1387, %v555
      %v1421 = vmul.f32 %v1392, %v556
      %v1422 = vmul.f32 %v1397, %v557
      %v1423 = vmul.f32 %v1402, %v558
      %v1424 = vmul.f32 %v1407, %v559
      %v1425 = vsub.f32 %v1409, %v1282
      %v1426 = vsub.f32 %v1410, %v1285
      %v1427 = vsub.f32 %v1411, %v1288
      %v1428 = vsub.f32 %v1412, %v1291
      %v1429 = vsub.f32 %v1413, %v1294
      %v1430 = vsub.f32 %v1414, %v1297
      %v1431 = vsub.f32 %v1415, %v1300
      %v1432 = vsub.f32 %v1416, %v1303
      %v1433 = vsub.f32 %v1417, %v1306
      %v1434 = vsub.f32 %v1418, %v1309
      %v1435 = vsub.f32 %v1419, %v1312
      %v1436 = vsub.f32 %v1420, %v1315
      %v1437 = vsub.f32 %v1421, %v1318
      %v1438 = vsub.f32 %v1422, %v1321
      %v1439 = vsub.f32 %v1423, %v1324
      %v1440 = vsub.f32 %v1424, %v1327
      %1457 = vrot.lane.b32.xlu0 %v1425, 127
      %v1458 = vpop.permute.xlu0 %1457
      %1459 = vrot.lane.b32.xlu0 %v1426, 127
      %v1460 = vpop.permute.xlu0 %1459
      %1461 = vrot.lane.b32.xlu0 %v1427, 127
      %v1462 = vpop.permute.xlu0 %1461
      %1463 = vrot.lane.b32.xlu0 %v1428, 127
      %v1464 = vpop.permute.xlu0 %1463
      %1465 = vrot.lane.b32.xlu0 %v1429, 127
      %v1466 = vpop.permute.xlu0 %1465
      %1467 = vrot.lane.b32.xlu0 %v1430, 127
      %v1468 = vpop.permute.xlu0 %1467
      %1469 = vrot.lane.b32.xlu0 %v1431, 127
      %v1470 = vpop.permute.xlu0 %1469
      %1471 = vrot.lane.b32.xlu0 %v1432, 127
      %v1472 = vpop.permute.xlu0 %1471
      %1473 = vrot.lane.b32.xlu0 %v1433, 127
      %v1474 = vpop.permute.xlu0 %1473
      %1475 = vrot.lane.b32.xlu0 %v1434, 127
      %v1476 = vpop.permute.xlu0 %1475
      %1477 = vrot.lane.b32.xlu0 %v1435, 127
      %v1478 = vpop.permute.xlu0 %1477
      %1479 = vrot.lane.b32.xlu0 %v1436, 127
      %v1480 = vpop.permute.xlu0 %1479
      %1481 = vrot.lane.b32.xlu0 %v1437, 127
      %v1482 = vpop.permute.xlu0 %1481
      %1483 = vrot.lane.b32.xlu0 %v1438, 127
      %v1484 = vpop.permute.xlu0 %1483
      %1485 = vrot.lane.b32.xlu0 %v1439, 127
      %v1486 = vpop.permute.xlu0 %1485
      %1487 = vrot.lane.b32.xlu0 %v1440, 127
      %v1488 = vpop.permute.xlu0 %1487
      %v1490 = vrot.slane %v988, 2
      %vm1491 = vcmask 15360
      %v1492 = vsel %vm1491, %v1458, 0
      %v1494 = vsel %vm1491, %v1460, 0
      %v1496 = vsel %vm1491, %v1462, 0
      %v1498 = vsel %vm1491, %v1464, 0
      %v1500 = vsel %vm1491, %v1466, 0
      %v1502 = vsel %vm1491, %v1468, 0
      %v1504 = vsel %vm1491, %v1470, 0
      %v1506 = vsel %vm1491, %v1472, 0
      %v1508 = vsel %vm1491, %v1474, 0
      %v1510 = vsel %vm1491, %v1476, 0
      %v1512 = vsel %vm1491, %v1478, 0
      %v1514 = vsel %vm1491, %v1480, 0
      %v1516 = vsel %vm1491, %v1482, 0
      %v1518 = vsel %vm1491, %v1484, 0
      %v1520 = vsel %vm1491, %v1486, 0
      %v1522 = vsel %vm1491, %v1488, 0
      %vm1524 = vcmask 1041408
      %v1525 = vsel %vm1524, %v1490, 0
      %1527 = vmatpush.msra.mxu0 0.0
      %1528 = vmatpush.msra.mxu0 0.0
      %1529 = vmatpush.msra.mxu0 0.0
      %1530 = vmatpush.msra.mxu0 0.0
      %1531 = vmatpush.msra.mxu0 0.0
      %1532 = vmatpush.msra.mxu0 0.0
      %1533 = vmatpush.msra.mxu0 0.0
      %1534 = vmatpush.msra.mxu0 0.0
      %1535 = vmatpush.msra.mxu0 0.0
      %1536 = vmatpush.msra.mxu0 0.0
      %1537 = vmatpush.msra.mxu0 0.0
      %1538 = vmatpush.msra.mxu0 0.0
      %1539 = vmatpush.msra.mxu0 0.0
      %1540 = vmatpush.msra.mxu0 0.0
      %1541 = vmatpush.msra.mxu0 0.0
      %1542 = vmatpush.msra.mxu0 %v1525
      %1543 = vmatmul.f32.gmra.mxu0 %v1492
      %v1544 = vpop.f32.mrf.mxu0
      %v1545 = vadd.f32 0.0, %v1544
      %1546 = vmatmul.f32.gmra.mxu0 %v1494
      %v1547 = vpop.f32.mrf.mxu0
      %v1548 = vadd.f32 0.0, %v1547
      %1549 = vmatmul.f32.gmra.mxu0 %v1496
      %v1550 = vpop.f32.mrf.mxu0
      %v1551 = vadd.f32 0.0, %v1550
      %1552 = vmatmul.f32.gmra.mxu0 %v1498
      %v1553 = vpop.f32.mrf.mxu0
      %v1554 = vadd.f32 0.0, %v1553
      %1555 = vmatmul.f32.gmra.mxu0 %v1500
      %v1556 = vpop.f32.mrf.mxu0
      %v1557 = vadd.f32 0.0, %v1556
      %1558 = vmatmul.f32.gmra.mxu0 %v1502
      %v1559 = vpop.f32.mrf.mxu0
      %v1560 = vadd.f32 0.0, %v1559
      %1561 = vmatmul.f32.gmra.mxu0 %v1504
      %v1562 = vpop.f32.mrf.mxu0
      %v1563 = vadd.f32 0.0, %v1562
      %1564 = vmatmul.f32.gmra.mxu0 %v1506
      %v1565 = vpop.f32.mrf.mxu0
      %v1566 = vadd.f32 0.0, %v1565
      %1567 = vmatmul.f32.gmra.mxu0 %v1508
      %v1568 = vpop.f32.mrf.mxu0
      %v1569 = vadd.f32 0.0, %v1568
      %1570 = vmatmul.f32.gmra.mxu0 %v1510
      %v1571 = vpop.f32.mrf.mxu0
      %v1572 = vadd.f32 0.0, %v1571
      %1573 = vmatmul.f32.gmra.mxu0 %v1512
      %v1574 = vpop.f32.mrf.mxu0
      %v1575 = vadd.f32 0.0, %v1574
      %1576 = vmatmul.f32.gmra.mxu0 %v1514
      %v1577 = vpop.f32.mrf.mxu0
      %v1578 = vadd.f32 0.0, %v1577
      %1579 = vmatmul.f32.gmra.mxu0 %v1516
      %v1580 = vpop.f32.mrf.mxu0
      %v1581 = vadd.f32 0.0, %v1580
      %1582 = vmatmul.f32.gmra.mxu0 %v1518
      %v1583 = vpop.f32.mrf.mxu0
      %v1584 = vadd.f32 0.0, %v1583
      %1585 = vmatmul.f32.gmra.mxu0 %v1520
      %v1586 = vpop.f32.mrf.mxu0
      %v1587 = vadd.f32 0.0, %v1586
      %1588 = vmatmul.f32.gmra.mxu0 %v1522
      %v1589 = vpop.f32.mrf.mxu0
      %v1590 = vadd.f32 0.0, %v1589
      %1591 = vdwg.mxu0
      %1608 = vrot.lane.b32.xlu0 %v1200, 127
      %v1609 = vpop.permute.xlu0 %1608
      %1610 = vrot.lane.b32.xlu0 %v1201, 127
      %v1611 = vpop.permute.xlu0 %1610
      %1612 = vrot.lane.b32.xlu0 %v1202, 127
      %v1613 = vpop.permute.xlu0 %1612
      %1614 = vrot.lane.b32.xlu0 %v1203, 127
      %v1615 = vpop.permute.xlu0 %1614
      %1616 = vrot.lane.b32.xlu0 %v1204, 127
      %v1617 = vpop.permute.xlu0 %1616
      %1618 = vrot.lane.b32.xlu0 %v1205, 127
      %v1619 = vpop.permute.xlu0 %1618
      %1620 = vrot.lane.b32.xlu0 %v1206, 127
      %v1621 = vpop.permute.xlu0 %1620
      %1622 = vrot.lane.b32.xlu0 %v1207, 127
      %v1623 = vpop.permute.xlu0 %1622
      %1624 = vrot.lane.b32.xlu0 %v1208, 127
      %v1625 = vpop.permute.xlu0 %1624
      %1626 = vrot.lane.b32.xlu0 %v1209, 127
      %v1627 = vpop.permute.xlu0 %1626
      %1628 = vrot.lane.b32.xlu0 %v1210, 127
      %v1629 = vpop.permute.xlu0 %1628
      %1630 = vrot.lane.b32.xlu0 %v1211, 127
      %v1631 = vpop.permute.xlu0 %1630
      %1632 = vrot.lane.b32.xlu0 %v1212, 127
      %v1633 = vpop.permute.xlu0 %1632
      %1634 = vrot.lane.b32.xlu0 %v1213, 127
      %v1635 = vpop.permute.xlu0 %1634
      %1636 = vrot.lane.b32.xlu0 %v1214, 127
      %v1637 = vpop.permute.xlu0 %1636
      %1638 = vrot.lane.b32.xlu0 %v1215, 127
      %v1639 = vpop.permute.xlu0 %1638
      %v1640 = vsel %vm1491, %v1609, 0
      %v1642 = vsel %vm1491, %v1611, 0
      %v1644 = vsel %vm1491, %v1613, 0
      %v1646 = vsel %vm1491, %v1615, 0
      %v1648 = vsel %vm1491, %v1617, 0
      %v1650 = vsel %vm1491, %v1619, 0
      %v1652 = vsel %vm1491, %v1621, 0
      %v1654 = vsel %vm1491, %v1623, 0
      %v1656 = vsel %vm1491, %v1625, 0
      %v1658 = vsel %vm1491, %v1627, 0
      %v1660 = vsel %vm1491, %v1629, 0
      %v1662 = vsel %vm1491, %v1631, 0
      %v1664 = vsel %vm1491, %v1633, 0
      %v1666 = vsel %vm1491, %v1635, 0
      %v1668 = vsel %vm1491, %v1637, 0
      %v1670 = vsel %vm1491, %v1639, 0
      %v1672 = vsel %vm1524, %v988, 0
      %1674 = vmatpush.msra.mxu0 0.0
      %1675 = vmatpush.msra.mxu0 0.0
      %1676 = vmatpush.msra.mxu0 0.0
      %1677 = vmatpush.msra.mxu0 0.0
      %1678 = vmatpush.msra.mxu0 0.0
      %1679 = vmatpush.msra.mxu0 0.0
      %1680 = vmatpush.msra.mxu0 0.0
      %1681 = vmatpush.msra.mxu0 0.0
      %1682 = vmatpush.msra.mxu0 0.0
      %1683 = vmatpush.msra.mxu0 0.0
      %1684 = vmatpush.msra.mxu0 0.0
      %1685 = vmatpush.msra.mxu0 0.0
      %1686 = vmatpush.msra.mxu0 0.0
      %1687 = vmatpush.msra.mxu0 0.0
      %1688 = vmatpush.msra.mxu0 0.0
      %1689 = vmatpush.msra.mxu0 %v1672
      %1690 = vmatmul.f32.gmra.mxu0 %v1640
      %v1691 = vpop.f32.mrf.mxu0
      %v1692 = vadd.f32 %v1545, %v1691
      %1693 = vmatmul.f32.gmra.mxu0 %v1642
      %v1694 = vpop.f32.mrf.mxu0
      %v1695 = vadd.f32 %v1548, %v1694
      %1696 = vmatmul.f32.gmra.mxu0 %v1644
      %v1697 = vpop.f32.mrf.mxu0
      %v1698 = vadd.f32 %v1551, %v1697
      %1699 = vmatmul.f32.gmra.mxu0 %v1646
      %v1700 = vpop.f32.mrf.mxu0
      %v1701 = vadd.f32 %v1554, %v1700
      %1702 = vmatmul.f32.gmra.mxu0 %v1648
      %v1703 = vpop.f32.mrf.mxu0
      %v1704 = vadd.f32 %v1557, %v1703
      %1705 = vmatmul.f32.gmra.mxu0 %v1650
      %v1706 = vpop.f32.mrf.mxu0
      %v1707 = vadd.f32 %v1560, %v1706
      %1708 = vmatmul.f32.gmra.mxu0 %v1652
      %v1709 = vpop.f32.mrf.mxu0
      %v1710 = vadd.f32 %v1563, %v1709
      %1711 = vmatmul.f32.gmra.mxu0 %v1654
      %v1712 = vpop.f32.mrf.mxu0
      %v1713 = vadd.f32 %v1566, %v1712
      %1714 = vmatmul.f32.gmra.mxu0 %v1656
      %v1715 = vpop.f32.mrf.mxu0
      %v1716 = vadd.f32 %v1569, %v1715
      %1717 = vmatmul.f32.gmra.mxu0 %v1658
      %v1718 = vpop.f32.mrf.mxu0
      %v1719 = vadd.f32 %v1572, %v1718
      %1720 = vmatmul.f32.gmra.mxu0 %v1660
      %v1721 = vpop.f32.mrf.mxu0
      %v1722 = vadd.f32 %v1575, %v1721
      %1723 = vmatmul.f32.gmra.mxu0 %v1662
      %v1724 = vpop.f32.mrf.mxu0
      %v1725 = vadd.f32 %v1578, %v1724
      %1726 = vmatmul.f32.gmra.mxu0 %v1664
      %v1727 = vpop.f32.mrf.mxu0
      %v1728 = vadd.f32 %v1581, %v1727
      %1729 = vmatmul.f32.gmra.mxu0 %v1666
      %v1730 = vpop.f32.mrf.mxu0
      %v1731 = vadd.f32 %v1584, %v1730
      %1732 = vmatmul.f32.gmra.mxu0 %v1668
      %v1733 = vpop.f32.mrf.mxu0
      %v1734 = vadd.f32 %v1587, %v1733
      %1735 = vmatmul.f32.gmra.mxu0 %v1670
      %v1736 = vpop.f32.mrf.mxu0
      %v1737 = vadd.f32 %v1590, %v1736
      %1738 = vdwg.mxu0
      %vm1739 = vcmp.eq.f32.partialorder %v972, 3.0
      %vm1740 = vcmp.eq.f32.partialorder %v973, 3.0
      %vm1741 = vcmp.eq.f32.partialorder %v974, 3.0
      %vm1742 = vcmp.eq.f32.partialorder %v975, 3.0
      %vm1743 = vcmp.eq.f32.partialorder %v976, 3.0
      %vm1744 = vcmp.eq.f32.partialorder %v977, 3.0
      %vm1745 = vcmp.eq.f32.partialorder %v978, 3.0
      %vm1746 = vcmp.eq.f32.partialorder %v979, 3.0
      %vm1747 = vcmp.eq.f32.partialorder %v980, 3.0
      %vm1748 = vcmp.eq.f32.partialorder %v981, 3.0
      %vm1749 = vcmp.eq.f32.partialorder %v982, 3.0
      %vm1750 = vcmp.eq.f32.partialorder %v983, 3.0
      %vm1751 = vcmp.eq.f32.partialorder %v984, 3.0
      %vm1752 = vcmp.eq.f32.partialorder %v985, 3.0
      %vm1753 = vcmp.eq.f32.partialorder %v986, 3.0
      %vm1754 = vcmp.eq.f32.partialorder %v987, 3.0
      %v1755 = vsel %vm1739, 1, 0
      %v1756 = vsel %vm1740, 1, 0
      %v1757 = vsel %vm1741, 1, 0
      %v1758 = vsel %vm1742, 1, 0
      %v1759 = vsel %vm1743, 1, 0
      %v1760 = vsel %vm1744, 1, 0
      %v1761 = vsel %vm1745, 1, 0
      %v1762 = vsel %vm1746, 1, 0
      %v1763 = vsel %vm1747, 1, 0
      %v1764 = vsel %vm1748, 1, 0
      %v1765 = vsel %vm1749, 1, 0
      %v1766 = vsel %vm1750, 1, 0
      %v1767 = vsel %vm1751, 1, 0
      %v1768 = vsel %vm1752, 1, 0
      %v1769 = vsel %vm1753, 1, 0
      %v1770 = vsel %vm1754, 1, 0
      %v1771 = vcvt.s32.f32 %v1755
      %v1772 = vcvt.s32.f32 %v1756
      %v1773 = vcvt.s32.f32 %v1757
      %v1774 = vcvt.s32.f32 %v1758
      %v1775 = vcvt.s32.f32 %v1759
      %v1776 = vcvt.s32.f32 %v1760
      %v1777 = vcvt.s32.f32 %v1761
      %v1778 = vcvt.s32.f32 %v1762
      %v1779 = vcvt.s32.f32 %v1763
      %v1780 = vcvt.s32.f32 %v1764
      %v1781 = vcvt.s32.f32 %v1765
      %v1782 = vcvt.s32.f32 %v1766
      %v1783 = vcvt.s32.f32 %v1767
      %v1784 = vcvt.s32.f32 %v1768
      %v1785 = vcvt.s32.f32 %v1769
      %v1786 = vcvt.s32.f32 %v1770
      %1787 = vmatpush.msra.mxu0 %v576
      %1788 = vmatpush.msra.mxu0 %v575
      %1789 = vmatpush.msra.mxu0 %v574
      %1790 = vmatpush.msra.mxu0 %v573
      %1791 = vmatpush.msra.mxu0 %v572
      %1792 = vmatpush.msra.mxu0 %v571
      %1793 = vmatpush.msra.mxu0 %v570
      %1794 = vmatpush.msra.mxu0 %v569
      %1795 = vmatpush.msra.mxu0 %v568
      %1796 = vmatpush.msra.mxu0 %v567
      %1797 = vmatpush.msra.mxu0 %v566
      %1798 = vmatpush.msra.mxu0 %v565
      %1799 = vmatpush.msra.mxu0 %v564
      %1800 = vmatpush.msra.mxu0 %v563
      %1801 = vmatpush.msra.mxu0 %v562
      %1802 = vmatpush.msra.mxu0 %v561
      %1803 = vmatmul.f32.gmra.mxu0 %v1771
      %v1804 = vpop.f32.mrf.mxu0
      %v1805 = vadd.f32 0.0, %v1804
      %1806 = vmatmul.f32.gmra.mxu0 %v1772
      %v1807 = vpop.f32.mrf.mxu0
      %v1808 = vadd.f32 0.0, %v1807
      %1809 = vmatmul.f32.gmra.mxu0 %v1773
      %v1810 = vpop.f32.mrf.mxu0
      %v1811 = vadd.f32 0.0, %v1810
      %1812 = vmatmul.f32.gmra.mxu0 %v1774
      %v1813 = vpop.f32.mrf.mxu0
      %v1814 = vadd.f32 0.0, %v1813
      %1815 = vmatmul.f32.gmra.mxu0 %v1775
      %v1816 = vpop.f32.mrf.mxu0
      %v1817 = vadd.f32 0.0, %v1816
      %1818 = vmatmul.f32.gmra.mxu0 %v1776
      %v1819 = vpop.f32.mrf.mxu0
      %v1820 = vadd.f32 0.0, %v1819
      %1821 = vmatmul.f32.gmra.mxu0 %v1777
      %v1822 = vpop.f32.mrf.mxu0
      %v1823 = vadd.f32 0.0, %v1822
      %1824 = vmatmul.f32.gmra.mxu0 %v1778
      %v1825 = vpop.f32.mrf.mxu0
      %v1826 = vadd.f32 0.0, %v1825
      %1827 = vmatmul.f32.gmra.mxu0 %v1779
      %v1828 = vpop.f32.mrf.mxu0
      %v1829 = vadd.f32 0.0, %v1828
      %1830 = vmatmul.f32.gmra.mxu0 %v1780
      %v1831 = vpop.f32.mrf.mxu0
      %v1832 = vadd.f32 0.0, %v1831
      %1833 = vmatmul.f32.gmra.mxu0 %v1781
      %v1834 = vpop.f32.mrf.mxu0
      %v1835 = vadd.f32 0.0, %v1834
      %1836 = vmatmul.f32.gmra.mxu0 %v1782
      %v1837 = vpop.f32.mrf.mxu0
      %v1838 = vadd.f32 0.0, %v1837
      %1839 = vmatmul.f32.gmra.mxu0 %v1783
      %v1840 = vpop.f32.mrf.mxu0
      %v1841 = vadd.f32 0.0, %v1840
      %1842 = vmatmul.f32.gmra.mxu0 %v1784
      %v1843 = vpop.f32.mrf.mxu0
      %v1844 = vadd.f32 0.0, %v1843
      %1845 = vmatmul.f32.gmra.mxu0 %v1785
      %v1846 = vpop.f32.mrf.mxu0
      %v1847 = vadd.f32 0.0, %v1846
      %1848 = vmatmul.f32.gmra.mxu0 %v1786
      %v1849 = vpop.f32.mrf.mxu0
      %v1850 = vadd.f32 0.0, %v1849
      %1851 = vdwg.mxu0
      %1853 = vset.pattern.permute.xlu0 0
      %1854 = vperm.xlu0 %1853, %v1805
      %v1855 = vpop.permute.xlu0 %1854
      %1858 = vset.pattern.permute.xlu0 0
      %1859 = vperm.xlu0 %1858, %v1808
      %v1860 = vpop.permute.xlu0 %1859
      %1863 = vset.pattern.permute.xlu0 0
      %1864 = vperm.xlu0 %1863, %v1811
      %v1865 = vpop.permute.xlu0 %1864
      %1868 = vset.pattern.permute.xlu0 0
      %1869 = vperm.xlu0 %1868, %v1814
      %v1870 = vpop.permute.xlu0 %1869
      %1873 = vset.pattern.permute.xlu0 0
      %1874 = vperm.xlu0 %1873, %v1817
      %v1875 = vpop.permute.xlu0 %1874
      %1878 = vset.pattern.permute.xlu0 0
      %1879 = vperm.xlu0 %1878, %v1820
      %v1880 = vpop.permute.xlu0 %1879
      %1883 = vset.pattern.permute.xlu0 0
      %1884 = vperm.xlu0 %1883, %v1823
      %v1885 = vpop.permute.xlu0 %1884
      %1888 = vset.pattern.permute.xlu0 0
      %1889 = vperm.xlu0 %1888, %v1826
      %v1890 = vpop.permute.xlu0 %1889
      %1893 = vset.pattern.permute.xlu0 0
      %1894 = vperm.xlu0 %1893, %v1829
      %v1895 = vpop.permute.xlu0 %1894
      %1898 = vset.pattern.permute.xlu0 0
      %1899 = vperm.xlu0 %1898, %v1832
      %v1900 = vpop.permute.xlu0 %1899
      %1903 = vset.pattern.permute.xlu0 0
      %1904 = vperm.xlu0 %1903, %v1835
      %v1905 = vpop.permute.xlu0 %1904
      %1908 = vset.pattern.permute.xlu0 0
      %1909 = vperm.xlu0 %1908, %v1838
      %v1910 = vpop.permute.xlu0 %1909
      %1913 = vset.pattern.permute.xlu0 0
      %1914 = vperm.xlu0 %1913, %v1841
      %v1915 = vpop.permute.xlu0 %1914
      %1918 = vset.pattern.permute.xlu0 0
      %1919 = vperm.xlu0 %1918, %v1844
      %v1920 = vpop.permute.xlu0 %1919
      %1923 = vset.pattern.permute.xlu0 0
      %1924 = vperm.xlu0 %1923, %v1847
      %v1925 = vpop.permute.xlu0 %1924
      %1928 = vset.pattern.permute.xlu0 0
      %1929 = vperm.xlu0 %1928, %v1850
      %v1930 = vpop.permute.xlu0 %1929
      %v1932 = vmul.f32 %v1855, %v544
      %v1933 = vmul.f32 %v1860, %v545
      %v1934 = vmul.f32 %v1865, %v546
      %v1935 = vmul.f32 %v1870, %v547
      %v1936 = vmul.f32 %v1875, %v548
      %v1937 = vmul.f32 %v1880, %v549
      %v1938 = vmul.f32 %v1885, %v550
      %v1939 = vmul.f32 %v1890, %v551
      %v1940 = vmul.f32 %v1895, %v552
      %v1941 = vmul.f32 %v1900, %v553
      %v1942 = vmul.f32 %v1905, %v554
      %v1943 = vmul.f32 %v1910, %v555
      %v1944 = vmul.f32 %v1915, %v556
      %v1945 = vmul.f32 %v1920, %v557
      %v1946 = vmul.f32 %v1925, %v558
      %v1947 = vmul.f32 %v1930, %v559
      %v1948 = vsub.f32 %v1932, %v1805
      %v1949 = vsub.f32 %v1933, %v1808
      %v1950 = vsub.f32 %v1934, %v1811
      %v1951 = vsub.f32 %v1935, %v1814
      %v1952 = vsub.f32 %v1936, %v1817
      %v1953 = vsub.f32 %v1937, %v1820
      %v1954 = vsub.f32 %v1938, %v1823
      %v1955 = vsub.f32 %v1939, %v1826
      %v1956 = vsub.f32 %v1940, %v1829
      %v1957 = vsub.f32 %v1941, %v1832
      %v1958 = vsub.f32 %v1942, %v1835
      %v1959 = vsub.f32 %v1943, %v1838
      %v1960 = vsub.f32 %v1944, %v1841
      %v1961 = vsub.f32 %v1945, %v1844
      %v1962 = vsub.f32 %v1946, %v1847
      %v1963 = vsub.f32 %v1947, %v1850
      %1980 = vrot.lane.b32.xlu0 %v1948, 127
      %v1981 = vpop.permute.xlu0 %1980
      %1982 = vrot.lane.b32.xlu0 %v1949, 127
      %v1983 = vpop.permute.xlu0 %1982
      %1984 = vrot.lane.b32.xlu0 %v1950, 127
      %v1985 = vpop.permute.xlu0 %1984
      %1986 = vrot.lane.b32.xlu0 %v1951, 127
      %v1987 = vpop.permute.xlu0 %1986
      %1988 = vrot.lane.b32.xlu0 %v1952, 127
      %v1989 = vpop.permute.xlu0 %1988
      %1990 = vrot.lane.b32.xlu0 %v1953, 127
      %v1991 = vpop.permute.xlu0 %1990
      %1992 = vrot.lane.b32.xlu0 %v1954, 127
      %v1993 = vpop.permute.xlu0 %1992
      %1994 = vrot.lane.b32.xlu0 %v1955, 127
      %v1995 = vpop.permute.xlu0 %1994
      %1996 = vrot.lane.b32.xlu0 %v1956, 127
      %v1997 = vpop.permute.xlu0 %1996
      %1998 = vrot.lane.b32.xlu0 %v1957, 127
      %v1999 = vpop.permute.xlu0 %1998
      %2000 = vrot.lane.b32.xlu0 %v1958, 127
      %v2001 = vpop.permute.xlu0 %2000
      %2002 = vrot.lane.b32.xlu0 %v1959, 127
      %v2003 = vpop.permute.xlu0 %2002
      %2004 = vrot.lane.b32.xlu0 %v1960, 127
      %v2005 = vpop.permute.xlu0 %2004
      %2006 = vrot.lane.b32.xlu0 %v1961, 127
      %v2007 = vpop.permute.xlu0 %2006
      %2008 = vrot.lane.b32.xlu0 %v1962, 127
      %v2009 = vpop.permute.xlu0 %2008
      %2010 = vrot.lane.b32.xlu0 %v1963, 127
      %v2011 = vpop.permute.xlu0 %2010
      %v2012 = vrot.slane %v988, 4
      %v2013 = vsel %vm1491, %v1981, 0
      %v2015 = vsel %vm1491, %v1983, 0
      %v2017 = vsel %vm1491, %v1985, 0
      %v2019 = vsel %vm1491, %v1987, 0
      %v2021 = vsel %vm1491, %v1989, 0
      %v2023 = vsel %vm1491, %v1991, 0
      %v2025 = vsel %vm1491, %v1993, 0
      %v2027 = vsel %vm1491, %v1995, 0
      %v2029 = vsel %vm1491, %v1997, 0
      %v2031 = vsel %vm1491, %v1999, 0
      %v2033 = vsel %vm1491, %v2001, 0
      %v2035 = vsel %vm1491, %v2003, 0
      %v2037 = vsel %vm1491, %v2005, 0
      %v2039 = vsel %vm1491, %v2007, 0
      %v2041 = vsel %vm1491, %v2009, 0
      %v2043 = vsel %vm1491, %v2011, 0
      %v2045 = vsel %vm1524, %v2012, 0
      %2047 = vmatpush.msra.mxu0 0.0
      %2048 = vmatpush.msra.mxu0 0.0
      %2049 = vmatpush.msra.mxu0 0.0
      %2050 = vmatpush.msra.mxu0 0.0
      %2051 = vmatpush.msra.mxu0 0.0
      %2052 = vmatpush.msra.mxu0 0.0
      %2053 = vmatpush.msra.mxu0 0.0
      %2054 = vmatpush.msra.mxu0 0.0
      %2055 = vmatpush.msra.mxu0 0.0
      %2056 = vmatpush.msra.mxu0 0.0
      %2057 = vmatpush.msra.mxu0 0.0
      %2058 = vmatpush.msra.mxu0 0.0
      %2059 = vmatpush.msra.mxu0 0.0
      %2060 = vmatpush.msra.mxu0 0.0
      %2061 = vmatpush.msra.mxu0 0.0
      %2062 = vmatpush.msra.mxu0 %v2045
      %2063 = vmatmul.f32.gmra.mxu0 %v2013
      %v2064 = vpop.f32.mrf.mxu0
      %v2065 = vadd.f32 0.0, %v2064
      %2066 = vmatmul.f32.gmra.mxu0 %v2015
      %v2067 = vpop.f32.mrf.mxu0
      %v2068 = vadd.f32 0.0, %v2067
      %2069 = vmatmul.f32.gmra.mxu0 %v2017
      %v2070 = vpop.f32.mrf.mxu0
      %v2071 = vadd.f32 0.0, %v2070
      %2072 = vmatmul.f32.gmra.mxu0 %v2019
      %v2073 = vpop.f32.mrf.mxu0
      %v2074 = vadd.f32 0.0, %v2073
      %2075 = vmatmul.f32.gmra.mxu0 %v2021
      %v2076 = vpop.f32.mrf.mxu0
      %v2077 = vadd.f32 0.0, %v2076
      %2078 = vmatmul.f32.gmra.mxu0 %v2023
      %v2079 = vpop.f32.mrf.mxu0
      %v2080 = vadd.f32 0.0, %v2079
      %2081 = vmatmul.f32.gmra.mxu0 %v2025
      %v2082 = vpop.f32.mrf.mxu0
      %v2083 = vadd.f32 0.0, %v2082
      %2084 = vmatmul.f32.gmra.mxu0 %v2027
      %v2085 = vpop.f32.mrf.mxu0
      %v2086 = vadd.f32 0.0, %v2085
      %2087 = vmatmul.f32.gmra.mxu0 %v2029
      %v2088 = vpop.f32.mrf.mxu0
      %v2089 = vadd.f32 0.0, %v2088
      %2090 = vmatmul.f32.gmra.mxu0 %v2031
      %v2091 = vpop.f32.mrf.mxu0
      %v2092 = vadd.f32 0.0, %v2091
      %2093 = vmatmul.f32.gmra.mxu0 %v2033
      %v2094 = vpop.f32.mrf.mxu0
      %v2095 = vadd.f32 0.0, %v2094
      %2096 = vmatmul.f32.gmra.mxu0 %v2035
      %v2097 = vpop.f32.mrf.mxu0
      %v2098 = vadd.f32 0.0, %v2097
      %2099 = vmatmul.f32.gmra.mxu0 %v2037
      %v2100 = vpop.f32.mrf.mxu0
      %v2101 = vadd.f32 0.0, %v2100
      %2102 = vmatmul.f32.gmra.mxu0 %v2039
      %v2103 = vpop.f32.mrf.mxu0
      %v2104 = vadd.f32 0.0, %v2103
      %2105 = vmatmul.f32.gmra.mxu0 %v2041
      %v2106 = vpop.f32.mrf.mxu0
      %v2107 = vadd.f32 0.0, %v2106
      %2108 = vmatmul.f32.gmra.mxu0 %v2043
      %v2109 = vpop.f32.mrf.mxu0
      %v2110 = vadd.f32 0.0, %v2109
      %2111 = vdwg.mxu0
      %v2112 = vadd.f32 %v1692, %v2065
      %v2113 = vadd.f32 %v1695, %v2068
      %v2114 = vadd.f32 %v1698, %v2071
      %v2115 = vadd.f32 %v1701, %v2074
      %v2116 = vadd.f32 %v1704, %v2077
      %v2117 = vadd.f32 %v1707, %v2080
      %v2118 = vadd.f32 %v1710, %v2083
      %v2119 = vadd.f32 %v1713, %v2086
      %v2120 = vadd.f32 %v1716, %v2089
      %v2121 = vadd.f32 %v1719, %v2092
      %v2122 = vadd.f32 %v1722, %v2095
      %v2123 = vadd.f32 %v1725, %v2098
      %v2124 = vadd.f32 %v1728, %v2101
      %v2125 = vadd.f32 %v1731, %v2104
      %v2126 = vadd.f32 %v1734, %v2107
      %v2127 = vadd.f32 %v1737, %v2110
      %vm2128 = vcmp.eq.f32.partialorder %v972, 4.0
      %vm2129 = vcmp.eq.f32.partialorder %v973, 4.0
      %vm2130 = vcmp.eq.f32.partialorder %v974, 4.0
      %vm2131 = vcmp.eq.f32.partialorder %v975, 4.0
      %vm2132 = vcmp.eq.f32.partialorder %v976, 4.0
      %vm2133 = vcmp.eq.f32.partialorder %v977, 4.0
      %vm2134 = vcmp.eq.f32.partialorder %v978, 4.0
      %vm2135 = vcmp.eq.f32.partialorder %v979, 4.0
      %vm2136 = vcmp.eq.f32.partialorder %v980, 4.0
      %vm2137 = vcmp.eq.f32.partialorder %v981, 4.0
      %vm2138 = vcmp.eq.f32.partialorder %v982, 4.0
      %vm2139 = vcmp.eq.f32.partialorder %v983, 4.0
      %vm2140 = vcmp.eq.f32.partialorder %v984, 4.0
      %vm2141 = vcmp.eq.f32.partialorder %v985, 4.0
      %vm2142 = vcmp.eq.f32.partialorder %v986, 4.0
      %vm2143 = vcmp.eq.f32.partialorder %v987, 4.0
      %v2144 = vsel %vm2128, 1, 0
      %v2145 = vsel %vm2129, 1, 0
      %v2146 = vsel %vm2130, 1, 0
      %v2147 = vsel %vm2131, 1, 0
      %v2148 = vsel %vm2132, 1, 0
      %v2149 = vsel %vm2133, 1, 0
      %v2150 = vsel %vm2134, 1, 0
      %v2151 = vsel %vm2135, 1, 0
      %v2152 = vsel %vm2136, 1, 0
      %v2153 = vsel %vm2137, 1, 0
      %v2154 = vsel %vm2138, 1, 0
      %v2155 = vsel %vm2139, 1, 0
      %v2156 = vsel %vm2140, 1, 0
      %v2157 = vsel %vm2141, 1, 0
      %v2158 = vsel %vm2142, 1, 0
      %v2159 = vsel %vm2143, 1, 0
      %v2160 = vcvt.s32.f32 %v2144
      %v2161 = vcvt.s32.f32 %v2145
      %v2162 = vcvt.s32.f32 %v2146
      %v2163 = vcvt.s32.f32 %v2147
      %v2164 = vcvt.s32.f32 %v2148
      %v2165 = vcvt.s32.f32 %v2149
      %v2166 = vcvt.s32.f32 %v2150
      %v2167 = vcvt.s32.f32 %v2151
      %v2168 = vcvt.s32.f32 %v2152
      %v2169 = vcvt.s32.f32 %v2153
      %v2170 = vcvt.s32.f32 %v2154
      %v2171 = vcvt.s32.f32 %v2155
      %v2172 = vcvt.s32.f32 %v2156
      %v2173 = vcvt.s32.f32 %v2157
      %v2174 = vcvt.s32.f32 %v2158
      %v2175 = vcvt.s32.f32 %v2159
      %2176 = vmatpush.msra.mxu0 %v576
      %2177 = vmatpush.msra.mxu0 %v575
      %2178 = vmatpush.msra.mxu0 %v574
      %2179 = vmatpush.msra.mxu0 %v573
      %2180 = vmatpush.msra.mxu0 %v572
      %2181 = vmatpush.msra.mxu0 %v571
      %2182 = vmatpush.msra.mxu0 %v570
      %2183 = vmatpush.msra.mxu0 %v569
      %2184 = vmatpush.msra.mxu0 %v568
      %2185 = vmatpush.msra.mxu0 %v567
      %2186 = vmatpush.msra.mxu0 %v566
      %2187 = vmatpush.msra.mxu0 %v565
      %2188 = vmatpush.msra.mxu0 %v564
      %2189 = vmatpush.msra.mxu0 %v563
      %2190 = vmatpush.msra.mxu0 %v562
      %2191 = vmatpush.msra.mxu0 %v561
      %2192 = vmatmul.f32.gmra.mxu0 %v2160
      %v2193 = vpop.f32.mrf.mxu0
      %v2194 = vadd.f32 0.0, %v2193
      %2195 = vmatmul.f32.gmra.mxu0 %v2161
      %v2196 = vpop.f32.mrf.mxu0
      %v2197 = vadd.f32 0.0, %v2196
      %2198 = vmatmul.f32.gmra.mxu0 %v2162
      %v2199 = vpop.f32.mrf.mxu0
      %v2200 = vadd.f32 0.0, %v2199
      %2201 = vmatmul.f32.gmra.mxu0 %v2163
      %v2202 = vpop.f32.mrf.mxu0
      %v2203 = vadd.f32 0.0, %v2202
      %2204 = vmatmul.f32.gmra.mxu0 %v2164
      %v2205 = vpop.f32.mrf.mxu0
      %v2206 = vadd.f32 0.0, %v2205
      %2207 = vmatmul.f32.gmra.mxu0 %v2165
      %v2208 = vpop.f32.mrf.mxu0
      %v2209 = vadd.f32 0.0, %v2208
      %2210 = vmatmul.f32.gmra.mxu0 %v2166
      %v2211 = vpop.f32.mrf.mxu0
      %v2212 = vadd.f32 0.0, %v2211
      %2213 = vmatmul.f32.gmra.mxu0 %v2167
      %v2214 = vpop.f32.mrf.mxu0
      %v2215 = vadd.f32 0.0, %v2214
      %2216 = vmatmul.f32.gmra.mxu0 %v2168
      %v2217 = vpop.f32.mrf.mxu0
      %v2218 = vadd.f32 0.0, %v2217
      %2219 = vmatmul.f32.gmra.mxu0 %v2169
      %v2220 = vpop.f32.mrf.mxu0
      %v2221 = vadd.f32 0.0, %v2220
      %2222 = vmatmul.f32.gmra.mxu0 %v2170
      %v2223 = vpop.f32.mrf.mxu0
      %v2224 = vadd.f32 0.0, %v2223
      %2225 = vmatmul.f32.gmra.mxu0 %v2171
      %v2226 = vpop.f32.mrf.mxu0
      %v2227 = vadd.f32 0.0, %v2226
      %2228 = vmatmul.f32.gmra.mxu0 %v2172
      %v2229 = vpop.f32.mrf.mxu0
      %v2230 = vadd.f32 0.0, %v2229
      %2231 = vmatmul.f32.gmra.mxu0 %v2173
      %v2232 = vpop.f32.mrf.mxu0
      %v2233 = vadd.f32 0.0, %v2232
      %2234 = vmatmul.f32.gmra.mxu0 %v2174
      %v2235 = vpop.f32.mrf.mxu0
      %v2236 = vadd.f32 0.0, %v2235
      %2237 = vmatmul.f32.gmra.mxu0 %v2175
      %v2238 = vpop.f32.mrf.mxu0
      %v2239 = vadd.f32 0.0, %v2238
      %2240 = vdwg.mxu0
      %2242 = vset.pattern.permute.xlu0 0
      %2243 = vperm.xlu0 %2242, %v2194
      %v2244 = vpop.permute.xlu0 %2243
      %2247 = vset.pattern.permute.xlu0 0
      %2248 = vperm.xlu0 %2247, %v2197
      %v2249 = vpop.permute.xlu0 %2248
      %2252 = vset.pattern.permute.xlu0 0
      %2253 = vperm.xlu0 %2252, %v2200
      %v2254 = vpop.permute.xlu0 %2253
      %2257 = vset.pattern.permute.xlu0 0
      %2258 = vperm.xlu0 %2257, %v2203
      %v2259 = vpop.permute.xlu0 %2258
      %2262 = vset.pattern.permute.xlu0 0
      %2263 = vperm.xlu0 %2262, %v2206
      %v2264 = vpop.permute.xlu0 %2263
      %2267 = vset.pattern.permute.xlu0 0
      %2268 = vperm.xlu0 %2267, %v2209
      %v2269 = vpop.permute.xlu0 %2268
      %2272 = vset.pattern.permute.xlu0 0
      %2273 = vperm.xlu0 %2272, %v2212
      %v2274 = vpop.permute.xlu0 %2273
      %2277 = vset.pattern.permute.xlu0 0
      %2278 = vperm.xlu0 %2277, %v2215
      %v2279 = vpop.permute.xlu0 %2278
      %2282 = vset.pattern.permute.xlu0 0
      %2283 = vperm.xlu0 %2282, %v2218
      %v2284 = vpop.permute.xlu0 %2283
      %2287 = vset.pattern.permute.xlu0 0
      %2288 = vperm.xlu0 %2287, %v2221
      %v2289 = vpop.permute.xlu0 %2288
      %2292 = vset.pattern.permute.xlu0 0
      %2293 = vperm.xlu0 %2292, %v2224
      %v2294 = vpop.permute.xlu0 %2293
      %2297 = vset.pattern.permute.xlu0 0
      %2298 = vperm.xlu0 %2297, %v2227
      %v2299 = vpop.permute.xlu0 %2298
      %2302 = vset.pattern.permute.xlu0 0
      %2303 = vperm.xlu0 %2302, %v2230
      %v2304 = vpop.permute.xlu0 %2303
      %2307 = vset.pattern.permute.xlu0 0
      %2308 = vperm.xlu0 %2307, %v2233
      %v2309 = vpop.permute.xlu0 %2308
      %2312 = vset.pattern.permute.xlu0 0
      %2313 = vperm.xlu0 %2312, %v2236
      %v2314 = vpop.permute.xlu0 %2313
      %2317 = vset.pattern.permute.xlu0 0
      %2318 = vperm.xlu0 %2317, %v2239
      %v2319 = vpop.permute.xlu0 %2318
      %v2321 = vmul.f32 %v2244, %v544
      %v2322 = vmul.f32 %v2249, %v545
      %v2323 = vmul.f32 %v2254, %v546
      %v2324 = vmul.f32 %v2259, %v547
      %v2325 = vmul.f32 %v2264, %v548
      %v2326 = vmul.f32 %v2269, %v549
      %v2327 = vmul.f32 %v2274, %v550
      %v2328 = vmul.f32 %v2279, %v551
      %v2329 = vmul.f32 %v2284, %v552
      %v2330 = vmul.f32 %v2289, %v553
      %v2331 = vmul.f32 %v2294, %v554
      %v2332 = vmul.f32 %v2299, %v555
      %v2333 = vmul.f32 %v2304, %v556
      %v2334 = vmul.f32 %v2309, %v557
      %v2335 = vmul.f32 %v2314, %v558
      %v2336 = vmul.f32 %v2319, %v559
      %v2337 = vsub.f32 %v2321, %v2194
      %v2338 = vsub.f32 %v2322, %v2197
      %v2339 = vsub.f32 %v2323, %v2200
      %v2340 = vsub.f32 %v2324, %v2203
      %v2341 = vsub.f32 %v2325, %v2206
      %v2342 = vsub.f32 %v2326, %v2209
      %v2343 = vsub.f32 %v2327, %v2212
      %v2344 = vsub.f32 %v2328, %v2215
      %v2345 = vsub.f32 %v2329, %v2218
      %v2346 = vsub.f32 %v2330, %v2221
      %v2347 = vsub.f32 %v2331, %v2224
      %v2348 = vsub.f32 %v2332, %v2227
      %v2349 = vsub.f32 %v2333, %v2230
      %v2350 = vsub.f32 %v2334, %v2233
      %v2351 = vsub.f32 %v2335, %v2236
      %v2352 = vsub.f32 %v2336, %v2239
      %2369 = vrot.lane.b32.xlu0 %v2337, 127
      %v2370 = vpop.permute.xlu0 %2369
      %2371 = vrot.lane.b32.xlu0 %v2338, 127
      %v2372 = vpop.permute.xlu0 %2371
      %2373 = vrot.lane.b32.xlu0 %v2339, 127
      %v2374 = vpop.permute.xlu0 %2373
      %2375 = vrot.lane.b32.xlu0 %v2340, 127
      %v2376 = vpop.permute.xlu0 %2375
      %2377 = vrot.lane.b32.xlu0 %v2341, 127
      %v2378 = vpop.permute.xlu0 %2377
      %2379 = vrot.lane.b32.xlu0 %v2342, 127
      %v2380 = vpop.permute.xlu0 %2379
      %2381 = vrot.lane.b32.xlu0 %v2343, 127
      %v2382 = vpop.permute.xlu0 %2381
      %2383 = vrot.lane.b32.xlu0 %v2344, 127
      %v2384 = vpop.permute.xlu0 %2383
      %2385 = vrot.lane.b32.xlu0 %v2345, 127
      %v2386 = vpop.permute.xlu0 %2385
      %2387 = vrot.lane.b32.xlu0 %v2346, 127
      %v2388 = vpop.permute.xlu0 %2387
      %2389 = vrot.lane.b32.xlu0 %v2347, 127
      %v2390 = vpop.permute.xlu0 %2389
      %2391 = vrot.lane.b32.xlu0 %v2348, 127
      %v2392 = vpop.permute.xlu0 %2391
      %2393 = vrot.lane.b32.xlu0 %v2349, 127
      %v2394 = vpop.permute.xlu0 %2393
      %2395 = vrot.lane.b32.xlu0 %v2350, 127
      %v2396 = vpop.permute.xlu0 %2395
      %2397 = vrot.lane.b32.xlu0 %v2351, 127
      %v2398 = vpop.permute.xlu0 %2397
      %2399 = vrot.lane.b32.xlu0 %v2352, 127
      %v2400 = vpop.permute.xlu0 %2399
      %v2401 = vrot.slane %v988, 6
      %v2402 = vsel %vm1491, %v2370, 0
      %v2404 = vsel %vm1491, %v2372, 0
      %v2406 = vsel %vm1491, %v2374, 0
      %v2408 = vsel %vm1491, %v2376, 0
      %v2410 = vsel %vm1491, %v2378, 0
      %v2412 = vsel %vm1491, %v2380, 0
      %v2414 = vsel %vm1491, %v2382, 0
      %v2416 = vsel %vm1491, %v2384, 0
      %v2418 = vsel %vm1491, %v2386, 0
      %v2420 = vsel %vm1491, %v2388, 0
      %v2422 = vsel %vm1491, %v2390, 0
      %v2424 = vsel %vm1491, %v2392, 0
      %v2426 = vsel %vm1491, %v2394, 0
      %v2428 = vsel %vm1491, %v2396, 0
      %v2430 = vsel %vm1491, %v2398, 0
      %v2432 = vsel %vm1491, %v2400, 0
      %v2434 = vsel %vm1524, %v2401, 0
      %2436 = vmatpush.msra.mxu0 0.0
      %2437 = vmatpush.msra.mxu0 0.0
      %2438 = vmatpush.msra.mxu0 0.0
      %2439 = vmatpush.msra.mxu0 0.0
      %2440 = vmatpush.msra.mxu0 0.0
      %2441 = vmatpush.msra.mxu0 0.0
      %2442 = vmatpush.msra.mxu0 0.0
      %2443 = vmatpush.msra.mxu0 0.0
      %2444 = vmatpush.msra.mxu0 0.0
      %2445 = vmatpush.msra.mxu0 0.0
      %2446 = vmatpush.msra.mxu0 0.0
      %2447 = vmatpush.msra.mxu0 0.0
      %2448 = vmatpush.msra.mxu0 0.0
      %2449 = vmatpush.msra.mxu0 0.0
      %2450 = vmatpush.msra.mxu0 0.0
      %2451 = vmatpush.msra.mxu0 %v2434
      %2452 = vmatmul.f32.gmra.mxu0 %v2402
      %v2453 = vpop.f32.mrf.mxu0
      %v2454 = vadd.f32 0.0, %v2453
      %2455 = vmatmul.f32.gmra.mxu0 %v2404
      %v2456 = vpop.f32.mrf.mxu0
      %v2457 = vadd.f32 0.0, %v2456
      %2458 = vmatmul.f32.gmra.mxu0 %v2406
      %v2459 = vpop.f32.mrf.mxu0
      %v2460 = vadd.f32 0.0, %v2459
      %2461 = vmatmul.f32.gmra.mxu0 %v2408
      %v2462 = vpop.f32.mrf.mxu0
      %v2463 = vadd.f32 0.0, %v2462
      %2464 = vmatmul.f32.gmra.mxu0 %v2410
      %v2465 = vpop.f32.mrf.mxu0
      %v2466 = vadd.f32 0.0, %v2465
      %2467 = vmatmul.f32.gmra.mxu0 %v2412
      %v2468 = vpop.f32.mrf.mxu0
      %v2469 = vadd.f32 0.0, %v2468
      %2470 = vmatmul.f32.gmra.mxu0 %v2414
      %v2471 = vpop.f32.mrf.mxu0
      %v2472 = vadd.f32 0.0, %v2471
      %2473 = vmatmul.f32.gmra.mxu0 %v2416
      %v2474 = vpop.f32.mrf.mxu0
      %v2475 = vadd.f32 0.0, %v2474
      %2476 = vmatmul.f32.gmra.mxu0 %v2418
      %v2477 = vpop.f32.mrf.mxu0
      %v2478 = vadd.f32 0.0, %v2477
      %2479 = vmatmul.f32.gmra.mxu0 %v2420
      %v2480 = vpop.f32.mrf.mxu0
      %v2481 = vadd.f32 0.0, %v2480
      %2482 = vmatmul.f32.gmra.mxu0 %v2422
      %v2483 = vpop.f32.mrf.mxu0
      %v2484 = vadd.f32 0.0, %v2483
      %2485 = vmatmul.f32.gmra.mxu0 %v2424
      %v2486 = vpop.f32.mrf.mxu0
      %v2487 = vadd.f32 0.0, %v2486
      %2488 = vmatmul.f32.gmra.mxu0 %v2426
      %v2489 = vpop.f32.mrf.mxu0
      %v2490 = vadd.f32 0.0, %v2489
      %2491 = vmatmul.f32.gmra.mxu0 %v2428
      %v2492 = vpop.f32.mrf.mxu0
      %v2493 = vadd.f32 0.0, %v2492
      %2494 = vmatmul.f32.gmra.mxu0 %v2430
      %v2495 = vpop.f32.mrf.mxu0
      %v2496 = vadd.f32 0.0, %v2495
      %2497 = vmatmul.f32.gmra.mxu0 %v2432
      %v2498 = vpop.f32.mrf.mxu0
      %v2499 = vadd.f32 0.0, %v2498
      %2500 = vdwg.mxu0
      %v2501 = vadd.f32 %v2112, %v2454
      %v2502 = vadd.f32 %v2113, %v2457
      %v2503 = vadd.f32 %v2114, %v2460
      %v2504 = vadd.f32 %v2115, %v2463
      %v2505 = vadd.f32 %v2116, %v2466
      %v2506 = vadd.f32 %v2117, %v2469
      %v2507 = vadd.f32 %v2118, %v2472
      %v2508 = vadd.f32 %v2119, %v2475
      %v2509 = vadd.f32 %v2120, %v2478
      %v2510 = vadd.f32 %v2121, %v2481
      %v2511 = vadd.f32 %v2122, %v2484
      %v2512 = vadd.f32 %v2123, %v2487
      %v2513 = vadd.f32 %v2124, %v2490
      %v2514 = vadd.f32 %v2125, %v2493
      %v2515 = vadd.f32 %v2126, %v2496
      %v2516 = vadd.f32 %v2127, %v2499
      %vm2517 = vcmp.eq.f32.partialorder %v972, 5.0
      %vm2518 = vcmp.eq.f32.partialorder %v973, 5.0
      %vm2519 = vcmp.eq.f32.partialorder %v974, 5.0
      %vm2520 = vcmp.eq.f32.partialorder %v975, 5.0
      %vm2521 = vcmp.eq.f32.partialorder %v976, 5.0
      %vm2522 = vcmp.eq.f32.partialorder %v977, 5.0
      %vm2523 = vcmp.eq.f32.partialorder %v978, 5.0
      %vm2524 = vcmp.eq.f32.partialorder %v979, 5.0
      %vm2525 = vcmp.eq.f32.partialorder %v980, 5.0
      %vm2526 = vcmp.eq.f32.partialorder %v981, 5.0
      %vm2527 = vcmp.eq.f32.partialorder %v982, 5.0
      %vm2528 = vcmp.eq.f32.partialorder %v983, 5.0
      %vm2529 = vcmp.eq.f32.partialorder %v984, 5.0
      %vm2530 = vcmp.eq.f32.partialorder %v985, 5.0
      %vm2531 = vcmp.eq.f32.partialorder %v986, 5.0
      %vm2532 = vcmp.eq.f32.partialorder %v987, 5.0
      %v2533 = vsel %vm2517, 1, 0
      %v2534 = vsel %vm2518, 1, 0
      %v2535 = vsel %vm2519, 1, 0
      %v2536 = vsel %vm2520, 1, 0
      %v2537 = vsel %vm2521, 1, 0
      %v2538 = vsel %vm2522, 1, 0
      %v2539 = vsel %vm2523, 1, 0
      %v2540 = vsel %vm2524, 1, 0
      %v2541 = vsel %vm2525, 1, 0
      %v2542 = vsel %vm2526, 1, 0
      %v2543 = vsel %vm2527, 1, 0
      %v2544 = vsel %vm2528, 1, 0
      %v2545 = vsel %vm2529, 1, 0
      %v2546 = vsel %vm2530, 1, 0
      %v2547 = vsel %vm2531, 1, 0
      %v2548 = vsel %vm2532, 1, 0
      %v2549 = vcvt.s32.f32 %v2533
      %v2550 = vcvt.s32.f32 %v2534
      %v2551 = vcvt.s32.f32 %v2535
      %v2552 = vcvt.s32.f32 %v2536
      %v2553 = vcvt.s32.f32 %v2537
      %v2554 = vcvt.s32.f32 %v2538
      %v2555 = vcvt.s32.f32 %v2539
      %v2556 = vcvt.s32.f32 %v2540
      %v2557 = vcvt.s32.f32 %v2541
      %v2558 = vcvt.s32.f32 %v2542
      %v2559 = vcvt.s32.f32 %v2543
      %v2560 = vcvt.s32.f32 %v2544
      %v2561 = vcvt.s32.f32 %v2545
      %v2562 = vcvt.s32.f32 %v2546
      %v2563 = vcvt.s32.f32 %v2547
      %v2564 = vcvt.s32.f32 %v2548
      %2565 = vmatpush.msra.mxu0 %v576
      %2566 = vmatpush.msra.mxu0 %v575
      %2567 = vmatpush.msra.mxu0 %v574
      %2568 = vmatpush.msra.mxu0 %v573
      %2569 = vmatpush.msra.mxu0 %v572
      %2570 = vmatpush.msra.mxu0 %v571
      %2571 = vmatpush.msra.mxu0 %v570
      %2572 = vmatpush.msra.mxu0 %v569
      %2573 = vmatpush.msra.mxu0 %v568
      %2574 = vmatpush.msra.mxu0 %v567
      %2575 = vmatpush.msra.mxu0 %v566
      %2576 = vmatpush.msra.mxu0 %v565
      %2577 = vmatpush.msra.mxu0 %v564
      %2578 = vmatpush.msra.mxu0 %v563
      %2579 = vmatpush.msra.mxu0 %v562
      %2580 = vmatpush.msra.mxu0 %v561
      %2581 = vmatmul.f32.gmra.mxu0 %v2549
      %v2582 = vpop.f32.mrf.mxu0
      %v2583 = vadd.f32 0.0, %v2582
      %2584 = vmatmul.f32.gmra.mxu0 %v2550
      %v2585 = vpop.f32.mrf.mxu0
      %v2586 = vadd.f32 0.0, %v2585
      %2587 = vmatmul.f32.gmra.mxu0 %v2551
      %v2588 = vpop.f32.mrf.mxu0
      %v2589 = vadd.f32 0.0, %v2588
      %2590 = vmatmul.f32.gmra.mxu0 %v2552
      %v2591 = vpop.f32.mrf.mxu0
      %v2592 = vadd.f32 0.0, %v2591
      %2593 = vmatmul.f32.gmra.mxu0 %v2553
      %v2594 = vpop.f32.mrf.mxu0
      %v2595 = vadd.f32 0.0, %v2594
      %2596 = vmatmul.f32.gmra.mxu0 %v2554
      %v2597 = vpop.f32.mrf.mxu0
      %v2598 = vadd.f32 0.0, %v2597
      %2599 = vmatmul.f32.gmra.mxu0 %v2555
      %v2600 = vpop.f32.mrf.mxu0
      %v2601 = vadd.f32 0.0, %v2600
      %2602 = vmatmul.f32.gmra.mxu0 %v2556
      %v2603 = vpop.f32.mrf.mxu0
      %v2604 = vadd.f32 0.0, %v2603
      %2605 = vmatmul.f32.gmra.mxu0 %v2557
      %v2606 = vpop.f32.mrf.mxu0
      %v2607 = vadd.f32 0.0, %v2606
      %2608 = vmatmul.f32.gmra.mxu0 %v2558
      %v2609 = vpop.f32.mrf.mxu0
      %v2610 = vadd.f32 0.0, %v2609
      %2611 = vmatmul.f32.gmra.mxu0 %v2559
      %v2612 = vpop.f32.mrf.mxu0
      %v2613 = vadd.f32 0.0, %v2612
      %2614 = vmatmul.f32.gmra.mxu0 %v2560
      %v2615 = vpop.f32.mrf.mxu0
      %v2616 = vadd.f32 0.0, %v2615
      %2617 = vmatmul.f32.gmra.mxu0 %v2561
      %v2618 = vpop.f32.mrf.mxu0
      %v2619 = vadd.f32 0.0, %v2618
      %2620 = vmatmul.f32.gmra.mxu0 %v2562
      %v2621 = vpop.f32.mrf.mxu0
      %v2622 = vadd.f32 0.0, %v2621
      %2623 = vmatmul.f32.gmra.mxu0 %v2563
      %v2624 = vpop.f32.mrf.mxu0
      %v2625 = vadd.f32 0.0, %v2624
      %2626 = vmatmul.f32.gmra.mxu0 %v2564
      %v2627 = vpop.f32.mrf.mxu0
      %v2628 = vadd.f32 0.0, %v2627
      %2629 = vdwg.mxu0
      %2631 = vset.pattern.permute.xlu0 0
      %2632 = vperm.xlu0 %2631, %v2583
      %v2633 = vpop.permute.xlu0 %2632
      %2636 = vset.pattern.permute.xlu0 0
      %2637 = vperm.xlu0 %2636, %v2586
      %v2638 = vpop.permute.xlu0 %2637
      %2641 = vset.pattern.permute.xlu0 0
      %2642 = vperm.xlu0 %2641, %v2589
      %v2643 = vpop.permute.xlu0 %2642
      %2646 = vset.pattern.permute.xlu0 0
      %2647 = vperm.xlu0 %2646, %v2592
      %v2648 = vpop.permute.xlu0 %2647
      %2651 = vset.pattern.permute.xlu0 0
      %2652 = vperm.xlu0 %2651, %v2595
      %v2653 = vpop.permute.xlu0 %2652
      %2656 = vset.pattern.permute.xlu0 0
      %2657 = vperm.xlu0 %2656, %v2598
      %v2658 = vpop.permute.xlu0 %2657
      %2661 = vset.pattern.permute.xlu0 0
      %2662 = vperm.xlu0 %2661, %v2601
      %v2663 = vpop.permute.xlu0 %2662
      %2666 = vset.pattern.permute.xlu0 0
      %2667 = vperm.xlu0 %2666, %v2604
      %v2668 = vpop.permute.xlu0 %2667
      %2671 = vset.pattern.permute.xlu0 0
      %2672 = vperm.xlu0 %2671, %v2607
      %v2673 = vpop.permute.xlu0 %2672
      %2676 = vset.pattern.permute.xlu0 0
      %2677 = vperm.xlu0 %2676, %v2610
      %v2678 = vpop.permute.xlu0 %2677
      %2681 = vset.pattern.permute.xlu0 0
      %2682 = vperm.xlu0 %2681, %v2613
      %v2683 = vpop.permute.xlu0 %2682
      %2686 = vset.pattern.permute.xlu0 0
      %2687 = vperm.xlu0 %2686, %v2616
      %v2688 = vpop.permute.xlu0 %2687
      %2691 = vset.pattern.permute.xlu0 0
      %2692 = vperm.xlu0 %2691, %v2619
      %v2693 = vpop.permute.xlu0 %2692
      %2696 = vset.pattern.permute.xlu0 0
      %2697 = vperm.xlu0 %2696, %v2622
      %v2698 = vpop.permute.xlu0 %2697
      %2701 = vset.pattern.permute.xlu0 0
      %2702 = vperm.xlu0 %2701, %v2625
      %v2703 = vpop.permute.xlu0 %2702
      %2706 = vset.pattern.permute.xlu0 0
      %2707 = vperm.xlu0 %2706, %v2628
      %v2708 = vpop.permute.xlu0 %2707
      %v2710 = vmul.f32 %v2633, %v544
      %v2711 = vmul.f32 %v2638, %v545
      %v2712 = vmul.f32 %v2643, %v546
      %v2713 = vmul.f32 %v2648, %v547
      %v2714 = vmul.f32 %v2653, %v548
      %v2715 = vmul.f32 %v2658, %v549
      %v2716 = vmul.f32 %v2663, %v550
      %v2717 = vmul.f32 %v2668, %v551
      %v2718 = vmul.f32 %v2673, %v552
      %v2719 = vmul.f32 %v2678, %v553
      %v2720 = vmul.f32 %v2683, %v554
      %v2721 = vmul.f32 %v2688, %v555
      %v2722 = vmul.f32 %v2693, %v556
      %v2723 = vmul.f32 %v2698, %v557
      %v2724 = vmul.f32 %v2703, %v558
      %v2725 = vmul.f32 %v2708, %v559
      %v2726 = vsub.f32 %v2710, %v2583
      %v2727 = vsub.f32 %v2711, %v2586
      %v2728 = vsub.f32 %v2712, %v2589
      %v2729 = vsub.f32 %v2713, %v2592
      %v2730 = vsub.f32 %v2714, %v2595
      %v2731 = vsub.f32 %v2715, %v2598
      %v2732 = vsub.f32 %v2716, %v2601
      %v2733 = vsub.f32 %v2717, %v2604
      %v2734 = vsub.f32 %v2718, %v2607
      %v2735 = vsub.f32 %v2719, %v2610
      %v2736 = vsub.f32 %v2720, %v2613
      %v2737 = vsub.f32 %v2721, %v2616
      %v2738 = vsub.f32 %v2722, %v2619
      %v2739 = vsub.f32 %v2723, %v2622
      %v2740 = vsub.f32 %v2724, %v2625
      %v2741 = vsub.f32 %v2725, %v2628
      %2758 = vrot.lane.b32.xlu0 %v2726, 127
      %v2759 = vpop.permute.xlu0 %2758
      %2760 = vrot.lane.b32.xlu0 %v2727, 127
      %v2761 = vpop.permute.xlu0 %2760
      %2762 = vrot.lane.b32.xlu0 %v2728, 127
      %v2763 = vpop.permute.xlu0 %2762
      %2764 = vrot.lane.b32.xlu0 %v2729, 127
      %v2765 = vpop.permute.xlu0 %2764
      %2766 = vrot.lane.b32.xlu0 %v2730, 127
      %v2767 = vpop.permute.xlu0 %2766
      %2768 = vrot.lane.b32.xlu0 %v2731, 127
      %v2769 = vpop.permute.xlu0 %2768
      %2770 = vrot.lane.b32.xlu0 %v2732, 127
      %v2771 = vpop.permute.xlu0 %2770
      %2772 = vrot.lane.b32.xlu0 %v2733, 127
      %v2773 = vpop.permute.xlu0 %2772
      %2774 = vrot.lane.b32.xlu0 %v2734, 127
      %v2775 = vpop.permute.xlu0 %2774
      %2776 = vrot.lane.b32.xlu0 %v2735, 127
      %v2777 = vpop.permute.xlu0 %2776
      %2778 = vrot.lane.b32.xlu0 %v2736, 127
      %v2779 = vpop.permute.xlu0 %2778
      %2780 = vrot.lane.b32.xlu0 %v2737, 127
      %v2781 = vpop.permute.xlu0 %2780
      %2782 = vrot.lane.b32.xlu0 %v2738, 127
      %v2783 = vpop.permute.xlu0 %2782
      %2784 = vrot.lane.b32.xlu0 %v2739, 127
      %v2785 = vpop.permute.xlu0 %2784
      %2786 = vrot.lane.b32.xlu0 %v2740, 127
      %v2787 = vpop.permute.xlu0 %2786
      %2788 = vrot.lane.b32.xlu0 %v2741, 127
      %v2789 = vpop.permute.xlu0 %2788
      %v2790 = vsel %vm1491, %v2759, 0
      %v2792 = vsel %vm1491, %v2761, 0
      %v2794 = vsel %vm1491, %v2763, 0
      %v2796 = vsel %vm1491, %v2765, 0
      %v2798 = vsel %vm1491, %v2767, 0
      %v2800 = vsel %vm1491, %v2769, 0
      %v2802 = vsel %vm1491, %v2771, 0
      %v2804 = vsel %vm1491, %v2773, 0
      %v2806 = vsel %vm1491, %v2775, 0
      %v2808 = vsel %vm1491, %v2777, 0
      %v2810 = vsel %vm1491, %v2779, 0
      %v2812 = vsel %vm1491, %v2781, 0
      %v2814 = vsel %vm1491, %v2783, 0
      %v2816 = vsel %vm1491, %v2785, 0
      %v2818 = vsel %vm1491, %v2787, 0
      %v2820 = vsel %vm1491, %v2789, 0
      %v2823 = vsel %vm1524, %v989, 0
      %2825 = vmatpush.msra.mxu0 0.0
      %2826 = vmatpush.msra.mxu0 0.0
      %2827 = vmatpush.msra.mxu0 0.0
      %2828 = vmatpush.msra.mxu0 0.0
      %2829 = vmatpush.msra.mxu0 0.0
      %2830 = vmatpush.msra.mxu0 0.0
      %2831 = vmatpush.msra.mxu0 0.0
      %2832 = vmatpush.msra.mxu0 0.0
      %2833 = vmatpush.msra.mxu0 0.0
      %2834 = vmatpush.msra.mxu0 0.0
      %2835 = vmatpush.msra.mxu0 0.0
      %2836 = vmatpush.msra.mxu0 0.0
      %2837 = vmatpush.msra.mxu0 0.0
      %2838 = vmatpush.msra.mxu0 0.0
      %2839 = vmatpush.msra.mxu0 0.0
      %2840 = vmatpush.msra.mxu0 %v2823
      %2841 = vmatmul.f32.gmra.mxu0 %v2790
      %v2842 = vpop.f32.mrf.mxu0
      %v2843 = vadd.f32 0.0, %v2842
      %2844 = vmatmul.f32.gmra.mxu0 %v2792
      %v2845 = vpop.f32.mrf.mxu0
      %v2846 = vadd.f32 0.0, %v2845
      %2847 = vmatmul.f32.gmra.mxu0 %v2794
      %v2848 = vpop.f32.mrf.mxu0
      %v2849 = vadd.f32 0.0, %v2848
      %2850 = vmatmul.f32.gmra.mxu0 %v2796
      %v2851 = vpop.f32.mrf.mxu0
      %v2852 = vadd.f32 0.0, %v2851
      %2853 = vmatmul.f32.gmra.mxu0 %v2798
      %v2854 = vpop.f32.mrf.mxu0
      %v2855 = vadd.f32 0.0, %v2854
      %2856 = vmatmul.f32.gmra.mxu0 %v2800
      %v2857 = vpop.f32.mrf.mxu0
      %v2858 = vadd.f32 0.0, %v2857
      %2859 = vmatmul.f32.gmra.mxu0 %v2802
      %v2860 = vpop.f32.mrf.mxu0
      %v2861 = vadd.f32 0.0, %v2860
      %2862 = vmatmul.f32.gmra.mxu0 %v2804
      %v2863 = vpop.f32.mrf.mxu0
      %v2864 = vadd.f32 0.0, %v2863
      %2865 = vmatmul.f32.gmra.mxu0 %v2806
      %v2866 = vpop.f32.mrf.mxu0
      %v2867 = vadd.f32 0.0, %v2866
      %2868 = vmatmul.f32.gmra.mxu0 %v2808
      %v2869 = vpop.f32.mrf.mxu0
      %v2870 = vadd.f32 0.0, %v2869
      %2871 = vmatmul.f32.gmra.mxu0 %v2810
      %v2872 = vpop.f32.mrf.mxu0
      %v2873 = vadd.f32 0.0, %v2872
      %2874 = vmatmul.f32.gmra.mxu0 %v2812
      %v2875 = vpop.f32.mrf.mxu0
      %v2876 = vadd.f32 0.0, %v2875
      %2877 = vmatmul.f32.gmra.mxu0 %v2814
      %v2878 = vpop.f32.mrf.mxu0
      %v2879 = vadd.f32 0.0, %v2878
      %2880 = vmatmul.f32.gmra.mxu0 %v2816
      %v2881 = vpop.f32.mrf.mxu0
      %v2882 = vadd.f32 0.0, %v2881
      %2883 = vmatmul.f32.gmra.mxu0 %v2818
      %v2884 = vpop.f32.mrf.mxu0
      %v2885 = vadd.f32 0.0, %v2884
      %2886 = vmatmul.f32.gmra.mxu0 %v2820
      %v2887 = vpop.f32.mrf.mxu0
      %v2888 = vadd.f32 0.0, %v2887
      %2889 = vdwg.mxu0
      %v2890 = vadd.f32 %v2501, %v2843
      %v2891 = vadd.f32 %v2502, %v2846
      %v2892 = vadd.f32 %v2503, %v2849
      %v2893 = vadd.f32 %v2504, %v2852
      %v2894 = vadd.f32 %v2505, %v2855
      %v2895 = vadd.f32 %v2506, %v2858
      %v2896 = vadd.f32 %v2507, %v2861
      %v2897 = vadd.f32 %v2508, %v2864
      %v2898 = vadd.f32 %v2509, %v2867
      %v2899 = vadd.f32 %v2510, %v2870
      %v2900 = vadd.f32 %v2511, %v2873
      %v2901 = vadd.f32 %v2512, %v2876
      %v2902 = vadd.f32 %v2513, %v2879
      %v2903 = vadd.f32 %v2514, %v2882
      %v2904 = vadd.f32 %v2515, %v2885
      %v2905 = vadd.f32 %v2516, %v2888
      %vm2906 = vcmp.eq.f32.partialorder %v972, 6.0
      %vm2907 = vcmp.eq.f32.partialorder %v973, 6.0
      %vm2908 = vcmp.eq.f32.partialorder %v974, 6.0
      %vm2909 = vcmp.eq.f32.partialorder %v975, 6.0
      %vm2910 = vcmp.eq.f32.partialorder %v976, 6.0
      %vm2911 = vcmp.eq.f32.partialorder %v977, 6.0
      %vm2912 = vcmp.eq.f32.partialorder %v978, 6.0
      %vm2913 = vcmp.eq.f32.partialorder %v979, 6.0
      %vm2914 = vcmp.eq.f32.partialorder %v980, 6.0
      %vm2915 = vcmp.eq.f32.partialorder %v981, 6.0
      %vm2916 = vcmp.eq.f32.partialorder %v982, 6.0
      %vm2917 = vcmp.eq.f32.partialorder %v983, 6.0
      %vm2918 = vcmp.eq.f32.partialorder %v984, 6.0
      %vm2919 = vcmp.eq.f32.partialorder %v985, 6.0
      %vm2920 = vcmp.eq.f32.partialorder %v986, 6.0
      %vm2921 = vcmp.eq.f32.partialorder %v987, 6.0
      %v2922 = vsel %vm2906, 1, 0
      %v2923 = vsel %vm2907, 1, 0
      %v2924 = vsel %vm2908, 1, 0
      %v2925 = vsel %vm2909, 1, 0
      %v2926 = vsel %vm2910, 1, 0
      %v2927 = vsel %vm2911, 1, 0
      %v2928 = vsel %vm2912, 1, 0
      %v2929 = vsel %vm2913, 1, 0
      %v2930 = vsel %vm2914, 1, 0
      %v2931 = vsel %vm2915, 1, 0
      %v2932 = vsel %vm2916, 1, 0
      %v2933 = vsel %vm2917, 1, 0
      %v2934 = vsel %vm2918, 1, 0
      %v2935 = vsel %vm2919, 1, 0
      %v2936 = vsel %vm2920, 1, 0
      %v2937 = vsel %vm2921, 1, 0
      %v2938 = vcvt.s32.f32 %v2922
      %v2939 = vcvt.s32.f32 %v2923
      %v2940 = vcvt.s32.f32 %v2924
      %v2941 = vcvt.s32.f32 %v2925
      %v2942 = vcvt.s32.f32 %v2926
      %v2943 = vcvt.s32.f32 %v2927
      %v2944 = vcvt.s32.f32 %v2928
      %v2945 = vcvt.s32.f32 %v2929
      %v2946 = vcvt.s32.f32 %v2930
      %v2947 = vcvt.s32.f32 %v2931
      %v2948 = vcvt.s32.f32 %v2932
      %v2949 = vcvt.s32.f32 %v2933
      %v2950 = vcvt.s32.f32 %v2934
      %v2951 = vcvt.s32.f32 %v2935
      %v2952 = vcvt.s32.f32 %v2936
      %v2953 = vcvt.s32.f32 %v2937
      %2954 = vmatpush.msra.mxu0 %v576
      %2955 = vmatpush.msra.mxu0 %v575
      %2956 = vmatpush.msra.mxu0 %v574
      %2957 = vmatpush.msra.mxu0 %v573
      %2958 = vmatpush.msra.mxu0 %v572
      %2959 = vmatpush.msra.mxu0 %v571
      %2960 = vmatpush.msra.mxu0 %v570
      %2961 = vmatpush.msra.mxu0 %v569
      %2962 = vmatpush.msra.mxu0 %v568
      %2963 = vmatpush.msra.mxu0 %v567
      %2964 = vmatpush.msra.mxu0 %v566
      %2965 = vmatpush.msra.mxu0 %v565
      %2966 = vmatpush.msra.mxu0 %v564
      %2967 = vmatpush.msra.mxu0 %v563
      %2968 = vmatpush.msra.mxu0 %v562
      %2969 = vmatpush.msra.mxu0 %v561
      %2970 = vmatmul.f32.gmra.mxu0 %v2938
      %v2971 = vpop.f32.mrf.mxu0
      %v2972 = vadd.f32 0.0, %v2971
      %2973 = vmatmul.f32.gmra.mxu0 %v2939
      %v2974 = vpop.f32.mrf.mxu0
      %v2975 = vadd.f32 0.0, %v2974
      %2976 = vmatmul.f32.gmra.mxu0 %v2940
      %v2977 = vpop.f32.mrf.mxu0
      %v2978 = vadd.f32 0.0, %v2977
      %2979 = vmatmul.f32.gmra.mxu0 %v2941
      %v2980 = vpop.f32.mrf.mxu0
      %v2981 = vadd.f32 0.0, %v2980
      %2982 = vmatmul.f32.gmra.mxu0 %v2942
      %v2983 = vpop.f32.mrf.mxu0
      %v2984 = vadd.f32 0.0, %v2983
      %2985 = vmatmul.f32.gmra.mxu0 %v2943
      %v2986 = vpop.f32.mrf.mxu0
      %v2987 = vadd.f32 0.0, %v2986
      %2988 = vmatmul.f32.gmra.mxu0 %v2944
      %v2989 = vpop.f32.mrf.mxu0
      %v2990 = vadd.f32 0.0, %v2989
      %2991 = vmatmul.f32.gmra.mxu0 %v2945
      %v2992 = vpop.f32.mrf.mxu0
      %v2993 = vadd.f32 0.0, %v2992
      %2994 = vmatmul.f32.gmra.mxu0 %v2946
      %v2995 = vpop.f32.mrf.mxu0
      %v2996 = vadd.f32 0.0, %v2995
      %2997 = vmatmul.f32.gmra.mxu0 %v2947
      %v2998 = vpop.f32.mrf.mxu0
      %v2999 = vadd.f32 0.0, %v2998
      %3000 = vmatmul.f32.gmra.mxu0 %v2948
      %v3001 = vpop.f32.mrf.mxu0
      %v3002 = vadd.f32 0.0, %v3001
      %3003 = vmatmul.f32.gmra.mxu0 %v2949
      %v3004 = vpop.f32.mrf.mxu0
      %v3005 = vadd.f32 0.0, %v3004
      %3006 = vmatmul.f32.gmra.mxu0 %v2950
      %v3007 = vpop.f32.mrf.mxu0
      %v3008 = vadd.f32 0.0, %v3007
      %3009 = vmatmul.f32.gmra.mxu0 %v2951
      %v3010 = vpop.f32.mrf.mxu0
      %v3011 = vadd.f32 0.0, %v3010
      %3012 = vmatmul.f32.gmra.mxu0 %v2952
      %v3013 = vpop.f32.mrf.mxu0
      %v3014 = vadd.f32 0.0, %v3013
      %3015 = vmatmul.f32.gmra.mxu0 %v2953
      %v3016 = vpop.f32.mrf.mxu0
      %v3017 = vadd.f32 0.0, %v3016
      %3018 = vdwg.mxu0
      %3020 = vset.pattern.permute.xlu0 0
      %3021 = vperm.xlu0 %3020, %v2972
      %v3022 = vpop.permute.xlu0 %3021
      %3025 = vset.pattern.permute.xlu0 0
      %3026 = vperm.xlu0 %3025, %v2975
      %v3027 = vpop.permute.xlu0 %3026
      %3030 = vset.pattern.permute.xlu0 0
      %3031 = vperm.xlu0 %3030, %v2978
      %v3032 = vpop.permute.xlu0 %3031
      %3035 = vset.pattern.permute.xlu0 0
      %3036 = vperm.xlu0 %3035, %v2981
      %v3037 = vpop.permute.xlu0 %3036
      %3040 = vset.pattern.permute.xlu0 0
      %3041 = vperm.xlu0 %3040, %v2984
      %v3042 = vpop.permute.xlu0 %3041
      %3045 = vset.pattern.permute.xlu0 0
      %3046 = vperm.xlu0 %3045, %v2987
      %v3047 = vpop.permute.xlu0 %3046
      %3050 = vset.pattern.permute.xlu0 0
      %3051 = vperm.xlu0 %3050, %v2990
      %v3052 = vpop.permute.xlu0 %3051
      %3055 = vset.pattern.permute.xlu0 0
      %3056 = vperm.xlu0 %3055, %v2993
      %v3057 = vpop.permute.xlu0 %3056
      %3060 = vset.pattern.permute.xlu0 0
      %3061 = vperm.xlu0 %3060, %v2996
      %v3062 = vpop.permute.xlu0 %3061
      %3065 = vset.pattern.permute.xlu0 0
      %3066 = vperm.xlu0 %3065, %v2999
      %v3067 = vpop.permute.xlu0 %3066
      %3070 = vset.pattern.permute.xlu0 0
      %3071 = vperm.xlu0 %3070, %v3002
      %v3072 = vpop.permute.xlu0 %3071
      %3075 = vset.pattern.permute.xlu0 0
      %3076 = vperm.xlu0 %3075, %v3005
      %v3077 = vpop.permute.xlu0 %3076
      %3080 = vset.pattern.permute.xlu0 0
      %3081 = vperm.xlu0 %3080, %v3008
      %v3082 = vpop.permute.xlu0 %3081
      %3085 = vset.pattern.permute.xlu0 0
      %3086 = vperm.xlu0 %3085, %v3011
      %v3087 = vpop.permute.xlu0 %3086
      %3090 = vset.pattern.permute.xlu0 0
      %3091 = vperm.xlu0 %3090, %v3014
      %v3092 = vpop.permute.xlu0 %3091
      %3095 = vset.pattern.permute.xlu0 0
      %3096 = vperm.xlu0 %3095, %v3017
      %v3097 = vpop.permute.xlu0 %3096
      %v3099 = vmul.f32 %v3022, %v544
      %v3100 = vmul.f32 %v3027, %v545
      %v3101 = vmul.f32 %v3032, %v546
      %v3102 = vmul.f32 %v3037, %v547
      %v3103 = vmul.f32 %v3042, %v548
      %v3104 = vmul.f32 %v3047, %v549
      %v3105 = vmul.f32 %v3052, %v550
      %v3106 = vmul.f32 %v3057, %v551
      %v3107 = vmul.f32 %v3062, %v552
      %v3108 = vmul.f32 %v3067, %v553
      %v3109 = vmul.f32 %v3072, %v554
      %v3110 = vmul.f32 %v3077, %v555
      %v3111 = vmul.f32 %v3082, %v556
      %v3112 = vmul.f32 %v3087, %v557
      %v3113 = vmul.f32 %v3092, %v558
      %v3114 = vmul.f32 %v3097, %v559
      %v3115 = vsub.f32 %v3099, %v2972
      %v3116 = vsub.f32 %v3100, %v2975
      %v3117 = vsub.f32 %v3101, %v2978
      %v3118 = vsub.f32 %v3102, %v2981
      %v3119 = vsub.f32 %v3103, %v2984
      %v3120 = vsub.f32 %v3104, %v2987
      %v3121 = vsub.f32 %v3105, %v2990
      %v3122 = vsub.f32 %v3106, %v2993
      %v3123 = vsub.f32 %v3107, %v2996
      %v3124 = vsub.f32 %v3108, %v2999
      %v3125 = vsub.f32 %v3109, %v3002
      %v3126 = vsub.f32 %v3110, %v3005
      %v3127 = vsub.f32 %v3111, %v3008
      %v3128 = vsub.f32 %v3112, %v3011
      %v3129 = vsub.f32 %v3113, %v3014
      %v3130 = vsub.f32 %v3114, %v3017
      %3147 = vrot.lane.b32.xlu0 %v3115, 127
      %v3148 = vpop.permute.xlu0 %3147
      %3149 = vrot.lane.b32.xlu0 %v3116, 127
      %v3150 = vpop.permute.xlu0 %3149
      %3151 = vrot.lane.b32.xlu0 %v3117, 127
      %v3152 = vpop.permute.xlu0 %3151
      %3153 = vrot.lane.b32.xlu0 %v3118, 127
      %v3154 = vpop.permute.xlu0 %3153
      %3155 = vrot.lane.b32.xlu0 %v3119, 127
      %v3156 = vpop.permute.xlu0 %3155
      %3157 = vrot.lane.b32.xlu0 %v3120, 127
      %v3158 = vpop.permute.xlu0 %3157
      %3159 = vrot.lane.b32.xlu0 %v3121, 127
      %v3160 = vpop.permute.xlu0 %3159
      %3161 = vrot.lane.b32.xlu0 %v3122, 127
      %v3162 = vpop.permute.xlu0 %3161
      %3163 = vrot.lane.b32.xlu0 %v3123, 127
      %v3164 = vpop.permute.xlu0 %3163
      %3165 = vrot.lane.b32.xlu0 %v3124, 127
      %v3166 = vpop.permute.xlu0 %3165
      %3167 = vrot.lane.b32.xlu0 %v3125, 127
      %v3168 = vpop.permute.xlu0 %3167
      %3169 = vrot.lane.b32.xlu0 %v3126, 127
      %v3170 = vpop.permute.xlu0 %3169
      %3171 = vrot.lane.b32.xlu0 %v3127, 127
      %v3172 = vpop.permute.xlu0 %3171
      %3173 = vrot.lane.b32.xlu0 %v3128, 127
      %v3174 = vpop.permute.xlu0 %3173
      %3175 = vrot.lane.b32.xlu0 %v3129, 127
      %v3176 = vpop.permute.xlu0 %3175
      %3177 = vrot.lane.b32.xlu0 %v3130, 127
      %v3178 = vpop.permute.xlu0 %3177
      %v3179 = vrot.slane %v989, 2
      %v3180 = vsel %vm1491, %v3148, 0
      %v3182 = vsel %vm1491, %v3150, 0
      %v3184 = vsel %vm1491, %v3152, 0
      %v3186 = vsel %vm1491, %v3154, 0
      %v3188 = vsel %vm1491, %v3156, 0
      %v3190 = vsel %vm1491, %v3158, 0
      %v3192 = vsel %vm1491, %v3160, 0
      %v3194 = vsel %vm1491, %v3162, 0
      %v3196 = vsel %vm1491, %v3164, 0
      %v3198 = vsel %vm1491, %v3166, 0
      %v3200 = vsel %vm1491, %v3168, 0
      %v3202 = vsel %vm1491, %v3170, 0
      %v3204 = vsel %vm1491, %v3172, 0
      %v3206 = vsel %vm1491, %v3174, 0
      %v3208 = vsel %vm1491, %v3176, 0
      %v3210 = vsel %vm1491, %v3178, 0
      %v3212 = vsel %vm1524, %v3179, 0
      %3214 = vmatpush.msra.mxu0 0.0
      %3215 = vmatpush.msra.mxu0 0.0
      %3216 = vmatpush.msra.mxu0 0.0
      %3217 = vmatpush.msra.mxu0 0.0
      %3218 = vmatpush.msra.mxu0 0.0
      %3219 = vmatpush.msra.mxu0 0.0
      %3220 = vmatpush.msra.mxu0 0.0
      %3221 = vmatpush.msra.mxu0 0.0
      %3222 = vmatpush.msra.mxu0 0.0
      %3223 = vmatpush.msra.mxu0 0.0
      %3224 = vmatpush.msra.mxu0 0.0
      %3225 = vmatpush.msra.mxu0 0.0
      %3226 = vmatpush.msra.mxu0 0.0
      %3227 = vmatpush.msra.mxu0 0.0
      %3228 = vmatpush.msra.mxu0 0.0
      %3229 = vmatpush.msra.mxu0 %v3212
      %3230 = vmatmul.f32.gmra.mxu0 %v3180
      %v3231 = vpop.f32.mrf.mxu0
      %v3232 = vadd.f32 0.0, %v3231
      %3233 = vmatmul.f32.gmra.mxu0 %v3182
      %v3234 = vpop.f32.mrf.mxu0
      %v3235 = vadd.f32 0.0, %v3234
      %3236 = vmatmul.f32.gmra.mxu0 %v3184
      %v3237 = vpop.f32.mrf.mxu0
      %v3238 = vadd.f32 0.0, %v3237
      %3239 = vmatmul.f32.gmra.mxu0 %v3186
      %v3240 = vpop.f32.mrf.mxu0
      %v3241 = vadd.f32 0.0, %v3240
      %3242 = vmatmul.f32.gmra.mxu0 %v3188
      %v3243 = vpop.f32.mrf.mxu0
      %v3244 = vadd.f32 0.0, %v3243
      %3245 = vmatmul.f32.gmra.mxu0 %v3190
      %v3246 = vpop.f32.mrf.mxu0
      %v3247 = vadd.f32 0.0, %v3246
      %3248 = vmatmul.f32.gmra.mxu0 %v3192
      %v3249 = vpop.f32.mrf.mxu0
      %v3250 = vadd.f32 0.0, %v3249
      %3251 = vmatmul.f32.gmra.mxu0 %v3194
      %v3252 = vpop.f32.mrf.mxu0
      %v3253 = vadd.f32 0.0, %v3252
      %3254 = vmatmul.f32.gmra.mxu0 %v3196
      %v3255 = vpop.f32.mrf.mxu0
      %v3256 = vadd.f32 0.0, %v3255
      %3257 = vmatmul.f32.gmra.mxu0 %v3198
      %v3258 = vpop.f32.mrf.mxu0
      %v3259 = vadd.f32 0.0, %v3258
      %3260 = vmatmul.f32.gmra.mxu0 %v3200
      %v3261 = vpop.f32.mrf.mxu0
      %v3262 = vadd.f32 0.0, %v3261
      %3263 = vmatmul.f32.gmra.mxu0 %v3202
      %v3264 = vpop.f32.mrf.mxu0
      %v3265 = vadd.f32 0.0, %v3264
      %3266 = vmatmul.f32.gmra.mxu0 %v3204
      %v3267 = vpop.f32.mrf.mxu0
      %v3268 = vadd.f32 0.0, %v3267
      %3269 = vmatmul.f32.gmra.mxu0 %v3206
      %v3270 = vpop.f32.mrf.mxu0
      %v3271 = vadd.f32 0.0, %v3270
      %3272 = vmatmul.f32.gmra.mxu0 %v3208
      %v3273 = vpop.f32.mrf.mxu0
      %v3274 = vadd.f32 0.0, %v3273
      %3275 = vmatmul.f32.gmra.mxu0 %v3210
      %v3276 = vpop.f32.mrf.mxu0
      %v3277 = vadd.f32 0.0, %v3276
      %3278 = vdwg.mxu0
      %v3279 = vadd.f32 %v2890, %v3232
      %v3280 = vadd.f32 %v2891, %v3235
      %v3281 = vadd.f32 %v2892, %v3238
      %v3282 = vadd.f32 %v2893, %v3241
      %v3283 = vadd.f32 %v2894, %v3244
      %v3284 = vadd.f32 %v2895, %v3247
      %v3285 = vadd.f32 %v2896, %v3250
      %v3286 = vadd.f32 %v2897, %v3253
      %v3287 = vadd.f32 %v2898, %v3256
      %v3288 = vadd.f32 %v2899, %v3259
      %v3289 = vadd.f32 %v2900, %v3262
      %v3290 = vadd.f32 %v2901, %v3265
      %v3291 = vadd.f32 %v2902, %v3268
      %v3292 = vadd.f32 %v2903, %v3271
      %v3293 = vadd.f32 %v2904, %v3274
      %v3294 = vadd.f32 %v2905, %v3277
      %vm3295 = vcmp.eq.f32.partialorder %v972, 7.0
      %vm3296 = vcmp.eq.f32.partialorder %v973, 7.0
      %vm3297 = vcmp.eq.f32.partialorder %v974, 7.0
      %vm3298 = vcmp.eq.f32.partialorder %v975, 7.0
      %vm3299 = vcmp.eq.f32.partialorder %v976, 7.0
      %vm3300 = vcmp.eq.f32.partialorder %v977, 7.0
      %vm3301 = vcmp.eq.f32.partialorder %v978, 7.0
      %vm3302 = vcmp.eq.f32.partialorder %v979, 7.0
      %vm3303 = vcmp.eq.f32.partialorder %v980, 7.0
      %vm3304 = vcmp.eq.f32.partialorder %v981, 7.0
      %vm3305 = vcmp.eq.f32.partialorder %v982, 7.0
      %vm3306 = vcmp.eq.f32.partialorder %v983, 7.0
      %vm3307 = vcmp.eq.f32.partialorder %v984, 7.0
      %vm3308 = vcmp.eq.f32.partialorder %v985, 7.0
      %vm3309 = vcmp.eq.f32.partialorder %v986, 7.0
      %vm3310 = vcmp.eq.f32.partialorder %v987, 7.0
      %v3311 = vsel %vm3295, 1, 0
      %v3312 = vsel %vm3296, 1, 0
      %v3313 = vsel %vm3297, 1, 0
      %v3314 = vsel %vm3298, 1, 0
      %v3315 = vsel %vm3299, 1, 0
      %v3316 = vsel %vm3300, 1, 0
      %v3317 = vsel %vm3301, 1, 0
      %v3318 = vsel %vm3302, 1, 0
      %v3319 = vsel %vm3303, 1, 0
      %v3320 = vsel %vm3304, 1, 0
      %v3321 = vsel %vm3305, 1, 0
      %v3322 = vsel %vm3306, 1, 0
      %v3323 = vsel %vm3307, 1, 0
      %v3324 = vsel %vm3308, 1, 0
      %v3325 = vsel %vm3309, 1, 0
      %v3326 = vsel %vm3310, 1, 0
      %v3327 = vcvt.s32.f32 %v3311
      %v3328 = vcvt.s32.f32 %v3312
      %v3329 = vcvt.s32.f32 %v3313
      %v3330 = vcvt.s32.f32 %v3314
      %v3331 = vcvt.s32.f32 %v3315
      %v3332 = vcvt.s32.f32 %v3316
      %v3333 = vcvt.s32.f32 %v3317
      %v3334 = vcvt.s32.f32 %v3318
      %v3335 = vcvt.s32.f32 %v3319
      %v3336 = vcvt.s32.f32 %v3320
      %v3337 = vcvt.s32.f32 %v3321
      %v3338 = vcvt.s32.f32 %v3322
      %v3339 = vcvt.s32.f32 %v3323
      %v3340 = vcvt.s32.f32 %v3324
      %v3341 = vcvt.s32.f32 %v3325
      %v3342 = vcvt.s32.f32 %v3326
      %3343 = vmatpush.msra.mxu0 %v576
      %3344 = vmatpush.msra.mxu0 %v575
      %3345 = vmatpush.msra.mxu0 %v574
      %3346 = vmatpush.msra.mxu0 %v573
      %3347 = vmatpush.msra.mxu0 %v572
      %3348 = vmatpush.msra.mxu0 %v571
      %3349 = vmatpush.msra.mxu0 %v570
      %3350 = vmatpush.msra.mxu0 %v569
      %3351 = vmatpush.msra.mxu0 %v568
      %3352 = vmatpush.msra.mxu0 %v567
      %3353 = vmatpush.msra.mxu0 %v566
      %3354 = vmatpush.msra.mxu0 %v565
      %3355 = vmatpush.msra.mxu0 %v564
      %3356 = vmatpush.msra.mxu0 %v563
      %3357 = vmatpush.msra.mxu0 %v562
      %3358 = vmatpush.msra.mxu0 %v561
      %3359 = vmatmul.f32.gmra.mxu0 %v3327
      %v3360 = vpop.f32.mrf.mxu0
      %v3361 = vadd.f32 0.0, %v3360
      %3362 = vmatmul.f32.gmra.mxu0 %v3328
      %v3363 = vpop.f32.mrf.mxu0
      %v3364 = vadd.f32 0.0, %v3363
      %3365 = vmatmul.f32.gmra.mxu0 %v3329
      %v3366 = vpop.f32.mrf.mxu0
      %v3367 = vadd.f32 0.0, %v3366
      %3368 = vmatmul.f32.gmra.mxu0 %v3330
      %v3369 = vpop.f32.mrf.mxu0
      %v3370 = vadd.f32 0.0, %v3369
      %3371 = vmatmul.f32.gmra.mxu0 %v3331
      %v3372 = vpop.f32.mrf.mxu0
      %v3373 = vadd.f32 0.0, %v3372
      %3374 = vmatmul.f32.gmra.mxu0 %v3332
      %v3375 = vpop.f32.mrf.mxu0
      %v3376 = vadd.f32 0.0, %v3375
      %3377 = vmatmul.f32.gmra.mxu0 %v3333
      %v3378 = vpop.f32.mrf.mxu0
      %v3379 = vadd.f32 0.0, %v3378
      %3380 = vmatmul.f32.gmra.mxu0 %v3334
      %v3381 = vpop.f32.mrf.mxu0
      %v3382 = vadd.f32 0.0, %v3381
      %3383 = vmatmul.f32.gmra.mxu0 %v3335
      %v3384 = vpop.f32.mrf.mxu0
      %v3385 = vadd.f32 0.0, %v3384
      %3386 = vmatmul.f32.gmra.mxu0 %v3336
      %v3387 = vpop.f32.mrf.mxu0
      %v3388 = vadd.f32 0.0, %v3387
      %3389 = vmatmul.f32.gmra.mxu0 %v3337
      %v3390 = vpop.f32.mrf.mxu0
      %v3391 = vadd.f32 0.0, %v3390
      %3392 = vmatmul.f32.gmra.mxu0 %v3338
      %v3393 = vpop.f32.mrf.mxu0
      %v3394 = vadd.f32 0.0, %v3393
      %3395 = vmatmul.f32.gmra.mxu0 %v3339
      %v3396 = vpop.f32.mrf.mxu0
      %v3397 = vadd.f32 0.0, %v3396
      %3398 = vmatmul.f32.gmra.mxu0 %v3340
      %v3399 = vpop.f32.mrf.mxu0
      %v3400 = vadd.f32 0.0, %v3399
      %3401 = vmatmul.f32.gmra.mxu0 %v3341
      %v3402 = vpop.f32.mrf.mxu0
      %v3403 = vadd.f32 0.0, %v3402
      %3404 = vmatmul.f32.gmra.mxu0 %v3342
      %v3405 = vpop.f32.mrf.mxu0
      %v3406 = vadd.f32 0.0, %v3405
      %3407 = vdwg.mxu0
      %3409 = vset.pattern.permute.xlu0 0
      %3410 = vperm.xlu0 %3409, %v3361
      %v3411 = vpop.permute.xlu0 %3410
      %3414 = vset.pattern.permute.xlu0 0
      %3415 = vperm.xlu0 %3414, %v3364
      %v3416 = vpop.permute.xlu0 %3415
      %3419 = vset.pattern.permute.xlu0 0
      %3420 = vperm.xlu0 %3419, %v3367
      %v3421 = vpop.permute.xlu0 %3420
      %3424 = vset.pattern.permute.xlu0 0
      %3425 = vperm.xlu0 %3424, %v3370
      %v3426 = vpop.permute.xlu0 %3425
      %3429 = vset.pattern.permute.xlu0 0
      %3430 = vperm.xlu0 %3429, %v3373
      %v3431 = vpop.permute.xlu0 %3430
      %3434 = vset.pattern.permute.xlu0 0
      %3435 = vperm.xlu0 %3434, %v3376
      %v3436 = vpop.permute.xlu0 %3435
      %3439 = vset.pattern.permute.xlu0 0
      %3440 = vperm.xlu0 %3439, %v3379
      %v3441 = vpop.permute.xlu0 %3440
      %3444 = vset.pattern.permute.xlu0 0
      %3445 = vperm.xlu0 %3444, %v3382
      %v3446 = vpop.permute.xlu0 %3445
      %3449 = vset.pattern.permute.xlu0 0
      %3450 = vperm.xlu0 %3449, %v3385
      %v3451 = vpop.permute.xlu0 %3450
      %3454 = vset.pattern.permute.xlu0 0
      %3455 = vperm.xlu0 %3454, %v3388
      %v3456 = vpop.permute.xlu0 %3455
      %3459 = vset.pattern.permute.xlu0 0
      %3460 = vperm.xlu0 %3459, %v3391
      %v3461 = vpop.permute.xlu0 %3460
      %3464 = vset.pattern.permute.xlu0 0
      %3465 = vperm.xlu0 %3464, %v3394
      %v3466 = vpop.permute.xlu0 %3465
      %3469 = vset.pattern.permute.xlu0 0
      %3470 = vperm.xlu0 %3469, %v3397
      %v3471 = vpop.permute.xlu0 %3470
      %3474 = vset.pattern.permute.xlu0 0
      %3475 = vperm.xlu0 %3474, %v3400
      %v3476 = vpop.permute.xlu0 %3475
      %3479 = vset.pattern.permute.xlu0 0
      %3480 = vperm.xlu0 %3479, %v3403
      %v3481 = vpop.permute.xlu0 %3480
      %3484 = vset.pattern.permute.xlu0 0
      %3485 = vperm.xlu0 %3484, %v3406
      %v3486 = vpop.permute.xlu0 %3485
      %v3488 = vmul.f32 %v3411, %v544
      %v3489 = vmul.f32 %v3416, %v545
      %v3490 = vmul.f32 %v3421, %v546
      %v3491 = vmul.f32 %v3426, %v547
      %v3492 = vmul.f32 %v3431, %v548
      %v3493 = vmul.f32 %v3436, %v549
      %v3494 = vmul.f32 %v3441, %v550
      %v3495 = vmul.f32 %v3446, %v551
      %v3496 = vmul.f32 %v3451, %v552
      %v3497 = vmul.f32 %v3456, %v553
      %v3498 = vmul.f32 %v3461, %v554
      %v3499 = vmul.f32 %v3466, %v555
      %v3500 = vmul.f32 %v3471, %v556
      %v3501 = vmul.f32 %v3476, %v557
      %v3502 = vmul.f32 %v3481, %v558
      %v3503 = vmul.f32 %v3486, %v559
      %v3504 = vsub.f32 %v3488, %v3361
      %v3505 = vsub.f32 %v3489, %v3364
      %v3506 = vsub.f32 %v3490, %v3367
      %v3507 = vsub.f32 %v3491, %v3370
      %v3508 = vsub.f32 %v3492, %v3373
      %v3509 = vsub.f32 %v3493, %v3376
      %v3510 = vsub.f32 %v3494, %v3379
      %v3511 = vsub.f32 %v3495, %v3382
      %v3512 = vsub.f32 %v3496, %v3385
      %v3513 = vsub.f32 %v3497, %v3388
      %v3514 = vsub.f32 %v3498, %v3391
      %v3515 = vsub.f32 %v3499, %v3394
      %v3516 = vsub.f32 %v3500, %v3397
      %v3517 = vsub.f32 %v3501, %v3400
      %v3518 = vsub.f32 %v3502, %v3403
      %v3519 = vsub.f32 %v3503, %v3406
      %3536 = vrot.lane.b32.xlu0 %v3504, 127
      %v3537 = vpop.permute.xlu0 %3536
      %3538 = vrot.lane.b32.xlu0 %v3505, 127
      %v3539 = vpop.permute.xlu0 %3538
      %3540 = vrot.lane.b32.xlu0 %v3506, 127
      %v3541 = vpop.permute.xlu0 %3540
      %3542 = vrot.lane.b32.xlu0 %v3507, 127
      %v3543 = vpop.permute.xlu0 %3542
      %3544 = vrot.lane.b32.xlu0 %v3508, 127
      %v3545 = vpop.permute.xlu0 %3544
      %3546 = vrot.lane.b32.xlu0 %v3509, 127
      %v3547 = vpop.permute.xlu0 %3546
      %3548 = vrot.lane.b32.xlu0 %v3510, 127
      %v3549 = vpop.permute.xlu0 %3548
      %3550 = vrot.lane.b32.xlu0 %v3511, 127
      %v3551 = vpop.permute.xlu0 %3550
      %3552 = vrot.lane.b32.xlu0 %v3512, 127
      %v3553 = vpop.permute.xlu0 %3552
      %3554 = vrot.lane.b32.xlu0 %v3513, 127
      %v3555 = vpop.permute.xlu0 %3554
      %3556 = vrot.lane.b32.xlu0 %v3514, 127
      %v3557 = vpop.permute.xlu0 %3556
      %3558 = vrot.lane.b32.xlu0 %v3515, 127
      %v3559 = vpop.permute.xlu0 %3558
      %3560 = vrot.lane.b32.xlu0 %v3516, 127
      %v3561 = vpop.permute.xlu0 %3560
      %3562 = vrot.lane.b32.xlu0 %v3517, 127
      %v3563 = vpop.permute.xlu0 %3562
      %3564 = vrot.lane.b32.xlu0 %v3518, 127
      %v3565 = vpop.permute.xlu0 %3564
      %3566 = vrot.lane.b32.xlu0 %v3519, 127
      %v3567 = vpop.permute.xlu0 %3566
      %v3568 = vrot.slane %v989, 4
      %v3569 = vsel %vm1491, %v3537, 0
      %v3571 = vsel %vm1491, %v3539, 0
      %v3573 = vsel %vm1491, %v3541, 0
      %v3575 = vsel %vm1491, %v3543, 0
      %v3577 = vsel %vm1491, %v3545, 0
      %v3579 = vsel %vm1491, %v3547, 0
      %v3581 = vsel %vm1491, %v3549, 0
      %v3583 = vsel %vm1491, %v3551, 0
      %v3585 = vsel %vm1491, %v3553, 0
      %v3587 = vsel %vm1491, %v3555, 0
      %v3589 = vsel %vm1491, %v3557, 0
      %v3591 = vsel %vm1491, %v3559, 0
      %v3593 = vsel %vm1491, %v3561, 0
      %v3595 = vsel %vm1491, %v3563, 0
      %v3597 = vsel %vm1491, %v3565, 0
      %v3599 = vsel %vm1491, %v3567, 0
      %v3601 = vsel %vm1524, %v3568, 0
      %3603 = vmatpush.msra.mxu0 0.0
      %3604 = vmatpush.msra.mxu0 0.0
      %3605 = vmatpush.msra.mxu0 0.0
      %3606 = vmatpush.msra.mxu0 0.0
      %3607 = vmatpush.msra.mxu0 0.0
      %3608 = vmatpush.msra.mxu0 0.0
      %3609 = vmatpush.msra.mxu0 0.0
      %3610 = vmatpush.msra.mxu0 0.0
      %3611 = vmatpush.msra.mxu0 0.0
      %3612 = vmatpush.msra.mxu0 0.0
      %3613 = vmatpush.msra.mxu0 0.0
      %3614 = vmatpush.msra.mxu0 0.0
      %3615 = vmatpush.msra.mxu0 0.0
      %3616 = vmatpush.msra.mxu0 0.0
      %3617 = vmatpush.msra.mxu0 0.0
      %3618 = vmatpush.msra.mxu0 %v3601
      %3619 = vmatmul.f32.gmra.mxu0 %v3569
      %v3620 = vpop.f32.mrf.mxu0
      %v3621 = vadd.f32 0.0, %v3620
      %3622 = vmatmul.f32.gmra.mxu0 %v3571
      %v3623 = vpop.f32.mrf.mxu0
      %v3624 = vadd.f32 0.0, %v3623
      %3625 = vmatmul.f32.gmra.mxu0 %v3573
      %v3626 = vpop.f32.mrf.mxu0
      %v3627 = vadd.f32 0.0, %v3626
      %3628 = vmatmul.f32.gmra.mxu0 %v3575
      %v3629 = vpop.f32.mrf.mxu0
      %v3630 = vadd.f32 0.0, %v3629
      %3631 = vmatmul.f32.gmra.mxu0 %v3577
      %v3632 = vpop.f32.mrf.mxu0
      %v3633 = vadd.f32 0.0, %v3632
      %3634 = vmatmul.f32.gmra.mxu0 %v3579
      %v3635 = vpop.f32.mrf.mxu0
      %v3636 = vadd.f32 0.0, %v3635
      %3637 = vmatmul.f32.gmra.mxu0 %v3581
      %v3638 = vpop.f32.mrf.mxu0
      %v3639 = vadd.f32 0.0, %v3638
      %3640 = vmatmul.f32.gmra.mxu0 %v3583
      %v3641 = vpop.f32.mrf.mxu0
      %v3642 = vadd.f32 0.0, %v3641
      %3643 = vmatmul.f32.gmra.mxu0 %v3585
      %v3644 = vpop.f32.mrf.mxu0
      %v3645 = vadd.f32 0.0, %v3644
      %3646 = vmatmul.f32.gmra.mxu0 %v3587
      %v3647 = vpop.f32.mrf.mxu0
      %v3648 = vadd.f32 0.0, %v3647
      %3649 = vmatmul.f32.gmra.mxu0 %v3589
      %v3650 = vpop.f32.mrf.mxu0
      %v3651 = vadd.f32 0.0, %v3650
      %3652 = vmatmul.f32.gmra.mxu0 %v3591
      %v3653 = vpop.f32.mrf.mxu0
      %v3654 = vadd.f32 0.0, %v3653
      %3655 = vmatmul.f32.gmra.mxu0 %v3593
      %v3656 = vpop.f32.mrf.mxu0
      %v3657 = vadd.f32 0.0, %v3656
      %3658 = vmatmul.f32.gmra.mxu0 %v3595
      %v3659 = vpop.f32.mrf.mxu0
      %v3660 = vadd.f32 0.0, %v3659
      %3661 = vmatmul.f32.gmra.mxu0 %v3597
      %v3662 = vpop.f32.mrf.mxu0
      %v3663 = vadd.f32 0.0, %v3662
      %3664 = vmatmul.f32.gmra.mxu0 %v3599
      %v3665 = vpop.f32.mrf.mxu0
      %v3666 = vadd.f32 0.0, %v3665
      %3667 = vdwg.mxu0
      %v3668 = vadd.f32 %v3279, %v3621
      %v3669 = vadd.f32 %v3280, %v3624
      %v3670 = vadd.f32 %v3281, %v3627
      %v3671 = vadd.f32 %v3282, %v3630
      %v3672 = vadd.f32 %v3283, %v3633
      %v3673 = vadd.f32 %v3284, %v3636
      %v3674 = vadd.f32 %v3285, %v3639
      %v3675 = vadd.f32 %v3286, %v3642
      %v3676 = vadd.f32 %v3287, %v3645
      %v3677 = vadd.f32 %v3288, %v3648
      %v3678 = vadd.f32 %v3289, %v3651
      %v3679 = vadd.f32 %v3290, %v3654
      %v3680 = vadd.f32 %v3291, %v3657
      %v3681 = vadd.f32 %v3292, %v3660
      %v3682 = vadd.f32 %v3293, %v3663
      %v3683 = vadd.f32 %v3294, %v3666
      %vm3684 = vcmp.eq.f32.partialorder %v972, 8.0
      %vm3685 = vcmp.eq.f32.partialorder %v973, 8.0
      %vm3686 = vcmp.eq.f32.partialorder %v974, 8.0
      %vm3687 = vcmp.eq.f32.partialorder %v975, 8.0
      %vm3688 = vcmp.eq.f32.partialorder %v976, 8.0
      %vm3689 = vcmp.eq.f32.partialorder %v977, 8.0
      %vm3690 = vcmp.eq.f32.partialorder %v978, 8.0
      %vm3691 = vcmp.eq.f32.partialorder %v979, 8.0
      %vm3692 = vcmp.eq.f32.partialorder %v980, 8.0
      %vm3693 = vcmp.eq.f32.partialorder %v981, 8.0
      %vm3694 = vcmp.eq.f32.partialorder %v982, 8.0
      %vm3695 = vcmp.eq.f32.partialorder %v983, 8.0
      %vm3696 = vcmp.eq.f32.partialorder %v984, 8.0
      %vm3697 = vcmp.eq.f32.partialorder %v985, 8.0
      %vm3698 = vcmp.eq.f32.partialorder %v986, 8.0
      %vm3699 = vcmp.eq.f32.partialorder %v987, 8.0
      %v3700 = vsel %vm3684, 1, 0
      %v3701 = vsel %vm3685, 1, 0
      %v3702 = vsel %vm3686, 1, 0
      %v3703 = vsel %vm3687, 1, 0
      %v3704 = vsel %vm3688, 1, 0
      %v3705 = vsel %vm3689, 1, 0
      %v3706 = vsel %vm3690, 1, 0
      %v3707 = vsel %vm3691, 1, 0
      %v3708 = vsel %vm3692, 1, 0
      %v3709 = vsel %vm3693, 1, 0
      %v3710 = vsel %vm3694, 1, 0
      %v3711 = vsel %vm3695, 1, 0
      %v3712 = vsel %vm3696, 1, 0
      %v3713 = vsel %vm3697, 1, 0
      %v3714 = vsel %vm3698, 1, 0
      %v3715 = vsel %vm3699, 1, 0
      %v3716 = vcvt.s32.f32 %v3700
      %v3717 = vcvt.s32.f32 %v3701
      %v3718 = vcvt.s32.f32 %v3702
      %v3719 = vcvt.s32.f32 %v3703
      %v3720 = vcvt.s32.f32 %v3704
      %v3721 = vcvt.s32.f32 %v3705
      %v3722 = vcvt.s32.f32 %v3706
      %v3723 = vcvt.s32.f32 %v3707
      %v3724 = vcvt.s32.f32 %v3708
      %v3725 = vcvt.s32.f32 %v3709
      %v3726 = vcvt.s32.f32 %v3710
      %v3727 = vcvt.s32.f32 %v3711
      %v3728 = vcvt.s32.f32 %v3712
      %v3729 = vcvt.s32.f32 %v3713
      %v3730 = vcvt.s32.f32 %v3714
      %v3731 = vcvt.s32.f32 %v3715
      %3732 = vmatpush.msra.mxu0 %v576
      %3733 = vmatpush.msra.mxu0 %v575
      %3734 = vmatpush.msra.mxu0 %v574
      %3735 = vmatpush.msra.mxu0 %v573
      %3736 = vmatpush.msra.mxu0 %v572
      %3737 = vmatpush.msra.mxu0 %v571
      %3738 = vmatpush.msra.mxu0 %v570
      %3739 = vmatpush.msra.mxu0 %v569
      %3740 = vmatpush.msra.mxu0 %v568
      %3741 = vmatpush.msra.mxu0 %v567
      %3742 = vmatpush.msra.mxu0 %v566
      %3743 = vmatpush.msra.mxu0 %v565
      %3744 = vmatpush.msra.mxu0 %v564
      %3745 = vmatpush.msra.mxu0 %v563
      %3746 = vmatpush.msra.mxu0 %v562
      %3747 = vmatpush.msra.mxu0 %v561
      %3748 = vmatmul.f32.gmra.mxu0 %v3716
      %v3749 = vpop.f32.mrf.mxu0
      %v3750 = vadd.f32 0.0, %v3749
      %3751 = vmatmul.f32.gmra.mxu0 %v3717
      %v3752 = vpop.f32.mrf.mxu0
      %v3753 = vadd.f32 0.0, %v3752
      %3754 = vmatmul.f32.gmra.mxu0 %v3718
      %v3755 = vpop.f32.mrf.mxu0
      %v3756 = vadd.f32 0.0, %v3755
      %3757 = vmatmul.f32.gmra.mxu0 %v3719
      %v3758 = vpop.f32.mrf.mxu0
      %v3759 = vadd.f32 0.0, %v3758
      %3760 = vmatmul.f32.gmra.mxu0 %v3720
      %v3761 = vpop.f32.mrf.mxu0
      %v3762 = vadd.f32 0.0, %v3761
      %3763 = vmatmul.f32.gmra.mxu0 %v3721
      %v3764 = vpop.f32.mrf.mxu0
      %v3765 = vadd.f32 0.0, %v3764
      %3766 = vmatmul.f32.gmra.mxu0 %v3722
      %v3767 = vpop.f32.mrf.mxu0
      %v3768 = vadd.f32 0.0, %v3767
      %3769 = vmatmul.f32.gmra.mxu0 %v3723
      %v3770 = vpop.f32.mrf.mxu0
      %v3771 = vadd.f32 0.0, %v3770
      %3772 = vmatmul.f32.gmra.mxu0 %v3724
      %v3773 = vpop.f32.mrf.mxu0
      %v3774 = vadd.f32 0.0, %v3773
      %3775 = vmatmul.f32.gmra.mxu0 %v3725
      %v3776 = vpop.f32.mrf.mxu0
      %v3777 = vadd.f32 0.0, %v3776
      %3778 = vmatmul.f32.gmra.mxu0 %v3726
      %v3779 = vpop.f32.mrf.mxu0
      %v3780 = vadd.f32 0.0, %v3779
      %3781 = vmatmul.f32.gmra.mxu0 %v3727
      %v3782 = vpop.f32.mrf.mxu0
      %v3783 = vadd.f32 0.0, %v3782
      %3784 = vmatmul.f32.gmra.mxu0 %v3728
      %v3785 = vpop.f32.mrf.mxu0
      %v3786 = vadd.f32 0.0, %v3785
      %3787 = vmatmul.f32.gmra.mxu0 %v3729
      %v3788 = vpop.f32.mrf.mxu0
      %v3789 = vadd.f32 0.0, %v3788
      %3790 = vmatmul.f32.gmra.mxu0 %v3730
      %v3791 = vpop.f32.mrf.mxu0
      %v3792 = vadd.f32 0.0, %v3791
      %3793 = vmatmul.f32.gmra.mxu0 %v3731
      %v3794 = vpop.f32.mrf.mxu0
      %v3795 = vadd.f32 0.0, %v3794
      %3796 = vdwg.mxu0
      %3798 = vset.pattern.permute.xlu0 0
      %3799 = vperm.xlu0 %3798, %v3750
      %v3800 = vpop.permute.xlu0 %3799
      %3803 = vset.pattern.permute.xlu0 0
      %3804 = vperm.xlu0 %3803, %v3753
      %v3805 = vpop.permute.xlu0 %3804
      %3808 = vset.pattern.permute.xlu0 0
      %3809 = vperm.xlu0 %3808, %v3756
      %v3810 = vpop.permute.xlu0 %3809
      %3813 = vset.pattern.permute.xlu0 0
      %3814 = vperm.xlu0 %3813, %v3759
      %v3815 = vpop.permute.xlu0 %3814
      %3818 = vset.pattern.permute.xlu0 0
      %3819 = vperm.xlu0 %3818, %v3762
      %v3820 = vpop.permute.xlu0 %3819
      %3823 = vset.pattern.permute.xlu0 0
      %3824 = vperm.xlu0 %3823, %v3765
      %v3825 = vpop.permute.xlu0 %3824
      %3828 = vset.pattern.permute.xlu0 0
      %3829 = vperm.xlu0 %3828, %v3768
      %v3830 = vpop.permute.xlu0 %3829
      %3833 = vset.pattern.permute.xlu0 0
      %3834 = vperm.xlu0 %3833, %v3771
      %v3835 = vpop.permute.xlu0 %3834
      %3838 = vset.pattern.permute.xlu0 0
      %3839 = vperm.xlu0 %3838, %v3774
      %v3840 = vpop.permute.xlu0 %3839
      %3843 = vset.pattern.permute.xlu0 0
      %3844 = vperm.xlu0 %3843, %v3777
      %v3845 = vpop.permute.xlu0 %3844
      %3848 = vset.pattern.permute.xlu0 0
      %3849 = vperm.xlu0 %3848, %v3780
      %v3850 = vpop.permute.xlu0 %3849
      %3853 = vset.pattern.permute.xlu0 0
      %3854 = vperm.xlu0 %3853, %v3783
      %v3855 = vpop.permute.xlu0 %3854
      %3858 = vset.pattern.permute.xlu0 0
      %3859 = vperm.xlu0 %3858, %v3786
      %v3860 = vpop.permute.xlu0 %3859
      %3863 = vset.pattern.permute.xlu0 0
      %3864 = vperm.xlu0 %3863, %v3789
      %v3865 = vpop.permute.xlu0 %3864
      %3868 = vset.pattern.permute.xlu0 0
      %3869 = vperm.xlu0 %3868, %v3792
      %v3870 = vpop.permute.xlu0 %3869
      %3873 = vset.pattern.permute.xlu0 0
      %3874 = vperm.xlu0 %3873, %v3795
      %v3875 = vpop.permute.xlu0 %3874
      %v3877 = vmul.f32 %v3800, %v544
      %v3878 = vmul.f32 %v3805, %v545
      %v3879 = vmul.f32 %v3810, %v546
      %v3880 = vmul.f32 %v3815, %v547
      %v3881 = vmul.f32 %v3820, %v548
      %v3882 = vmul.f32 %v3825, %v549
      %v3883 = vmul.f32 %v3830, %v550
      %v3884 = vmul.f32 %v3835, %v551
      %v3885 = vmul.f32 %v3840, %v552
      %v3886 = vmul.f32 %v3845, %v553
      %v3887 = vmul.f32 %v3850, %v554
      %v3888 = vmul.f32 %v3855, %v555
      %v3889 = vmul.f32 %v3860, %v556
      %v3890 = vmul.f32 %v3865, %v557
      %v3891 = vmul.f32 %v3870, %v558
      %v3892 = vmul.f32 %v3875, %v559
      %v3893 = vsub.f32 %v3877, %v3750
      %v3894 = vsub.f32 %v3878, %v3753
      %v3895 = vsub.f32 %v3879, %v3756
      %v3896 = vsub.f32 %v3880, %v3759
      %v3897 = vsub.f32 %v3881, %v3762
      %v3898 = vsub.f32 %v3882, %v3765
      %v3899 = vsub.f32 %v3883, %v3768
      %v3900 = vsub.f32 %v3884, %v3771
      %v3901 = vsub.f32 %v3885, %v3774
      %v3902 = vsub.f32 %v3886, %v3777
      %v3903 = vsub.f32 %v3887, %v3780
      %v3904 = vsub.f32 %v3888, %v3783
      %v3905 = vsub.f32 %v3889, %v3786
      %v3906 = vsub.f32 %v3890, %v3789
      %v3907 = vsub.f32 %v3891, %v3792
      %v3908 = vsub.f32 %v3892, %v3795
      %3925 = vrot.lane.b32.xlu0 %v3893, 127
      %v3926 = vpop.permute.xlu0 %3925
      %3927 = vrot.lane.b32.xlu0 %v3894, 127
      %v3928 = vpop.permute.xlu0 %3927
      %3929 = vrot.lane.b32.xlu0 %v3895, 127
      %v3930 = vpop.permute.xlu0 %3929
      %3931 = vrot.lane.b32.xlu0 %v3896, 127
      %v3932 = vpop.permute.xlu0 %3931
      %3933 = vrot.lane.b32.xlu0 %v3897, 127
      %v3934 = vpop.permute.xlu0 %3933
      %3935 = vrot.lane.b32.xlu0 %v3898, 127
      %v3936 = vpop.permute.xlu0 %3935
      %3937 = vrot.lane.b32.xlu0 %v3899, 127
      %v3938 = vpop.permute.xlu0 %3937
      %3939 = vrot.lane.b32.xlu0 %v3900, 127
      %v3940 = vpop.permute.xlu0 %3939
      %3941 = vrot.lane.b32.xlu0 %v3901, 127
      %v3942 = vpop.permute.xlu0 %3941
      %3943 = vrot.lane.b32.xlu0 %v3902, 127
      %v3944 = vpop.permute.xlu0 %3943
      %3945 = vrot.lane.b32.xlu0 %v3903, 127
      %v3946 = vpop.permute.xlu0 %3945
      %3947 = vrot.lane.b32.xlu0 %v3904, 127
      %v3948 = vpop.permute.xlu0 %3947
      %3949 = vrot.lane.b32.xlu0 %v3905, 127
      %v3950 = vpop.permute.xlu0 %3949
      %3951 = vrot.lane.b32.xlu0 %v3906, 127
      %v3952 = vpop.permute.xlu0 %3951
      %3953 = vrot.lane.b32.xlu0 %v3907, 127
      %v3954 = vpop.permute.xlu0 %3953
      %3955 = vrot.lane.b32.xlu0 %v3908, 127
      %v3956 = vpop.permute.xlu0 %3955
      %v3957 = vrot.slane %v989, 6
      %v3958 = vsel %vm1491, %v3926, 0
      %v3960 = vsel %vm1491, %v3928, 0
      %v3962 = vsel %vm1491, %v3930, 0
      %v3964 = vsel %vm1491, %v3932, 0
      %v3966 = vsel %vm1491, %v3934, 0
      %v3968 = vsel %vm1491, %v3936, 0
      %v3970 = vsel %vm1491, %v3938, 0
      %v3972 = vsel %vm1491, %v3940, 0
      %v3974 = vsel %vm1491, %v3942, 0
      %v3976 = vsel %vm1491, %v3944, 0
      %v3978 = vsel %vm1491, %v3946, 0
      %v3980 = vsel %vm1491, %v3948, 0
      %v3982 = vsel %vm1491, %v3950, 0
      %v3984 = vsel %vm1491, %v3952, 0
      %v3986 = vsel %vm1491, %v3954, 0
      %v3988 = vsel %vm1491, %v3956, 0
      %v3990 = vsel %vm1524, %v3957, 0
      %3992 = vmatpush.msra.mxu0 0.0
      %3993 = vmatpush.msra.mxu0 0.0
      %3994 = vmatpush.msra.mxu0 0.0
      %3995 = vmatpush.msra.mxu0 0.0
      %3996 = vmatpush.msra.mxu0 0.0
      %3997 = vmatpush.msra.mxu0 0.0
      %3998 = vmatpush.msra.mxu0 0.0
      %3999 = vmatpush.msra.mxu0 0.0
      %4000 = vmatpush.msra.mxu0 0.0
      %4001 = vmatpush.msra.mxu0 0.0
      %4002 = vmatpush.msra.mxu0 0.0
      %4003 = vmatpush.msra.mxu0 0.0
      %4004 = vmatpush.msra.mxu0 0.0
      %4005 = vmatpush.msra.mxu0 0.0
      %4006 = vmatpush.msra.mxu0 0.0
      %4007 = vmatpush.msra.mxu0 %v3990
      %4008 = vmatmul.f32.gmra.mxu0 %v3958
      %v4009 = vpop.f32.mrf.mxu0
      %v4010 = vadd.f32 0.0, %v4009
      %4011 = vmatmul.f32.gmra.mxu0 %v3960
      %v4012 = vpop.f32.mrf.mxu0
      %v4013 = vadd.f32 0.0, %v4012
      %4014 = vmatmul.f32.gmra.mxu0 %v3962
      %v4015 = vpop.f32.mrf.mxu0
      %v4016 = vadd.f32 0.0, %v4015
      %4017 = vmatmul.f32.gmra.mxu0 %v3964
      %v4018 = vpop.f32.mrf.mxu0
      %v4019 = vadd.f32 0.0, %v4018
      %4020 = vmatmul.f32.gmra.mxu0 %v3966
      %v4021 = vpop.f32.mrf.mxu0
      %v4022 = vadd.f32 0.0, %v4021
      %4023 = vmatmul.f32.gmra.mxu0 %v3968
      %v4024 = vpop.f32.mrf.mxu0
      %v4025 = vadd.f32 0.0, %v4024
      %4026 = vmatmul.f32.gmra.mxu0 %v3970
      %v4027 = vpop.f32.mrf.mxu0
      %v4028 = vadd.f32 0.0, %v4027
      %4029 = vmatmul.f32.gmra.mxu0 %v3972
      %v4030 = vpop.f32.mrf.mxu0
      %v4031 = vadd.f32 0.0, %v4030
      %4032 = vmatmul.f32.gmra.mxu0 %v3974
      %v4033 = vpop.f32.mrf.mxu0
      %v4034 = vadd.f32 0.0, %v4033
      %4035 = vmatmul.f32.gmra.mxu0 %v3976
      %v4036 = vpop.f32.mrf.mxu0
      %v4037 = vadd.f32 0.0, %v4036
      %4038 = vmatmul.f32.gmra.mxu0 %v3978
      %v4039 = vpop.f32.mrf.mxu0
      %v4040 = vadd.f32 0.0, %v4039
      %4041 = vmatmul.f32.gmra.mxu0 %v3980
      %v4042 = vpop.f32.mrf.mxu0
      %v4043 = vadd.f32 0.0, %v4042
      %4044 = vmatmul.f32.gmra.mxu0 %v3982
      %v4045 = vpop.f32.mrf.mxu0
      %v4046 = vadd.f32 0.0, %v4045
      %4047 = vmatmul.f32.gmra.mxu0 %v3984
      %v4048 = vpop.f32.mrf.mxu0
      %v4049 = vadd.f32 0.0, %v4048
      %4050 = vmatmul.f32.gmra.mxu0 %v3986
      %v4051 = vpop.f32.mrf.mxu0
      %v4052 = vadd.f32 0.0, %v4051
      %4053 = vmatmul.f32.gmra.mxu0 %v3988
      %v4054 = vpop.f32.mrf.mxu0
      %v4055 = vadd.f32 0.0, %v4054
      %4056 = vdwg.mxu0
      %v4057 = vadd.f32 %v3668, %v4010
      %v4058 = vadd.f32 %v3669, %v4013
      %v4059 = vadd.f32 %v3670, %v4016
      %v4060 = vadd.f32 %v3671, %v4019
      %v4061 = vadd.f32 %v3672, %v4022
      %v4062 = vadd.f32 %v3673, %v4025
      %v4063 = vadd.f32 %v3674, %v4028
      %v4064 = vadd.f32 %v3675, %v4031
      %v4065 = vadd.f32 %v3676, %v4034
      %v4066 = vadd.f32 %v3677, %v4037
      %v4067 = vadd.f32 %v3678, %v4040
      %v4068 = vadd.f32 %v3679, %v4043
      %v4069 = vadd.f32 %v3680, %v4046
      %v4070 = vadd.f32 %v3681, %v4049
      %v4071 = vadd.f32 %v3682, %v4052
      %v4072 = vadd.f32 %v3683, %v4055
      %vm4073 = vcmp.eq.f32.partialorder %v972, 9.0
      %vm4074 = vcmp.eq.f32.partialorder %v973, 9.0
      %vm4075 = vcmp.eq.f32.partialorder %v974, 9.0
      %vm4076 = vcmp.eq.f32.partialorder %v975, 9.0
      %vm4077 = vcmp.eq.f32.partialorder %v976, 9.0
      %vm4078 = vcmp.eq.f32.partialorder %v977, 9.0
      %vm4079 = vcmp.eq.f32.partialorder %v978, 9.0
      %vm4080 = vcmp.eq.f32.partialorder %v979, 9.0
      %vm4081 = vcmp.eq.f32.partialorder %v980, 9.0
      %vm4082 = vcmp.eq.f32.partialorder %v981, 9.0
      %vm4083 = vcmp.eq.f32.partialorder %v982, 9.0
      %vm4084 = vcmp.eq.f32.partialorder %v983, 9.0
      %vm4085 = vcmp.eq.f32.partialorder %v984, 9.0
      %vm4086 = vcmp.eq.f32.partialorder %v985, 9.0
      %vm4087 = vcmp.eq.f32.partialorder %v986, 9.0
      %vm4088 = vcmp.eq.f32.partialorder %v987, 9.0
      %v4089 = vsel %vm4073, 1, 0
      %v4090 = vsel %vm4074, 1, 0
      %v4091 = vsel %vm4075, 1, 0
      %v4092 = vsel %vm4076, 1, 0
      %v4093 = vsel %vm4077, 1, 0
      %v4094 = vsel %vm4078, 1, 0
      %v4095 = vsel %vm4079, 1, 0
      %v4096 = vsel %vm4080, 1, 0
      %v4097 = vsel %vm4081, 1, 0
      %v4098 = vsel %vm4082, 1, 0
      %v4099 = vsel %vm4083, 1, 0
      %v4100 = vsel %vm4084, 1, 0
      %v4101 = vsel %vm4085, 1, 0
      %v4102 = vsel %vm4086, 1, 0
      %v4103 = vsel %vm4087, 1, 0
      %v4104 = vsel %vm4088, 1, 0
      %v4105 = vcvt.s32.f32 %v4089
      %v4106 = vcvt.s32.f32 %v4090
      %v4107 = vcvt.s32.f32 %v4091
      %v4108 = vcvt.s32.f32 %v4092
      %v4109 = vcvt.s32.f32 %v4093
      %v4110 = vcvt.s32.f32 %v4094
      %v4111 = vcvt.s32.f32 %v4095
      %v4112 = vcvt.s32.f32 %v4096
      %v4113 = vcvt.s32.f32 %v4097
      %v4114 = vcvt.s32.f32 %v4098
      %v4115 = vcvt.s32.f32 %v4099
      %v4116 = vcvt.s32.f32 %v4100
      %v4117 = vcvt.s32.f32 %v4101
      %v4118 = vcvt.s32.f32 %v4102
      %v4119 = vcvt.s32.f32 %v4103
      %v4120 = vcvt.s32.f32 %v4104
      %4121 = vmatpush.msra.mxu0 %v576
      %4122 = vmatpush.msra.mxu0 %v575
      %4123 = vmatpush.msra.mxu0 %v574
      %4124 = vmatpush.msra.mxu0 %v573
      %4125 = vmatpush.msra.mxu0 %v572
      %4126 = vmatpush.msra.mxu0 %v571
      %4127 = vmatpush.msra.mxu0 %v570
      %4128 = vmatpush.msra.mxu0 %v569
      %4129 = vmatpush.msra.mxu0 %v568
      %4130 = vmatpush.msra.mxu0 %v567
      %4131 = vmatpush.msra.mxu0 %v566
      %4132 = vmatpush.msra.mxu0 %v565
      %4133 = vmatpush.msra.mxu0 %v564
      %4134 = vmatpush.msra.mxu0 %v563
      %4135 = vmatpush.msra.mxu0 %v562
      %4136 = vmatpush.msra.mxu0 %v561
      %4137 = vmatmul.f32.gmra.mxu0 %v4105
      %v4138 = vpop.f32.mrf.mxu0
      %v4139 = vadd.f32 0.0, %v4138
      %4140 = vmatmul.f32.gmra.mxu0 %v4106
      %v4141 = vpop.f32.mrf.mxu0
      %v4142 = vadd.f32 0.0, %v4141
      %4143 = vmatmul.f32.gmra.mxu0 %v4107
      %v4144 = vpop.f32.mrf.mxu0
      %v4145 = vadd.f32 0.0, %v4144
      %4146 = vmatmul.f32.gmra.mxu0 %v4108
      %v4147 = vpop.f32.mrf.mxu0
      %v4148 = vadd.f32 0.0, %v4147
      %4149 = vmatmul.f32.gmra.mxu0 %v4109
      %v4150 = vpop.f32.mrf.mxu0
      %v4151 = vadd.f32 0.0, %v4150
      %4152 = vmatmul.f32.gmra.mxu0 %v4110
      %v4153 = vpop.f32.mrf.mxu0
      %v4154 = vadd.f32 0.0, %v4153
      %4155 = vmatmul.f32.gmra.mxu0 %v4111
      %v4156 = vpop.f32.mrf.mxu0
      %v4157 = vadd.f32 0.0, %v4156
      %4158 = vmatmul.f32.gmra.mxu0 %v4112
      %v4159 = vpop.f32.mrf.mxu0
      %v4160 = vadd.f32 0.0, %v4159
      %4161 = vmatmul.f32.gmra.mxu0 %v4113
      %v4162 = vpop.f32.mrf.mxu0
      %v4163 = vadd.f32 0.0, %v4162
      %4164 = vmatmul.f32.gmra.mxu0 %v4114
      %v4165 = vpop.f32.mrf.mxu0
      %v4166 = vadd.f32 0.0, %v4165
      %4167 = vmatmul.f32.gmra.mxu0 %v4115
      %v4168 = vpop.f32.mrf.mxu0
      %v4169 = vadd.f32 0.0, %v4168
      %4170 = vmatmul.f32.gmra.mxu0 %v4116
      %v4171 = vpop.f32.mrf.mxu0
      %v4172 = vadd.f32 0.0, %v4171
      %4173 = vmatmul.f32.gmra.mxu0 %v4117
      %v4174 = vpop.f32.mrf.mxu0
      %v4175 = vadd.f32 0.0, %v4174
      %4176 = vmatmul.f32.gmra.mxu0 %v4118
      %v4177 = vpop.f32.mrf.mxu0
      %v4178 = vadd.f32 0.0, %v4177
      %4179 = vmatmul.f32.gmra.mxu0 %v4119
      %v4180 = vpop.f32.mrf.mxu0
      %v4181 = vadd.f32 0.0, %v4180
      %4182 = vmatmul.f32.gmra.mxu0 %v4120
      %v4183 = vpop.f32.mrf.mxu0
      %v4184 = vadd.f32 0.0, %v4183
      %4185 = vdwg.mxu0
      %4187 = vset.pattern.permute.xlu0 0
      %4188 = vperm.xlu0 %4187, %v4139
      %v4189 = vpop.permute.xlu0 %4188
      %4192 = vset.pattern.permute.xlu0 0
      %4193 = vperm.xlu0 %4192, %v4142
      %v4194 = vpop.permute.xlu0 %4193
      %4197 = vset.pattern.permute.xlu0 0
      %4198 = vperm.xlu0 %4197, %v4145
      %v4199 = vpop.permute.xlu0 %4198
      %4202 = vset.pattern.permute.xlu0 0
      %4203 = vperm.xlu0 %4202, %v4148
      %v4204 = vpop.permute.xlu0 %4203
      %4207 = vset.pattern.permute.xlu0 0
      %4208 = vperm.xlu0 %4207, %v4151
      %v4209 = vpop.permute.xlu0 %4208
      %4212 = vset.pattern.permute.xlu0 0
      %4213 = vperm.xlu0 %4212, %v4154
      %v4214 = vpop.permute.xlu0 %4213
      %4217 = vset.pattern.permute.xlu0 0
      %4218 = vperm.xlu0 %4217, %v4157
      %v4219 = vpop.permute.xlu0 %4218
      %4222 = vset.pattern.permute.xlu0 0
      %4223 = vperm.xlu0 %4222, %v4160
      %v4224 = vpop.permute.xlu0 %4223
      %4227 = vset.pattern.permute.xlu0 0
      %4228 = vperm.xlu0 %4227, %v4163
      %v4229 = vpop.permute.xlu0 %4228
      %4232 = vset.pattern.permute.xlu0 0
      %4233 = vperm.xlu0 %4232, %v4166
      %v4234 = vpop.permute.xlu0 %4233
      %4237 = vset.pattern.permute.xlu0 0
      %4238 = vperm.xlu0 %4237, %v4169
      %v4239 = vpop.permute.xlu0 %4238
      %4242 = vset.pattern.permute.xlu0 0
      %4243 = vperm.xlu0 %4242, %v4172
      %v4244 = vpop.permute.xlu0 %4243
      %4247 = vset.pattern.permute.xlu0 0
      %4248 = vperm.xlu0 %4247, %v4175
      %v4249 = vpop.permute.xlu0 %4248
      %4252 = vset.pattern.permute.xlu0 0
      %4253 = vperm.xlu0 %4252, %v4178
      %v4254 = vpop.permute.xlu0 %4253
      %4257 = vset.pattern.permute.xlu0 0
      %4258 = vperm.xlu0 %4257, %v4181
      %v4259 = vpop.permute.xlu0 %4258
      %4262 = vset.pattern.permute.xlu0 0
      %4263 = vperm.xlu0 %4262, %v4184
      %v4264 = vpop.permute.xlu0 %4263
      %v4266 = vmul.f32 %v4189, %v544
      %v4267 = vmul.f32 %v4194, %v545
      %v4268 = vmul.f32 %v4199, %v546
      %v4269 = vmul.f32 %v4204, %v547
      %v4270 = vmul.f32 %v4209, %v548
      %v4271 = vmul.f32 %v4214, %v549
      %v4272 = vmul.f32 %v4219, %v550
      %v4273 = vmul.f32 %v4224, %v551
      %v4274 = vmul.f32 %v4229, %v552
      %v4275 = vmul.f32 %v4234, %v553
      %v4276 = vmul.f32 %v4239, %v554
      %v4277 = vmul.f32 %v4244, %v555
      %v4278 = vmul.f32 %v4249, %v556
      %v4279 = vmul.f32 %v4254, %v557
      %v4280 = vmul.f32 %v4259, %v558
      %v4281 = vmul.f32 %v4264, %v559
      %v4282 = vsub.f32 %v4266, %v4139
      %v4283 = vsub.f32 %v4267, %v4142
      %v4284 = vsub.f32 %v4268, %v4145
      %v4285 = vsub.f32 %v4269, %v4148
      %v4286 = vsub.f32 %v4270, %v4151
      %v4287 = vsub.f32 %v4271, %v4154
      %v4288 = vsub.f32 %v4272, %v4157
      %v4289 = vsub.f32 %v4273, %v4160
      %v4290 = vsub.f32 %v4274, %v4163
      %v4291 = vsub.f32 %v4275, %v4166
      %v4292 = vsub.f32 %v4276, %v4169
      %v4293 = vsub.f32 %v4277, %v4172
      %v4294 = vsub.f32 %v4278, %v4175
      %v4295 = vsub.f32 %v4279, %v4178
      %v4296 = vsub.f32 %v4280, %v4181
      %v4297 = vsub.f32 %v4281, %v4184
      %4314 = vrot.lane.b32.xlu0 %v4282, 127
      %v4315 = vpop.permute.xlu0 %4314
      %4316 = vrot.lane.b32.xlu0 %v4283, 127
      %v4317 = vpop.permute.xlu0 %4316
      %4318 = vrot.lane.b32.xlu0 %v4284, 127
      %v4319 = vpop.permute.xlu0 %4318
      %4320 = vrot.lane.b32.xlu0 %v4285, 127
      %v4321 = vpop.permute.xlu0 %4320
      %4322 = vrot.lane.b32.xlu0 %v4286, 127
      %v4323 = vpop.permute.xlu0 %4322
      %4324 = vrot.lane.b32.xlu0 %v4287, 127
      %v4325 = vpop.permute.xlu0 %4324
      %4326 = vrot.lane.b32.xlu0 %v4288, 127
      %v4327 = vpop.permute.xlu0 %4326
      %4328 = vrot.lane.b32.xlu0 %v4289, 127
      %v4329 = vpop.permute.xlu0 %4328
      %4330 = vrot.lane.b32.xlu0 %v4290, 127
      %v4331 = vpop.permute.xlu0 %4330
      %4332 = vrot.lane.b32.xlu0 %v4291, 127
      %v4333 = vpop.permute.xlu0 %4332
      %4334 = vrot.lane.b32.xlu0 %v4292, 127
      %v4335 = vpop.permute.xlu0 %4334
      %4336 = vrot.lane.b32.xlu0 %v4293, 127
      %v4337 = vpop.permute.xlu0 %4336
      %4338 = vrot.lane.b32.xlu0 %v4294, 127
      %v4339 = vpop.permute.xlu0 %4338
      %4340 = vrot.lane.b32.xlu0 %v4295, 127
      %v4341 = vpop.permute.xlu0 %4340
      %4342 = vrot.lane.b32.xlu0 %v4296, 127
      %v4343 = vpop.permute.xlu0 %4342
      %4344 = vrot.lane.b32.xlu0 %v4297, 127
      %v4345 = vpop.permute.xlu0 %4344
      %v4346 = vsel %vm1491, %v4315, 0
      %v4348 = vsel %vm1491, %v4317, 0
      %v4350 = vsel %vm1491, %v4319, 0
      %v4352 = vsel %vm1491, %v4321, 0
      %v4354 = vsel %vm1491, %v4323, 0
      %v4356 = vsel %vm1491, %v4325, 0
      %v4358 = vsel %vm1491, %v4327, 0
      %v4360 = vsel %vm1491, %v4329, 0
      %v4362 = vsel %vm1491, %v4331, 0
      %v4364 = vsel %vm1491, %v4333, 0
      %v4366 = vsel %vm1491, %v4335, 0
      %v4368 = vsel %vm1491, %v4337, 0
      %v4370 = vsel %vm1491, %v4339, 0
      %v4372 = vsel %vm1491, %v4341, 0
      %v4374 = vsel %vm1491, %v4343, 0
      %v4376 = vsel %vm1491, %v4345, 0
      %v4379 = vsel %vm1524, %v990, 0
      %4381 = vmatpush.msra.mxu0 0.0
      %4382 = vmatpush.msra.mxu0 0.0
      %4383 = vmatpush.msra.mxu0 0.0
      %4384 = vmatpush.msra.mxu0 0.0
      %4385 = vmatpush.msra.mxu0 0.0
      %4386 = vmatpush.msra.mxu0 0.0
      %4387 = vmatpush.msra.mxu0 0.0
      %4388 = vmatpush.msra.mxu0 0.0
      %4389 = vmatpush.msra.mxu0 0.0
      %4390 = vmatpush.msra.mxu0 0.0
      %4391 = vmatpush.msra.mxu0 0.0
      %4392 = vmatpush.msra.mxu0 0.0
      %4393 = vmatpush.msra.mxu0 0.0
      %4394 = vmatpush.msra.mxu0 0.0
      %4395 = vmatpush.msra.mxu0 0.0
      %4396 = vmatpush.msra.mxu0 %v4379
      %4397 = vmatmul.f32.gmra.mxu0 %v4346
      %v4398 = vpop.f32.mrf.mxu0
      %v4399 = vadd.f32 0.0, %v4398
      %4400 = vmatmul.f32.gmra.mxu0 %v4348
      %v4401 = vpop.f32.mrf.mxu0
      %v4402 = vadd.f32 0.0, %v4401
      %4403 = vmatmul.f32.gmra.mxu0 %v4350
      %v4404 = vpop.f32.mrf.mxu0
      %v4405 = vadd.f32 0.0, %v4404
      %4406 = vmatmul.f32.gmra.mxu0 %v4352
      %v4407 = vpop.f32.mrf.mxu0
      %v4408 = vadd.f32 0.0, %v4407
      %4409 = vmatmul.f32.gmra.mxu0 %v4354
      %v4410 = vpop.f32.mrf.mxu0
      %v4411 = vadd.f32 0.0, %v4410
      %4412 = vmatmul.f32.gmra.mxu0 %v4356
      %v4413 = vpop.f32.mrf.mxu0
      %v4414 = vadd.f32 0.0, %v4413
      %4415 = vmatmul.f32.gmra.mxu0 %v4358
      %v4416 = vpop.f32.mrf.mxu0
      %v4417 = vadd.f32 0.0, %v4416
      %4418 = vmatmul.f32.gmra.mxu0 %v4360
      %v4419 = vpop.f32.mrf.mxu0
      %v4420 = vadd.f32 0.0, %v4419
      %4421 = vmatmul.f32.gmra.mxu0 %v4362
      %v4422 = vpop.f32.mrf.mxu0
      %v4423 = vadd.f32 0.0, %v4422
      %4424 = vmatmul.f32.gmra.mxu0 %v4364
      %v4425 = vpop.f32.mrf.mxu0
      %v4426 = vadd.f32 0.0, %v4425
      %4427 = vmatmul.f32.gmra.mxu0 %v4366
      %v4428 = vpop.f32.mrf.mxu0
      %v4429 = vadd.f32 0.0, %v4428
      %4430 = vmatmul.f32.gmra.mxu0 %v4368
      %v4431 = vpop.f32.mrf.mxu0
      %v4432 = vadd.f32 0.0, %v4431
      %4433 = vmatmul.f32.gmra.mxu0 %v4370
      %v4434 = vpop.f32.mrf.mxu0
      %v4435 = vadd.f32 0.0, %v4434
      %4436 = vmatmul.f32.gmra.mxu0 %v4372
      %v4437 = vpop.f32.mrf.mxu0
      %v4438 = vadd.f32 0.0, %v4437
      %4439 = vmatmul.f32.gmra.mxu0 %v4374
      %v4440 = vpop.f32.mrf.mxu0
      %v4441 = vadd.f32 0.0, %v4440
      %4442 = vmatmul.f32.gmra.mxu0 %v4376
      %v4443 = vpop.f32.mrf.mxu0
      %v4444 = vadd.f32 0.0, %v4443
      %4445 = vdwg.mxu0
      %v4446 = vadd.f32 %v4057, %v4399
      %v4447 = vadd.f32 %v4058, %v4402
      %v4448 = vadd.f32 %v4059, %v4405
      %v4449 = vadd.f32 %v4060, %v4408
      %v4450 = vadd.f32 %v4061, %v4411
      %v4451 = vadd.f32 %v4062, %v4414
      %v4452 = vadd.f32 %v4063, %v4417
      %v4453 = vadd.f32 %v4064, %v4420
      %v4454 = vadd.f32 %v4065, %v4423
      %v4455 = vadd.f32 %v4066, %v4426
      %v4456 = vadd.f32 %v4067, %v4429
      %v4457 = vadd.f32 %v4068, %v4432
      %v4458 = vadd.f32 %v4069, %v4435
      %v4459 = vadd.f32 %v4070, %v4438
      %v4460 = vadd.f32 %v4071, %v4441
      %v4461 = vadd.f32 %v4072, %v4444
      %v4462 = vld [vmem:[%s5] sm:$0x1]
      %v4464 = vperm.slane %v4462, 0
      %v4466 = vadd.f32 %v4446, %v4464
      %v4467 = vadd.f32 %v4447, %v4464
      %v4468 = vadd.f32 %v4448, %v4464
      %v4469 = vadd.f32 %v4449, %v4464
      %v4470 = vadd.f32 %v4450, %v4464
      %v4471 = vadd.f32 %v4451, %v4464
      %v4472 = vadd.f32 %v4452, %v4464
      %v4473 = vadd.f32 %v4453, %v4464
      %v4474 = vadd.f32 %v4454, %v4464
      %v4475 = vadd.f32 %v4455, %v4464
      %v4476 = vadd.f32 %v4456, %v4464
      %v4477 = vadd.f32 %v4457, %v4464
      %v4478 = vadd.f32 %v4458, %v4464
      %v4479 = vadd.f32 %v4459, %v4464
      %v4480 = vadd.f32 %v4460, %v4464
      %v4481 = vadd.f32 %v4461, %v4464
      %v4482 = vmax.f32 %v4466, 0.0
      %v4483 = vmax.f32 %v4467, 0.0
      %v4484 = vmax.f32 %v4468, 0.0
      %v4485 = vmax.f32 %v4469, 0.0
      %v4486 = vmax.f32 %v4470, 0.0
      %v4487 = vmax.f32 %v4471, 0.0
      %v4488 = vmax.f32 %v4472, 0.0
      %v4489 = vmax.f32 %v4473, 0.0
      %v4490 = vmax.f32 %v4474, 0.0
      %v4491 = vmax.f32 %v4475, 0.0
      %v4492 = vmax.f32 %v4476, 0.0
      %v4493 = vmax.f32 %v4477, 0.0
      %v4494 = vmax.f32 %v4478, 0.0
      %v4495 = vmax.f32 %v4479, 0.0
      %v4496 = vmax.f32 %v4480, 0.0
      %v4497 = vmax.f32 %v4481, 0.0
      %v4498 = vld [vmem:[%s6] sm:$0xff]
      %v4499 = vld [vmem:[%s6 + $0x8] sm:$0xff]
      %v4500 = vld [vmem:[%s6 + $0x10] sm:$0xff]
      %v4501 = vld [vmem:[%s6 + $0x18] sm:$0xff]
      %v4502 = vld [vmem:[%s7] sm:$0x1]
      %v4504 = vperm.slane %v4502, 0
      %vm4506 = vcmask 261120
      %v4508 = vsel %vm4506, %v4482, 0
      %v4511 = vsel %vm4506, %v4483, 0
      %v4514 = vsel %vm4506, %v4484, 0
      %v4517 = vsel %vm4506, %v4485, 0
      %v4520 = vsel %vm4506, %v4486, 0
      %v4523 = vsel %vm4506, %v4487, 0
      %v4526 = vsel %vm4506, %v4488, 0
      %v4529 = vsel %vm4506, %v4489, 0
      %v4532 = vsel %vm4506, %v4490, 0
      %v4535 = vsel %vm4506, %v4491, 0
      %v4538 = vsel %vm4506, %v4492, 0
      %v4541 = vsel %vm4506, %v4493, 0
      %v4544 = vsel %vm4506, %v4494, 0
      %v4547 = vsel %vm4506, %v4495, 0
      %v4550 = vsel %vm4506, %v4496, 0
      %v4553 = vsel %vm4506, %v4497, 0
      %4555 = vmatpush.msra.mxu0 0.0
      %4556 = vmatpush.msra.mxu0 0.0
      %4557 = vmatpush.msra.mxu0 0.0
      %4558 = vmatpush.msra.mxu0 0.0
      %4559 = vmatpush.msra.mxu0 0.0
      %4560 = vmatpush.msra.mxu0 0.0
      %4561 = vmatpush.msra.mxu0 0.0
      %4562 = vmatpush.msra.mxu0 0.0
      %4563 = vmatpush.msra.mxu0 0.0
      %4564 = vmatpush.msra.mxu0 0.0
      %4565 = vmatpush.msra.mxu0 0.0
      %4566 = vmatpush.msra.mxu0 0.0
      %4567 = vmatpush.msra.mxu0 %v4501
      %4568 = vmatpush.msra.mxu0 %v4500
      %4569 = vmatpush.msra.mxu0 %v4499
      %4570 = vmatpush.msra.mxu0 %v4498
      %4571 = vmatmul.f32.gmra.mxu0 %v4508
      %v4572 = vpop.f32.mrf.mxu0
      %v4573 = vadd.f32 %v4504, %v4572
      %4574 = vmatmul.f32.gmra.mxu0 %v4511
      %v4575 = vpop.f32.mrf.mxu0
      %v4576 = vadd.f32 %v4504, %v4575
      %4577 = vmatmul.f32.gmra.mxu0 %v4514
      %v4578 = vpop.f32.mrf.mxu0
      %v4579 = vadd.f32 %v4504, %v4578
      %4580 = vmatmul.f32.gmra.mxu0 %v4517
      %v4581 = vpop.f32.mrf.mxu0
      %v4582 = vadd.f32 %v4504, %v4581
      %4583 = vmatmul.f32.gmra.mxu0 %v4520
      %v4584 = vpop.f32.mrf.mxu0
      %v4585 = vadd.f32 %v4504, %v4584
      %4586 = vmatmul.f32.gmra.mxu0 %v4523
      %v4587 = vpop.f32.mrf.mxu0
      %v4588 = vadd.f32 %v4504, %v4587
      %4589 = vmatmul.f32.gmra.mxu0 %v4526
      %v4590 = vpop.f32.mrf.mxu0
      %v4591 = vadd.f32 %v4504, %v4590
      %4592 = vmatmul.f32.gmra.mxu0 %v4529
      %v4593 = vpop.f32.mrf.mxu0
      %v4594 = vadd.f32 %v4504, %v4593
      %4595 = vmatmul.f32.gmra.mxu0 %v4532
      %v4596 = vpop.f32.mrf.mxu0
      %v4597 = vadd.f32 %v4504, %v4596
      %4598 = vmatmul.f32.gmra.mxu0 %v4535
      %v4599 = vpop.f32.mrf.mxu0
      %v4600 = vadd.f32 %v4504, %v4599
      %4601 = vmatmul.f32.gmra.mxu0 %v4538
      %v4602 = vpop.f32.mrf.mxu0
      %v4603 = vadd.f32 %v4504, %v4602
      %4604 = vmatmul.f32.gmra.mxu0 %v4541
      %v4605 = vpop.f32.mrf.mxu0
      %v4606 = vadd.f32 %v4504, %v4605
      %4607 = vmatmul.f32.gmra.mxu0 %v4544
      %v4608 = vpop.f32.mrf.mxu0
      %v4609 = vadd.f32 %v4504, %v4608
      %4610 = vmatmul.f32.gmra.mxu0 %v4547
      %v4611 = vpop.f32.mrf.mxu0
      %v4612 = vadd.f32 %v4504, %v4611
      %4613 = vmatmul.f32.gmra.mxu0 %v4550
      %v4614 = vpop.f32.mrf.mxu0
      %v4615 = vadd.f32 %v4504, %v4614
      %4616 = vmatmul.f32.gmra.mxu0 %v4553
      %v4617 = vpop.f32.mrf.mxu0
      %v4618 = vadd.f32 %v4504, %v4617
      %4619 = vdwg.mxu0
      %v4620 = vld [vmem:[%s8] sm:$0x1]
      %4621 = vset.pattern.permute.xlu0 0
      %4622 = vperm.xlu0 %4621, %v544
      %v4623 = vpop.permute.xlu0 %4622
      %4625 = vset.pattern.permute.xlu0 0
      %4626 = vperm.xlu0 %4625, %v545
      %v4627 = vpop.permute.xlu0 %4626
      %4629 = vset.pattern.permute.xlu0 0
      %4630 = vperm.xlu0 %4629, %v546
      %v4631 = vpop.permute.xlu0 %4630
      %4633 = vset.pattern.permute.xlu0 0
      %4634 = vperm.xlu0 %4633, %v547
      %v4635 = vpop.permute.xlu0 %4634
      %4637 = vset.pattern.permute.xlu0 0
      %4638 = vperm.xlu0 %4637, %v548
      %v4639 = vpop.permute.xlu0 %4638
      %4641 = vset.pattern.permute.xlu0 0
      %4642 = vperm.xlu0 %4641, %v549
      %v4643 = vpop.permute.xlu0 %4642
      %4645 = vset.pattern.permute.xlu0 0
      %4646 = vperm.xlu0 %4645, %v550
      %v4647 = vpop.permute.xlu0 %4646
      %4649 = vset.pattern.permute.xlu0 0
      %4650 = vperm.xlu0 %4649, %v551
      %v4651 = vpop.permute.xlu0 %4650
      %4653 = vset.pattern.permute.xlu0 0
      %4654 = vperm.xlu0 %4653, %v552
      %v4655 = vpop.permute.xlu0 %4654
      %4657 = vset.pattern.permute.xlu0 0
      %4658 = vperm.xlu0 %4657, %v553
      %v4659 = vpop.permute.xlu0 %4658
      %4661 = vset.pattern.permute.xlu0 0
      %4662 = vperm.xlu0 %4661, %v554
      %v4663 = vpop.permute.xlu0 %4662
      %4665 = vset.pattern.permute.xlu0 0
      %4666 = vperm.xlu0 %4665, %v555
      %v4667 = vpop.permute.xlu0 %4666
      %4669 = vset.pattern.permute.xlu0 0
      %4670 = vperm.xlu0 %4669, %v556
      %v4671 = vpop.permute.xlu0 %4670
      %4673 = vset.pattern.permute.xlu0 0
      %4674 = vperm.xlu0 %4673, %v557
      %v4675 = vpop.permute.xlu0 %4674
      %4677 = vset.pattern.permute.xlu0 0
      %4678 = vperm.xlu0 %4677, %v558
      %v4679 = vpop.permute.xlu0 %4678
      %4681 = vset.pattern.permute.xlu0 0
      %4682 = vperm.xlu0 %4681, %v559
      %v4683 = vpop.permute.xlu0 %4682
      %v4686 = vperm.slane %v4620, 0
      %v4688 = vmul.f32 %v4623, %v4686
      %v4689 = vmul.f32 %v4627, %v4686
      %v4690 = vmul.f32 %v4631, %v4686
      %v4691 = vmul.f32 %v4635, %v4686
      %v4692 = vmul.f32 %v4639, %v4686
      %v4693 = vmul.f32 %v4643, %v4686
      %v4694 = vmul.f32 %v4647, %v4686
      %v4695 = vmul.f32 %v4651, %v4686
      %v4696 = vmul.f32 %v4655, %v4686
      %v4697 = vmul.f32 %v4659, %v4686
      %v4698 = vmul.f32 %v4663, %v4686
      %v4699 = vmul.f32 %v4667, %v4686
      %v4700 = vmul.f32 %v4671, %v4686
      %v4701 = vmul.f32 %v4675, %v4686
      %v4702 = vmul.f32 %v4679, %v4686
      %v4703 = vmul.f32 %v4683, %v4686
      %v4704 = vld [vmem:[%s9] sm:$0x1]
      %v4706 = vperm.slane %v4704, 0
      %v4708 = vadd.f32 %v4688, %v4706
      %v4709 = vadd.f32 %v4689, %v4706
      %v4710 = vadd.f32 %v4690, %v4706
      %v4711 = vadd.f32 %v4691, %v4706
      %v4712 = vadd.f32 %v4692, %v4706
      %v4713 = vadd.f32 %v4693, %v4706
      %v4714 = vadd.f32 %v4694, %v4706
      %v4715 = vadd.f32 %v4695, %v4706
      %v4716 = vadd.f32 %v4696, %v4706
      %v4717 = vadd.f32 %v4697, %v4706
      %v4718 = vadd.f32 %v4698, %v4706
      %v4719 = vadd.f32 %v4699, %v4706
      %v4720 = vadd.f32 %v4700, %v4706
      %v4721 = vadd.f32 %v4701, %v4706
      %v4722 = vadd.f32 %v4702, %v4706
      %v4723 = vadd.f32 %v4703, %v4706
      %4724 = vset.pattern.permute.xlu0 3
      %4725 = vperm.xlu0 %4724, %v544
      %v4726 = vpop.permute.xlu0 %4725
      %4728 = vset.pattern.permute.xlu0 3
      %4729 = vperm.xlu0 %4728, %v545
      %v4730 = vpop.permute.xlu0 %4729
      %4732 = vset.pattern.permute.xlu0 3
      %4733 = vperm.xlu0 %4732, %v546
      %v4734 = vpop.permute.xlu0 %4733
      %4736 = vset.pattern.permute.xlu0 3
      %4737 = vperm.xlu0 %4736, %v547
      %v4738 = vpop.permute.xlu0 %4737
      %4740 = vset.pattern.permute.xlu0 3
      %4741 = vperm.xlu0 %4740, %v548
      %v4742 = vpop.permute.xlu0 %4741
      %4744 = vset.pattern.permute.xlu0 3
      %4745 = vperm.xlu0 %4744, %v549
      %v4746 = vpop.permute.xlu0 %4745
      %4748 = vset.pattern.permute.xlu0 3
      %4749 = vperm.xlu0 %4748, %v550
      %v4750 = vpop.permute.xlu0 %4749
      %4752 = vset.pattern.permute.xlu0 3
      %4753 = vperm.xlu0 %4752, %v551
      %v4754 = vpop.permute.xlu0 %4753
      %4756 = vset.pattern.permute.xlu0 3
      %4757 = vperm.xlu0 %4756, %v552
      %v4758 = vpop.permute.xlu0 %4757
      %4760 = vset.pattern.permute.xlu0 3
      %4761 = vperm.xlu0 %4760, %v553
      %v4762 = vpop.permute.xlu0 %4761
      %4764 = vset.pattern.permute.xlu0 3
      %4765 = vperm.xlu0 %4764, %v554
      %v4766 = vpop.permute.xlu0 %4765
      %4768 = vset.pattern.permute.xlu0 3
      %4769 = vperm.xlu0 %4768, %v555
      %v4770 = vpop.permute.xlu0 %4769
      %4772 = vset.pattern.permute.xlu0 3
      %4773 = vperm.xlu0 %4772, %v556
      %v4774 = vpop.permute.xlu0 %4773
      %4776 = vset.pattern.permute.xlu0 3
      %4777 = vperm.xlu0 %4776, %v557
      %v4778 = vpop.permute.xlu0 %4777
      %4780 = vset.pattern.permute.xlu0 3
      %4781 = vperm.xlu0 %4780, %v558
      %v4782 = vpop.permute.xlu0 %4781
      %4784 = vset.pattern.permute.xlu0 3
      %4785 = vperm.xlu0 %4784, %v559
      %v4786 = vpop.permute.xlu0 %4785
      %v4788 = vmul.f32 %v4726, %v4708
      %v4789 = vmul.f32 %v4730, %v4709
      %v4790 = vmul.f32 %v4734, %v4710
      %v4791 = vmul.f32 %v4738, %v4711
      %v4792 = vmul.f32 %v4742, %v4712
      %v4793 = vmul.f32 %v4746, %v4713
      %v4794 = vmul.f32 %v4750, %v4714
      %v4795 = vmul.f32 %v4754, %v4715
      %v4796 = vmul.f32 %v4758, %v4716
      %v4797 = vmul.f32 %v4762, %v4717
      %v4798 = vmul.f32 %v4766, %v4718
      %v4799 = vmul.f32 %v4770, %v4719
      %v4800 = vmul.f32 %v4774, %v4720
      %v4801 = vmul.f32 %v4778, %v4721
      %v4802 = vmul.f32 %v4782, %v4722
      %v4803 = vmul.f32 %v4786, %v4723
      %v4804 = vadd.f32 %v4573, %v4788
      %v4805 = vadd.f32 %v4576, %v4789
      %v4806 = vadd.f32 %v4579, %v4790
      %v4807 = vadd.f32 %v4582, %v4791
      %v4808 = vadd.f32 %v4585, %v4792
      %v4809 = vadd.f32 %v4588, %v4793
      %v4810 = vadd.f32 %v4591, %v4794
      %v4811 = vadd.f32 %v4594, %v4795
      %v4812 = vadd.f32 %v4597, %v4796
      %v4813 = vadd.f32 %v4600, %v4797
      %v4814 = vadd.f32 %v4603, %v4798
      %v4815 = vadd.f32 %v4606, %v4799
      %v4816 = vadd.f32 %v4609, %v4800
      %v4817 = vadd.f32 %v4612, %v4801
      %v4818 = vadd.f32 %v4615, %v4802
      %v4819 = vadd.f32 %v4618, %v4803
      %v4820 = vsub.f32 1.0, %v544
      %v4821 = vsub.f32 1.0, %v545
      %v4822 = vsub.f32 1.0, %v546
      %v4823 = vsub.f32 1.0, %v547
      %v4824 = vsub.f32 1.0, %v548
      %v4825 = vsub.f32 1.0, %v549
      %v4826 = vsub.f32 1.0, %v550
      %v4827 = vsub.f32 1.0, %v551
      %v4828 = vsub.f32 1.0, %v552
      %v4829 = vsub.f32 1.0, %v553
      %v4830 = vsub.f32 1.0, %v554
      %v4831 = vsub.f32 1.0, %v555
      %v4832 = vsub.f32 1.0, %v556
      %v4833 = vsub.f32 1.0, %v557
      %v4834 = vsub.f32 1.0, %v558
      %v4835 = vsub.f32 1.0, %v559
      %v4836 = vld [vmem:[%s10] sm:$0x1]
      %v4838 = vperm.slane %v4836, 0
      %v4840 = vmul.f32 %v4623, %v4838
      %v4841 = vmul.f32 %v4627, %v4838
      %v4842 = vmul.f32 %v4631, %v4838
      %v4843 = vmul.f32 %v4635, %v4838
      %v4844 = vmul.f32 %v4639, %v4838
      %v4845 = vmul.f32 %v4643, %v4838
      %v4846 = vmul.f32 %v4647, %v4838
      %v4847 = vmul.f32 %v4651, %v4838
      %v4848 = vmul.f32 %v4655, %v4838
      %v4849 = vmul.f32 %v4659, %v4838
      %v4850 = vmul.f32 %v4663, %v4838
      %v4851 = vmul.f32 %v4667, %v4838
      %v4852 = vmul.f32 %v4671, %v4838
      %v4853 = vmul.f32 %v4675, %v4838
      %v4854 = vmul.f32 %v4679, %v4838
      %v4855 = vmul.f32 %v4683, %v4838
      %v4856 = vld [vmem:[%s11] sm:$0x1]
      %v4858 = vperm.slane %v4856, 0
      %v4860 = vadd.f32 %v4840, %v4858
      %v4861 = vadd.f32 %v4841, %v4858
      %v4862 = vadd.f32 %v4842, %v4858
      %v4863 = vadd.f32 %v4843, %v4858
      %v4864 = vadd.f32 %v4844, %v4858
      %v4865 = vadd.f32 %v4845, %v4858
      %v4866 = vadd.f32 %v4846, %v4858
      %v4867 = vadd.f32 %v4847, %v4858
      %v4868 = vadd.f32 %v4848, %v4858
      %v4869 = vadd.f32 %v4849, %v4858
      %v4870 = vadd.f32 %v4850, %v4858
      %v4871 = vadd.f32 %v4851, %v4858
      %v4872 = vadd.f32 %v4852, %v4858
      %v4873 = vadd.f32 %v4853, %v4858
      %v4874 = vadd.f32 %v4854, %v4858
      %v4875 = vadd.f32 %v4855, %v4858
      %4877 = vset.pattern.permute.xlu0 3
      %4878 = vperm.xlu0 %4877, %v4820
      %v4879 = vpop.permute.xlu0 %4878
      %4882 = vset.pattern.permute.xlu0 3
      %4883 = vperm.xlu0 %4882, %v4821
      %v4884 = vpop.permute.xlu0 %4883
      %4887 = vset.pattern.permute.xlu0 3
      %4888 = vperm.xlu0 %4887, %v4822
      %v4889 = vpop.permute.xlu0 %4888
      %4892 = vset.pattern.permute.xlu0 3
      %4893 = vperm.xlu0 %4892, %v4823
      %v4894 = vpop.permute.xlu0 %4893
      %4897 = vset.pattern.permute.xlu0 3
      %4898 = vperm.xlu0 %4897, %v4824
      %v4899 = vpop.permute.xlu0 %4898
      %4902 = vset.pattern.permute.xlu0 3
      %4903 = vperm.xlu0 %4902, %v4825
      %v4904 = vpop.permute.xlu0 %4903
      %4907 = vset.pattern.permute.xlu0 3
      %4908 = vperm.xlu0 %4907, %v4826
      %v4909 = vpop.permute.xlu0 %4908
      %4912 = vset.pattern.permute.xlu0 3
      %4913 = vperm.xlu0 %4912, %v4827
      %v4914 = vpop.permute.xlu0 %4913
      %4917 = vset.pattern.permute.xlu0 3
      %4918 = vperm.xlu0 %4917, %v4828
      %v4919 = vpop.permute.xlu0 %4918
      %4922 = vset.pattern.permute.xlu0 3
      %4923 = vperm.xlu0 %4922, %v4829
      %v4924 = vpop.permute.xlu0 %4923
      %4927 = vset.pattern.permute.xlu0 3
      %4928 = vperm.xlu0 %4927, %v4830
      %v4929 = vpop.permute.xlu0 %4928
      %4932 = vset.pattern.permute.xlu0 3
      %4933 = vperm.xlu0 %4932, %v4831
      %v4934 = vpop.permute.xlu0 %4933
      %4937 = vset.pattern.permute.xlu0 3
      %4938 = vperm.xlu0 %4937, %v4832
      %v4939 = vpop.permute.xlu0 %4938
      %4942 = vset.pattern.permute.xlu0 3
      %4943 = vperm.xlu0 %4942, %v4833
      %v4944 = vpop.permute.xlu0 %4943
      %4947 = vset.pattern.permute.xlu0 3
      %4948 = vperm.xlu0 %4947, %v4834
      %v4949 = vpop.permute.xlu0 %4948
      %4952 = vset.pattern.permute.xlu0 3
      %4953 = vperm.xlu0 %4952, %v4835
      %v4954 = vpop.permute.xlu0 %4953
      %v4956 = vmul.f32 %v4879, %v4860
      %v4957 = vmul.f32 %v4884, %v4861
      %v4958 = vmul.f32 %v4889, %v4862
      %v4959 = vmul.f32 %v4894, %v4863
      %v4960 = vmul.f32 %v4899, %v4864
      %v4961 = vmul.f32 %v4904, %v4865
      %v4962 = vmul.f32 %v4909, %v4866
      %v4963 = vmul.f32 %v4914, %v4867
      %v4964 = vmul.f32 %v4919, %v4868
      %v4965 = vmul.f32 %v4924, %v4869
      %v4966 = vmul.f32 %v4929, %v4870
      %v4967 = vmul.f32 %v4934, %v4871
      %v4968 = vmul.f32 %v4939, %v4872
      %v4969 = vmul.f32 %v4944, %v4873
      %v4970 = vmul.f32 %v4949, %v4874
      %v4971 = vmul.f32 %v4954, %v4875
      %v4972 = vadd.f32 %v4804, %v4956
      %v4973 = vadd.f32 %v4805, %v4957
      %v4974 = vadd.f32 %v4806, %v4958
      %v4975 = vadd.f32 %v4807, %v4959
      %v4976 = vadd.f32 %v4808, %v4960
      %v4977 = vadd.f32 %v4809, %v4961
      %v4978 = vadd.f32 %v4810, %v4962
      %v4979 = vadd.f32 %v4811, %v4963
      %v4980 = vadd.f32 %v4812, %v4964
      %v4981 = vadd.f32 %v4813, %v4965
      %v4982 = vadd.f32 %v4814, %v4966
      %v4983 = vadd.f32 %v4815, %v4967
      %v4984 = vadd.f32 %v4816, %v4968
      %v4985 = vadd.f32 %v4817, %v4969
      %v4986 = vadd.f32 %v4818, %v4970
      %v4987 = vadd.f32 %v4819, %v4971
      %v4988 = vsel %vm4506, %v4972, 0.0
      %4989 = vadd.xlane.f32.xlu0 %v4988
      %v4990 = vpop.xlane.xlu0 %4989
      %v4991 = vsel %vm4506, %v4973, 0.0
      %4992 = vadd.xlane.f32.xlu0 %v4991
      %v4993 = vpop.xlane.xlu0 %4992
      %v4994 = vsel %vm4506, %v4974, 0.0
      %4995 = vadd.xlane.f32.xlu0 %v4994
      %v4996 = vpop.xlane.xlu0 %4995
      %v4997 = vsel %vm4506, %v4975, 0.0
      %4998 = vadd.xlane.f32.xlu0 %v4997
      %v4999 = vpop.xlane.xlu0 %4998
      %v5000 = vsel %vm4506, %v4976, 0.0
      %5001 = vadd.xlane.f32.xlu0 %v5000
      %v5002 = vpop.xlane.xlu0 %5001
      %v5003 = vsel %vm4506, %v4977, 0.0
      %5004 = vadd.xlane.f32.xlu0 %v5003
      %v5005 = vpop.xlane.xlu0 %5004
      %v5006 = vsel %vm4506, %v4978, 0.0
      %5007 = vadd.xlane.f32.xlu0 %v5006
      %v5008 = vpop.xlane.xlu0 %5007
      %v5009 = vsel %vm4506, %v4979, 0.0
      %5010 = vadd.xlane.f32.xlu0 %v5009
      %v5011 = vpop.xlane.xlu0 %5010
      %v5012 = vsel %vm4506, %v4980, 0.0
      %5013 = vadd.xlane.f32.xlu0 %v5012
      %v5014 = vpop.xlane.xlu0 %5013
      %v5015 = vsel %vm4506, %v4981, 0.0
      %5016 = vadd.xlane.f32.xlu0 %v5015
      %v5017 = vpop.xlane.xlu0 %5016
      %v5018 = vsel %vm4506, %v4982, 0.0
      %5019 = vadd.xlane.f32.xlu0 %v5018
      %v5020 = vpop.xlane.xlu0 %5019
      %v5021 = vsel %vm4506, %v4983, 0.0
      %5022 = vadd.xlane.f32.xlu0 %v5021
      %v5023 = vpop.xlane.xlu0 %5022
      %v5024 = vsel %vm4506, %v4984, 0.0
      %5025 = vadd.xlane.f32.xlu0 %v5024
      %v5026 = vpop.xlane.xlu0 %5025
      %v5027 = vsel %vm4506, %v4985, 0.0
      %5028 = vadd.xlane.f32.xlu0 %v5027
      %v5029 = vpop.xlane.xlu0 %5028
      %v5030 = vsel %vm4506, %v4986, 0.0
      %5031 = vadd.xlane.f32.xlu0 %v5030
      %v5032 = vpop.xlane.xlu0 %5031
      %v5033 = vsel %vm4506, %v4987, 0.0
      %5034 = vadd.xlane.f32.xlu0 %v5033
      %v5035 = vpop.xlane.xlu0 %5034
      %v5036 = vrcp.pop 32.0
      %v5037 = vmul.f32 32.0, %v5036
      %v5038 = vsub.f32 1.0, %v5037
      %v5039 = vmul.f32 %v5036, %v5038
      %v5040 = vadd.f32 %v5036, %v5039
      %vm5041 = vweird.f32 %v5036
      %v5042 = vsel %vm5041, %v5036, %v5040
      %v5043 = vmul.f32 %v4990, %v5042
      %v5044 = vmul.f32 %v4993, %v5042
      %v5045 = vmul.f32 %v4996, %v5042
      %v5046 = vmul.f32 %v4999, %v5042
      %v5047 = vmul.f32 %v5002, %v5042
      %v5048 = vmul.f32 %v5005, %v5042
      %v5049 = vmul.f32 %v5008, %v5042
      %v5050 = vmul.f32 %v5011, %v5042
      %v5051 = vmul.f32 %v5014, %v5042
      %v5052 = vmul.f32 %v5017, %v5042
      %v5053 = vmul.f32 %v5020, %v5042
      %v5054 = vmul.f32 %v5023, %v5042
      %v5055 = vmul.f32 %v5026, %v5042
      %v5056 = vmul.f32 %v5029, %v5042
      %v5057 = vmul.f32 %v5032, %v5042
      %v5058 = vmul.f32 %v5035, %v5042
      %v5059 = vsub.f32 %v4972, %v5043
      %v5060 = vsub.f32 %v4973, %v5044
      %v5061 = vsub.f32 %v4974, %v5045
      %v5062 = vsub.f32 %v4975, %v5046
      %v5063 = vsub.f32 %v4976, %v5047
      %v5064 = vsub.f32 %v4977, %v5048
      %v5065 = vsub.f32 %v4978, %v5049
      %v5066 = vsub.f32 %v4979, %v5050
      %v5067 = vsub.f32 %v4980, %v5051
      %v5068 = vsub.f32 %v4981, %v5052
      %v5069 = vsub.f32 %v4982, %v5053
      %v5070 = vsub.f32 %v4983, %v5054
      %v5071 = vsub.f32 %v4984, %v5055
      %v5072 = vsub.f32 %v4985, %v5056
      %v5073 = vsub.f32 %v4986, %v5057
      %v5074 = vsub.f32 %v4987, %v5058
      %v5075 = vmul.f32 %v5059, %v5059
      %v5076 = vmul.f32 %v5060, %v5060
      %v5077 = vmul.f32 %v5061, %v5061
      %v5078 = vmul.f32 %v5062, %v5062
      %v5079 = vmul.f32 %v5063, %v5063
      %v5080 = vmul.f32 %v5064, %v5064
      %v5081 = vmul.f32 %v5065, %v5065
      %v5082 = vmul.f32 %v5066, %v5066
      %v5083 = vmul.f32 %v5067, %v5067
      %v5084 = vmul.f32 %v5068, %v5068
      %v5085 = vmul.f32 %v5069, %v5069
      %v5086 = vmul.f32 %v5070, %v5070
      %v5087 = vmul.f32 %v5071, %v5071
      %v5088 = vmul.f32 %v5072, %v5072
      %v5089 = vmul.f32 %v5073, %v5073
      %v5090 = vmul.f32 %v5074, %v5074
      %v5091 = vsel %vm4506, %v5075, 0.0
      %5092 = vadd.xlane.f32.xlu0 %v5091
      %v5093 = vpop.xlane.xlu0 %5092
      %v5094 = vsel %vm4506, %v5076, 0.0
      %5095 = vadd.xlane.f32.xlu0 %v5094
      %v5096 = vpop.xlane.xlu0 %5095
      %v5097 = vsel %vm4506, %v5077, 0.0
      %5098 = vadd.xlane.f32.xlu0 %v5097
      %v5099 = vpop.xlane.xlu0 %5098
      %v5100 = vsel %vm4506, %v5078, 0.0
      %5101 = vadd.xlane.f32.xlu0 %v5100
      %v5102 = vpop.xlane.xlu0 %5101
      %v5103 = vsel %vm4506, %v5079, 0.0
      %5104 = vadd.xlane.f32.xlu0 %v5103
      %v5105 = vpop.xlane.xlu0 %5104
      %v5106 = vsel %vm4506, %v5080, 0.0
      %5107 = vadd.xlane.f32.xlu0 %v5106
      %v5108 = vpop.xlane.xlu0 %5107
      %v5109 = vsel %vm4506, %v5081, 0.0
      %5110 = vadd.xlane.f32.xlu0 %v5109
      %v5111 = vpop.xlane.xlu0 %5110
      %v5112 = vsel %vm4506, %v5082, 0.0
      %5113 = vadd.xlane.f32.xlu0 %v5112
      %v5114 = vpop.xlane.xlu0 %5113
      %v5115 = vsel %vm4506, %v5083, 0.0
      %5116 = vadd.xlane.f32.xlu0 %v5115
      %v5117 = vpop.xlane.xlu0 %5116
      %v5118 = vsel %vm4506, %v5084, 0.0
      %5119 = vadd.xlane.f32.xlu0 %v5118
      %v5120 = vpop.xlane.xlu0 %5119
      %v5121 = vsel %vm4506, %v5085, 0.0
      %5122 = vadd.xlane.f32.xlu0 %v5121
      %v5123 = vpop.xlane.xlu0 %5122
      %v5124 = vsel %vm4506, %v5086, 0.0
      %5125 = vadd.xlane.f32.xlu0 %v5124
      %v5126 = vpop.xlane.xlu0 %5125
      %v5127 = vsel %vm4506, %v5087, 0.0
      %5128 = vadd.xlane.f32.xlu0 %v5127
      %v5129 = vpop.xlane.xlu0 %5128
      %v5130 = vsel %vm4506, %v5088, 0.0
      %5131 = vadd.xlane.f32.xlu0 %v5130
      %v5132 = vpop.xlane.xlu0 %5131
      %v5133 = vsel %vm4506, %v5089, 0.0
      %5134 = vadd.xlane.f32.xlu0 %v5133
      %v5135 = vpop.xlane.xlu0 %5134
      %v5136 = vsel %vm4506, %v5090, 0.0
      %5137 = vadd.xlane.f32.xlu0 %v5136
      %v5138 = vpop.xlane.xlu0 %5137
      %v5139 = vmul.f32 %v5093, %v5042
      %v5140 = vmul.f32 %v5096, %v5042
      %v5141 = vmul.f32 %v5099, %v5042
      %v5142 = vmul.f32 %v5102, %v5042
      %v5143 = vmul.f32 %v5105, %v5042
      %v5144 = vmul.f32 %v5108, %v5042
      %v5145 = vmul.f32 %v5111, %v5042
      %v5146 = vmul.f32 %v5114, %v5042
      %v5147 = vmul.f32 %v5117, %v5042
      %v5148 = vmul.f32 %v5120, %v5042
      %v5149 = vmul.f32 %v5123, %v5042
      %v5150 = vmul.f32 %v5126, %v5042
      %v5151 = vmul.f32 %v5129, %v5042
      %v5152 = vmul.f32 %v5132, %v5042
      %v5153 = vmul.f32 %v5135, %v5042
      %v5154 = vmul.f32 %v5138, %v5042
      %v5155 = vadd.f32 %v5139, 1e-05
      %v5156 = vadd.f32 %v5140, 1e-05
      %v5157 = vadd.f32 %v5141, 1e-05
      %v5158 = vadd.f32 %v5142, 1e-05
      %v5159 = vadd.f32 %v5143, 1e-05
      %v5160 = vadd.f32 %v5144, 1e-05
      %v5161 = vadd.f32 %v5145, 1e-05
      %v5162 = vadd.f32 %v5146, 1e-05
      %v5163 = vadd.f32 %v5147, 1e-05
      %v5164 = vadd.f32 %v5148, 1e-05
      %v5165 = vadd.f32 %v5149, 1e-05
      %v5166 = vadd.f32 %v5150, 1e-05
      %v5167 = vadd.f32 %v5151, 1e-05
      %v5168 = vadd.f32 %v5152, 1e-05
      %v5169 = vadd.f32 %v5153, 1e-05
      %v5170 = vadd.f32 %v5154, 1e-05
      %v5171 = vrsqrt.pop %v5155
      %v5172 = vmul.f32 %v5171, %v5155
      %v5173 = vmul.f32 %v5172, %v5171
      %v5174 = vmul.f32 0.5, %v5173
      %v5175 = vsub.f32 1.5, %v5174
      %v5176 = vmul.f32 %v5171, %v5175
      %vm5177 = vweird.f32 %v5155
      %vm5178 = vweird.f32 %v5171
      %vm5179 = vmor %vm5177, %vm5178
      %v5180 = vsel %vm5179, %v5171, %v5176
      %v5181 = vrsqrt.pop %v5156
      %v5182 = vmul.f32 %v5181, %v5156
      %v5183 = vmul.f32 %v5182, %v5181
      %v5184 = vmul.f32 0.5, %v5183
      %v5185 = vsub.f32 1.5, %v5184
      %v5186 = vmul.f32 %v5181, %v5185
      %vm5187 = vweird.f32 %v5156
      %vm5188 = vweird.f32 %v5181
      %vm5189 = vmor %vm5187, %vm5188
      %v5190 = vsel %vm5189, %v5181, %v5186
      %v5191 = vrsqrt.pop %v5157
      %v5192 = vmul.f32 %v5191, %v5157
      %v5193 = vmul.f32 %v5192, %v5191
      %v5194 = vmul.f32 0.5, %v5193
      %v5195 = vsub.f32 1.5, %v5194
      %v5196 = vmul.f32 %v5191, %v5195
      %vm5197 = vweird.f32 %v5157
      %vm5198 = vweird.f32 %v5191
      %vm5199 = vmor %vm5197, %vm5198
      %v5200 = vsel %vm5199, %v5191, %v5196
      %v5201 = vrsqrt.pop %v5158
      %v5202 = vmul.f32 %v5201, %v5158
      %v5203 = vmul.f32 %v5202, %v5201
      %v5204 = vmul.f32 0.5, %v5203
      %v5205 = vsub.f32 1.5, %v5204
      %v5206 = vmul.f32 %v5201, %v5205
      %vm5207 = vweird.f32 %v5158
      %vm5208 = vweird.f32 %v5201
      %vm5209 = vmor %vm5207, %vm5208
      %v5210 = vsel %vm5209, %v5201, %v5206
      %v5211 = vrsqrt.pop %v5159
      %v5212 = vmul.f32 %v5211, %v5159
      %v5213 = vmul.f32 %v5212, %v5211
      %v5214 = vmul.f32 0.5, %v5213
      %v5215 = vsub.f32 1.5, %v5214
      %v5216 = vmul.f32 %v5211, %v5215
      %vm5217 = vweird.f32 %v5159
      %vm5218 = vweird.f32 %v5211
      %vm5219 = vmor %vm5217, %vm5218
      %v5220 = vsel %vm5219, %v5211, %v5216
      %v5221 = vrsqrt.pop %v5160
      %v5222 = vmul.f32 %v5221, %v5160
      %v5223 = vmul.f32 %v5222, %v5221
      %v5224 = vmul.f32 0.5, %v5223
      %v5225 = vsub.f32 1.5, %v5224
      %v5226 = vmul.f32 %v5221, %v5225
      %vm5227 = vweird.f32 %v5160
      %vm5228 = vweird.f32 %v5221
      %vm5229 = vmor %vm5227, %vm5228
      %v5230 = vsel %vm5229, %v5221, %v5226
      %v5231 = vrsqrt.pop %v5161
      %v5232 = vmul.f32 %v5231, %v5161
      %v5233 = vmul.f32 %v5232, %v5231
      %v5234 = vmul.f32 0.5, %v5233
      %v5235 = vsub.f32 1.5, %v5234
      %v5236 = vmul.f32 %v5231, %v5235
      %vm5237 = vweird.f32 %v5161
      %vm5238 = vweird.f32 %v5231
      %vm5239 = vmor %vm5237, %vm5238
      %v5240 = vsel %vm5239, %v5231, %v5236
      %v5241 = vrsqrt.pop %v5162
      %v5242 = vmul.f32 %v5241, %v5162
      %v5243 = vmul.f32 %v5242, %v5241
      %v5244 = vmul.f32 0.5, %v5243
      %v5245 = vsub.f32 1.5, %v5244
      %v5246 = vmul.f32 %v5241, %v5245
      %vm5247 = vweird.f32 %v5162
      %vm5248 = vweird.f32 %v5241
      %vm5249 = vmor %vm5247, %vm5248
      %v5250 = vsel %vm5249, %v5241, %v5246
      %v5251 = vrsqrt.pop %v5163
      %v5252 = vmul.f32 %v5251, %v5163
      %v5253 = vmul.f32 %v5252, %v5251
      %v5254 = vmul.f32 0.5, %v5253
      %v5255 = vsub.f32 1.5, %v5254
      %v5256 = vmul.f32 %v5251, %v5255
      %vm5257 = vweird.f32 %v5163
      %vm5258 = vweird.f32 %v5251
      %vm5259 = vmor %vm5257, %vm5258
      %v5260 = vsel %vm5259, %v5251, %v5256
      %v5261 = vrsqrt.pop %v5164
      %v5262 = vmul.f32 %v5261, %v5164
      %v5263 = vmul.f32 %v5262, %v5261
      %v5264 = vmul.f32 0.5, %v5263
      %v5265 = vsub.f32 1.5, %v5264
      %v5266 = vmul.f32 %v5261, %v5265
      %vm5267 = vweird.f32 %v5164
      %vm5268 = vweird.f32 %v5261
      %vm5269 = vmor %vm5267, %vm5268
      %v5270 = vsel %vm5269, %v5261, %v5266
      %v5271 = vrsqrt.pop %v5165
      %v5272 = vmul.f32 %v5271, %v5165
      %v5273 = vmul.f32 %v5272, %v5271
      %v5274 = vmul.f32 0.5, %v5273
      %v5275 = vsub.f32 1.5, %v5274
      %v5276 = vmul.f32 %v5271, %v5275
      %vm5277 = vweird.f32 %v5165
      %vm5278 = vweird.f32 %v5271
      %vm5279 = vmor %vm5277, %vm5278
      %v5280 = vsel %vm5279, %v5271, %v5276
      %v5281 = vrsqrt.pop %v5166
      %v5282 = vmul.f32 %v5281, %v5166
      %v5283 = vmul.f32 %v5282, %v5281
      %v5284 = vmul.f32 0.5, %v5283
      %v5285 = vsub.f32 1.5, %v5284
      %v5286 = vmul.f32 %v5281, %v5285
      %vm5287 = vweird.f32 %v5166
      %vm5288 = vweird.f32 %v5281
      %vm5289 = vmor %vm5287, %vm5288
      %v5290 = vsel %vm5289, %v5281, %v5286
      %v5291 = vrsqrt.pop %v5167
      %v5292 = vmul.f32 %v5291, %v5167
      %v5293 = vmul.f32 %v5292, %v5291
      %v5294 = vmul.f32 0.5, %v5293
      %v5295 = vsub.f32 1.5, %v5294
      %v5296 = vmul.f32 %v5291, %v5295
      %vm5297 = vweird.f32 %v5167
      %vm5298 = vweird.f32 %v5291
      %vm5299 = vmor %vm5297, %vm5298
      %v5300 = vsel %vm5299, %v5291, %v5296
      %v5301 = vrsqrt.pop %v5168
      %v5302 = vmul.f32 %v5301, %v5168
      %v5303 = vmul.f32 %v5302, %v5301
      %v5304 = vmul.f32 0.5, %v5303
      %v5305 = vsub.f32 1.5, %v5304
      %v5306 = vmul.f32 %v5301, %v5305
      %vm5307 = vweird.f32 %v5168
      %vm5308 = vweird.f32 %v5301
      %vm5309 = vmor %vm5307, %vm5308
      %v5310 = vsel %vm5309, %v5301, %v5306
      %v5311 = vrsqrt.pop %v5169
      %v5312 = vmul.f32 %v5311, %v5169
      %v5313 = vmul.f32 %v5312, %v5311
      %v5314 = vmul.f32 0.5, %v5313
      %v5315 = vsub.f32 1.5, %v5314
      %v5316 = vmul.f32 %v5311, %v5315
      %vm5317 = vweird.f32 %v5169
      %vm5318 = vweird.f32 %v5311
      %vm5319 = vmor %vm5317, %vm5318
      %v5320 = vsel %vm5319, %v5311, %v5316
      %v5321 = vrsqrt.pop %v5170
      %v5322 = vmul.f32 %v5321, %v5170
      %v5323 = vmul.f32 %v5322, %v5321
      %v5324 = vmul.f32 0.5, %v5323
      %v5325 = vsub.f32 1.5, %v5324
      %v5326 = vmul.f32 %v5321, %v5325
      %vm5327 = vweird.f32 %v5170
      %vm5328 = vweird.f32 %v5321
      %vm5329 = vmor %vm5327, %vm5328
      %v5330 = vsel %vm5329, %v5321, %v5326
      %v5331 = vmul.f32 %v5059, %v5180
      %v5332 = vmul.f32 %v5060, %v5190
      %v5333 = vmul.f32 %v5061, %v5200
      %v5334 = vmul.f32 %v5062, %v5210
      %v5335 = vmul.f32 %v5063, %v5220
      %v5336 = vmul.f32 %v5064, %v5230
      %v5337 = vmul.f32 %v5065, %v5240
      %v5338 = vmul.f32 %v5066, %v5250
      %v5339 = vmul.f32 %v5067, %v5260
      %v5340 = vmul.f32 %v5068, %v5270
      %v5341 = vmul.f32 %v5069, %v5280
      %v5342 = vmul.f32 %v5070, %v5290
      %v5343 = vmul.f32 %v5071, %v5300
      %v5344 = vmul.f32 %v5072, %v5310
      %v5345 = vmul.f32 %v5073, %v5320
      %v5346 = vmul.f32 %v5074, %v5330
      %v5347 = vld [vmem:[%s12] sm:$0x1]
      %v5349 = vperm.slane %v5347, 0
      %v5351 = vmul.f32 %v5331, %v5349
      %v5352 = vmul.f32 %v5332, %v5349
      %v5353 = vmul.f32 %v5333, %v5349
      %v5354 = vmul.f32 %v5334, %v5349
      %v5355 = vmul.f32 %v5335, %v5349
      %v5356 = vmul.f32 %v5336, %v5349
      %v5357 = vmul.f32 %v5337, %v5349
      %v5358 = vmul.f32 %v5338, %v5349
      %v5359 = vmul.f32 %v5339, %v5349
      %v5360 = vmul.f32 %v5340, %v5349
      %v5361 = vmul.f32 %v5341, %v5349
      %v5362 = vmul.f32 %v5342, %v5349
      %v5363 = vmul.f32 %v5343, %v5349
      %v5364 = vmul.f32 %v5344, %v5349
      %v5365 = vmul.f32 %v5345, %v5349
      %v5366 = vmul.f32 %v5346, %v5349
      %v5367 = vld [vmem:[%s13] sm:$0x1]
      %v5369 = vperm.slane %v5367, 0
      %v5371 = vadd.f32 %v5351, %v5369
      %v5372 = vadd.f32 %v5352, %v5369
      %v5373 = vadd.f32 %v5353, %v5369
      %v5374 = vadd.f32 %v5354, %v5369
      %v5375 = vadd.f32 %v5355, %v5369
      %v5376 = vadd.f32 %v5356, %v5369
      %v5377 = vadd.f32 %v5357, %v5369
      %v5378 = vadd.f32 %v5358, %v5369
      %v5379 = vadd.f32 %v5359, %v5369
      %v5380 = vadd.f32 %v5360, %v5369
      %v5381 = vadd.f32 %v5361, %v5369
      %v5382 = vadd.f32 %v5362, %v5369
      %v5383 = vadd.f32 %v5363, %v5369
      %v5384 = vadd.f32 %v5364, %v5369
      %v5385 = vadd.f32 %v5365, %v5369
      %v5386 = vadd.f32 %v5366, %v5369
      %5387 = vst.msk [vmem:[%s542] sm:$0xff] %vm4506, %v5371
      %5388 = vst.msk [vmem:[%s542 + $0x8] sm:$0xff] %vm4506, %v5372
      %5389 = vst.msk [vmem:[%s542 + $0x10] sm:$0xff] %vm4506, %v5373
      %5390 = vst.msk [vmem:[%s542 + $0x18] sm:$0xff] %vm4506, %v5374
      %5391 = vst.msk [vmem:[%s542 + $0x20] sm:$0xff] %vm4506, %v5375
      %5392 = vst.msk [vmem:[%s542 + $0x28] sm:$0xff] %vm4506, %v5376
      %5393 = vst.msk [vmem:[%s542 + $0x30] sm:$0xff] %vm4506, %v5377
      %5394 = vst.msk [vmem:[%s542 + $0x38] sm:$0xff] %vm4506, %v5378
      %5395 = vst.msk [vmem:[%s542 + $0x40] sm:$0xff] %vm4506, %v5379
      %5396 = vst.msk [vmem:[%s542 + $0x48] sm:$0xff] %vm4506, %v5380
      %5397 = vst.msk [vmem:[%s542 + $0x50] sm:$0xff] %vm4506, %v5381
      %5398 = vst.msk [vmem:[%s542 + $0x58] sm:$0xff] %vm4506, %v5382
      %5399 = vst.msk [vmem:[%s542 + $0x60] sm:$0xff] %vm4506, %v5383
      %5400 = vst.msk [vmem:[%s542 + $0x68] sm:$0xff] %vm4506, %v5384
      %5401 = vst.msk [vmem:[%s542 + $0x70] sm:$0xff] %vm4506, %v5385
      %5402 = vst.msk [vmem:[%s542 + $0x78] sm:$0xff] %vm4506, %v5386
      %s5403 = smul.u32 16, %s30
      %p5404 = scmp.lt.s32.totalorder %s29, 1
      %s5405 = scalar_select %p5404, %s29, 1
      %p5406 = scmp.lt.s32.totalorder %s5403, 15
      %s5407 = scalar_select %p5406, %s5403, 15
      %s5408 = smul.addr %s5405, 16
      %s5409 = sadd.s32 %s5407, %s5408
      %s5410 = smul.addr %s5409, 8
      %s5411 = scalar_lea.vmem %s14, %s5410
      // Predicated region
      $region77: #{tpu_custom_call.1} parent=75 // pred_check
        %p5412 = pneg %p368
      $region78: #{tpu_custom_call.1} parent=75 // pred_check_branch
        %5414 = sbr.rel (%p5412) target = $region80
      $region79: #{tpu_custom_call.1} parent=75 // pred_region
        %s5415 = smul.u32 16, %s30
      $region80: #{tpu_custom_call.1} parent=75 // pred_fallthru
        _
    $region76: #{tpu_custom_call.1} parent=5 // pred_fallthru
      _
    %p5416 = scmp.le.s32.totalorder 2, %s20
    // Predicated region
    $region81: #{tpu_custom_call.1} parent=5 // pred_check
      %p5417 = pneg %p5416
    $region82: #{tpu_custom_call.1} parent=5 // pred_check_branch
      %5419 = sbr.rel (%p5417) target = $region84
    $region83: #{tpu_custom_call.1} parent=5 // pred_region
      %s5420 = ssub.s32 %s20, 2
      // Predicated region
      $region85: #{tpu_custom_call.1} parent=83 // pred_check
        %p5421 = pneg %p374
      $region86: #{tpu_custom_call.1} parent=83 // pred_check_branch
        %5423 = sbr.rel (%p5421) target = $region88
      $region87: #{tpu_custom_call.1} parent=83 // pred_region
        %s5424 = smul.u32 16, %s32
        %p5425 = scmp.lt.s32.totalorder %s31, 1
        %s5426 = scalar_select %p5425, %s31, 1
        %p5427 = scmp.lt.s32.totalorder %s5424, 15
        %s5428 = scalar_select %p5427, %s5424, 15
        %s5429 = smul.addr %s5426, 16
        %s5430 = sadd.s32 %s5428, %s5429
        %s5431 = smul.addr %s5430, 8
        %s5432 = scalar_lea.vmem %s14, %s5431
      $region88: #{tpu_custom_call.1} parent=83 // pred_fallthru
        _
    $region84: #{tpu_custom_call.1} parent=5 // pred_fallthru
      _
  $region6: #{tpu_custom_call.1} parent=0 // loop_footer
    %s24 = sadd.s32 1, %s20
  $region7: #{tpu_custom_call.1} parent=0 // loop_footer_branch
    %19 = sbr.rel target = $region3
  $region8: #{tpu_custom_call.1} parent=0 // loop_exit
    _

</llo_original>
